<compile_context>
chip_gen: v6e
topology: v6e:2x2x1
jax: 0.10.0
libtpu: 0.0.40
codegen_flags: <defaults>
</compile_context>

<pallas_src>
import jax
import jax.numpy as jnp
from jax import lax
from jax.experimental import pallas as pl
from jax.experimental.pallas import tpu as pltpu

# --- configuration (Transformer defaults: num_embeds=32, block_size=8, 4 heads x 8, 3 layers) ---
VOCAB = 65    # vocab_size
C = 32        # num_embeds
T = 8         # block_size (sequence length)
NH = 4        # num_heads
H = 8         # head_size (NH * H == C)
L = 3         # num_layers
B = 2         # batch
BT = B * T
F = 4 * C     # FFN hidden width
VPAD = 128    # lane-dense padded vocab width
EPS = 1e-5    # nn.LayerNorm default eps


def _layer_norm(h, g, b):
    mu = jnp.mean(h, axis=-1, keepdims=True)
    var = jnp.mean((h - mu) ** 2, axis=-1, keepdims=True)
    return (h - mu) * lax.rsqrt(var + EPS) * g + b


def transformer_kernel(x_ref, mask_ref, wqkv_ref, wp_ref, w1_ref, w2_ref,
                       small_ref, whp_ref, fin_ref, out_ref):
    # x: (B*T, C) activations; every dense matmul runs on this flat 2-D slab.
    x = x_ref[...]
    attn_bias = mask_ref[...]                  # (BT, BT): 0 where allowed, -1e30 where masked
    scale = 1.0 / (H ** 0.5)

    for l in range(L):                         # L = 3, static unroll; weights sliced per layer
        sm = small_ref[l]                      # (8, 128) packed LN gammas/betas + biases
        ln1_g, ln1_b = sm[0:1, :C], sm[1:2, :C]
        ln2_g, ln2_b = sm[2:3, :C], sm[3:4, :C]
        bproj, b2 = sm[4:5, :C], sm[5:6, :C]
        b1 = sm[6:7, :]                        # (1, 4C)

        # --- multi-head causal self-attention (heads = batch dim of every einsum) ---
        xn = _layer_norm(x, ln1_g, ln1_b)                          # (BT, C)
        xn_h = jnp.broadcast_to(xn[None], (NH, BT, C))             # (NH, BT, C)
        qkv = jnp.einsum('hmc,hcd->hmd', xn_h, wqkv_ref[l],
                         preferred_element_type=jnp.float32)       # (NH, BT, 3H)
        q = qkv[..., 0:H]
        k = qkv[..., H:2 * H]
        v = qkv[..., 2 * H:3 * H]

        s = jnp.einsum('hqd,hkd->hqk', q, k,
                       preferred_element_type=jnp.float32) * scale  # (NH, BT, BT)
        s = s + attn_bias                                            # block-diag causal mask
        m = jnp.max(s, axis=-1, keepdims=True)
        e = jnp.exp(s - m)
        # Exact normalization (the approximate EUP reciprocal costs ~4e-3 abs error on the
        # final logits, which is what tripped the correctness check).
        w = e / jnp.sum(e, axis=-1, keepdims=True)
        # TODO(synk): dropout on attention weights / projection / FFN omitted (eval-mode identity).
        ctx = jnp.einsum('hqk,hkd->hqd', w, v,
                         preferred_element_type=jnp.float32)         # (NH, BT, H)

        # Output projection: per-head weight slabs, summed over heads (replaces concatenate).
        proj_h = jnp.einsum('hmd,hde->hme', ctx, wp_ref[l],
                            preferred_element_type=jnp.float32)      # (NH, BT, C)
        x = x + jnp.sum(proj_h, axis=0) + bproj

        # --- feed-forward ---
        xn2 = _layer_norm(x, ln2_g, ln2_b)
        hdn = jnp.maximum(
            jnp.dot(xn2, w1_ref[l], preferred_element_type=jnp.float32) + b1, 0.0)
        x = x + jnp.dot(hdn, w2_ref[l], preferred_element_type=jnp.float32) + b2

    # --- final LayerNorm + vocab head (lane-dense 128-wide output) ---
    lnf_g, lnf_b = fin_ref[0:1, :C], fin_ref[1:2, :C]
    bh = fin_ref[2:3, :]
    xf = _layer_norm(x, lnf_g, lnf_b)
    out_ref[...] = jnp.dot(xf, whp_ref[...],
                           preferred_element_type=jnp.float32) + bh


def init_params(key):
    ks = jax.random.split(key, 19)

    def n(k, shape, s=0.1):
        return jax.random.normal(k, shape, jnp.float32) * s

    return dict(
        tok_table=n(ks[0], (VOCAB, C)),
        pos_table=n(ks[1], (T, C)),
        ln1_g=1.0 + n(ks[2], (L, C), 0.02), ln1_b=n(ks[3], (L, C), 0.02),
        wq=n(ks[4], (L, C, C)), wk=n(ks[5], (L, C, C)), wv=n(ks[6], (L, C, C)),
        wp=n(ks[7], (L, C, C)), bp=n(ks[8], (L, C), 0.02),
        ln2_g=1.0 + n(ks[9], (L, C), 0.02), ln2_b=n(ks[10], (L, C), 0.02),
        w1=n(ks[11], (L, C, F)), b1=n(ks[12], (L, F), 0.02),
        w2=n(ks[13], (L, F, C)), b2=n(ks[14], (L, C), 0.02),
        lnf_g=1.0 + n(ks[15], (C,), 0.02), lnf_b=n(ks[16], (C,), 0.02),
        wh=n(ks[17], (C, VOCAB)), bh=n(ks[18], (VOCAB,), 0.02),
    )


def pack_params(p):
    """Repack raw (PyTorch-layout) params into the kernel's fused / padded layout."""
    def head_split(w):                                  # (L, C, NH*H) -> (L, NH, C, H)
        return w.reshape(L, C, NH, H).transpose(0, 2, 1, 3)

    wqkv = jnp.concatenate(
        [head_split(p['wq']), head_split(p['wk']), head_split(p['wv'])],
        axis=-1)                                        # (L, NH, C, 3H)
    wp = p['wp'].reshape(L, NH, H, C)                   # (L, NH, H, C)

    small = jnp.zeros((L, 8, VPAD), jnp.float32)
    small = small.at[:, 0, :C].set(p['ln1_g'])
    small = small.at[:, 1, :C].set(p['ln1_b'])
    small = small.at[:, 2, :C].set(p['ln2_g'])
    small = small.at[:, 3, :C].set(p['ln2_b'])
    small = small.at[:, 4, :C].set(p['bp'])
    small = small.at[:, 5, :C].set(p['b2'])
    small = small.at[:, 6, :F].set(p['b1'])

    fin = jnp.zeros((8, VPAD), jnp.float32)
    fin = fin.at[0, :C].set(p['lnf_g'])
    fin = fin.at[1, :C].set(p['lnf_b'])
    fin = fin.at[2, :VOCAB].set(p['bh'])

    wh_pad = jnp.zeros((C, VPAD), jnp.float32).at[:, :VOCAB].set(p['wh'])

    # Additive attention mask over flattened (B*T) rows: allowed iff same batch element
    # and key position <= query position.
    ri = jnp.arange(BT)[:, None]
    ci = jnp.arange(BT)[None, :]
    allowed = ((ri // T) == (ci // T)) & ((ci % T) <= (ri % T))
    attn_bias = jnp.where(allowed, 0.0, -1e30).astype(jnp.float32)   # (BT, BT)

    return dict(tok_table=p['tok_table'], pos_table=p['pos_table'],
                attn_bias=attn_bias, wqkv=wqkv, wp=wp, w1=p['w1'], w2=p['w2'],
                small=small, wh_pad=wh_pad, fin=fin)


@jax.jit
def transformer_forward(idx, packed):
    # Embedding lookups are glue (gathers) in plain JAX.
    tok_emb = packed['tok_table'][idx]                       # (B, T, C)
    pos_emb = packed['pos_table'][jnp.arange(T)]             # (T, C)
    x2d = (tok_emb + pos_emb[None, :, :]).reshape(BT, C)     # (B*T, C)

    args = (x2d, packed['attn_bias'], packed['wqkv'], packed['wp'],
            packed['w1'], packed['w2'], packed['small'], packed['wh_pad'],
            packed['fin'])
    vmem = pl.BlockSpec(memory_space=pltpu.MemorySpace.VMEM)
    out = pl.pallas_call(
        transformer_kernel,
        out_shape=jax.ShapeDtypeStruct((BT, VPAD), jnp.float32),
        in_specs=[vmem] * len(args),
        out_specs=vmem,
    )(*args)
    # TODO(synk): if B/T ever grow, add a grid over rows with dimension_semantics=("parallel",)
    # so v7x's two TensorCores share the work; at these toy sizes a single call is fine.
    return out.reshape(B, T, VPAD)[:, :, :VOCAB]


@jax.jit
def transformer_forward_ref(idx, p):
    """Pure-JAX reference mirroring the original per-head PyTorch math."""
    tok_emb = p['tok_table'][idx]
    pos_emb = p['pos_table'][jnp.arange(T)]
    x = tok_emb + pos_emb[None, :, :]                        # (B, T, C)

    row = lax.broadcasted_iota(jnp.int32, (T, T), 0)
    col = lax.broadcasted_iota(jnp.int32, (T, T), 1)
    causal = (col <= row)[None, :, :]
    scale = 1.0 / (H ** 0.5)

    for l in range(L):
        xn = _layer_norm(x, p['ln1_g'][l], p['ln1_b'][l])
        q = jnp.einsum('btc,ch->bth', xn, p['wq'][l], preferred_element_type=jnp.float32)
        k = jnp.einsum('btc,ch->bth', xn, p['wk'][l], preferred_element_type=jnp.float32)
        v = jnp.einsum('btc,ch->bth', xn, p['wv'][l], preferred_element_type=jnp.float32)
        heads = []
        for h in range(NH):
            qh = q[..., h * H:(h + 1) * H]
            kh = k[..., h * H:(h + 1) * H]
            vh = v[..., h * H:(h + 1) * H]
            s = jnp.einsum('bqh,bkh->bqk', qh, kh,
                           preferred_element_type=jnp.float32) * scale
            s = jnp.where(causal, s, -jnp.inf)
            m = jnp.max(s, axis=-1, keepdims=True)
            e = jnp.exp(s - m)
            w = e / jnp.sum(e, axis=-1, keepdims=True)
            heads.append(jnp.einsum('bqk,bkh->bqh', w, vh,
                                    preferred_element_type=jnp.float32))
        attn = jnp.concatenate(heads, axis=-1)
        x = x + jnp.einsum('btc,cd->btd', attn, p['wp'][l],
                           preferred_element_type=jnp.float32) + p['bp'][l]

        xn2 = _layer_norm(x, p['ln2_g'][l], p['ln2_b'][l])
        hdn = jnp.maximum(jnp.einsum('btc,cf->btf', xn2, p['w1'][l],
                                     preferred_element_type=jnp.float32) + p['b1'][l], 0.0)
        x = x + jnp.einsum('btf,fc->btc', hdn, p['w2'][l],
                           preferred_element_type=jnp.float32) + p['b2'][l]

    xf = _layer_norm(x, p['lnf_g'], p['lnf_b'])
    return jnp.einsum('btc,cv->btv', xf, p['wh'],
                      preferred_element_type=jnp.float32) + p['bh']


if __name__ == "__main__":
    key = jax.random.PRNGKey(0)
    pkey, ikey = jax.random.split(key)
    params = init_params(pkey)
    packed = pack_params(params)
    idx = jax.random.randint(ikey, (B, T), 0, VOCAB, dtype=jnp.int32)

    logits = transformer_forward(idx, packed)
    jax.block_until_ready(logits)

    ref = transformer_forward_ref(idx, params)
    jax.block_until_ready(ref)

    assert logits.shape == (B, T, VOCAB)
    max_diff = jnp.max(jnp.abs(logits - ref))
    assert jnp.allclose(logits, ref, atol=1e-3, rtol=1e-3), (
        f"mismatch vs JAX reference: max abs diff {max_diff}")
    print("KERNEL_OK")
</pallas_src>

<mosaic_0001>
module attributes {stable_mosaic.version = 11 : i64} {
  func.func @transformer_kernel(%arg0: memref<16x32xf32, #tpu.memory_space<vmem>>, %arg1: memref<16x16xf32, #tpu.memory_space<vmem>>, %arg2: memref<3x4x32x24xf32, #tpu.memory_space<vmem>>, %arg3: memref<3x4x8x32xf32, #tpu.memory_space<vmem>>, %arg4: memref<3x32x128xf32, #tpu.memory_space<vmem>>, %arg5: memref<3x128x32xf32, #tpu.memory_space<vmem>>, %arg6: memref<3x8x128xf32, #tpu.memory_space<vmem>>, %arg7: memref<32x128xf32, #tpu.memory_space<vmem>>, %arg8: memref<8x128xf32, #tpu.memory_space<vmem>>, %arg9: memref<16x128xf32, #tpu.memory_space<vmem>>) attributes {dimension_semantics = [], scalar_prefetch = 0 : i64, scratch_operands = 0 : i64, tpu.core_type = #tpu.core_type<tc>} {
    %c0 = arith.constant 0 : index
    %c0_0 = arith.constant 0 : index
    %0 = vector.load %arg0[%c0, %c0_0] : memref<16x32xf32, #tpu.memory_space<vmem>>, vector<16x32xf32>
    %c0_1 = arith.constant 0 : index
    %c0_2 = arith.constant 0 : index
    %1 = vector.load %arg1[%c0_1, %c0_2] : memref<16x16xf32, #tpu.memory_space<vmem>>, vector<16x16xf32>
    %c0_3 = arith.constant 0 : index
    %c0_4 = arith.constant 0 : index
    %c0_5 = arith.constant 0 : index
    %2 = vector.load %arg6[%c0_3, %c0_4, %c0_5] : memref<3x8x128xf32, #tpu.memory_space<vmem>>, vector<1x8x128xf32>
    %3 = vector.shape_cast %2 : vector<1x8x128xf32> to vector<8x128xf32>
    %4 = vector.extract_strided_slice %3 {offsets = [0, 0], sizes = [1, 32], strides = [1, 1]} : vector<8x128xf32> to vector<1x32xf32>
    %5 = vector.extract_strided_slice %3 {offsets = [1, 0], sizes = [1, 32], strides = [1, 1]} : vector<8x128xf32> to vector<1x32xf32>
    %6 = vector.extract_strided_slice %3 {offsets = [2, 0], sizes = [1, 32], strides = [1, 1]} : vector<8x128xf32> to vector<1x32xf32>
    %7 = vector.extract_strided_slice %3 {offsets = [3, 0], sizes = [1, 32], strides = [1, 1]} : vector<8x128xf32> to vector<1x32xf32>
    %8 = vector.extract_strided_slice %3 {offsets = [4, 0], sizes = [1, 32], strides = [1, 1]} : vector<8x128xf32> to vector<1x32xf32>
    %9 = vector.extract_strided_slice %3 {offsets = [5, 0], sizes = [1, 32], strides = [1, 1]} : vector<8x128xf32> to vector<1x32xf32>
    %10 = vector.extract_strided_slice %3 {offsets = [6, 0], sizes = [1, 128], strides = [1, 1]} : vector<8x128xf32> to vector<1x128xf32>
    %cst = arith.constant dense<0.000000e+00> : vector<16xf32>
    %11 = vector.multi_reduction <add>, %0, %cst [1] : vector<16x32xf32> to vector<16xf32>
    %12 = vector.shape_cast %11 : vector<16xf32> to vector<16x1xf32>
    %cst_6 = arith.constant 3.200000e+01 : f32
    %13 = vector.broadcast %cst_6 : f32 to vector<16x1xf32>
    %14 = arith.divf %12, %13 : vector<16x1xf32>
    %15 = vector.broadcast %14 : vector<16x1xf32> to vector<16x32xf32>
    %16 = arith.subf %0, %15 : vector<16x32xf32>
    %17 = arith.mulf %16, %16 : vector<16x32xf32>
    %cst_7 = arith.constant dense<0.000000e+00> : vector<16xf32>
    %18 = vector.multi_reduction <add>, %17, %cst_7 [1] : vector<16x32xf32> to vector<16xf32>
    %19 = vector.shape_cast %18 : vector<16xf32> to vector<16x1xf32>
    %cst_8 = arith.constant 3.200000e+01 : f32
    %20 = vector.broadcast %cst_8 : f32 to vector<16x1xf32>
    %21 = arith.divf %19, %20 : vector<16x1xf32>
    %22 = vector.broadcast %14 : vector<16x1xf32> to vector<16x32xf32>
    %23 = arith.subf %0, %22 : vector<16x32xf32>
    %cst_9 = arith.constant 9.99999974E-6 : f32
    %24 = vector.broadcast %cst_9 : f32 to vector<16x1xf32>
    %25 = arith.addf %21, %24 : vector<16x1xf32>
    %26 = math.rsqrt %25 : vector<16x1xf32>
    %27 = vector.broadcast %26 : vector<16x1xf32> to vector<16x32xf32>
    %28 = arith.mulf %23, %27 : vector<16x32xf32>
    %29 = vector.broadcast %4 : vector<1x32xf32> to vector<16x32xf32>
    %30 = arith.mulf %28, %29 : vector<16x32xf32>
    %31 = vector.broadcast %5 : vector<1x32xf32> to vector<16x32xf32>
    %32 = arith.addf %30, %31 : vector<16x32xf32>
    %33 = vector.shape_cast %32 : vector<16x32xf32> to vector<1x16x32xf32>
    %34 = vector.shape_cast %33 : vector<1x16x32xf32> to vector<1x16x32xf32>
    %35 = vector.broadcast %34 : vector<1x16x32xf32> to vector<4x16x32xf32>
    %c0_10 = arith.constant 0 : index
    %c0_11 = arith.constant 0 : index
    %c0_12 = arith.constant 0 : index
    %c0_13 = arith.constant 0 : index
    %36 = vector.load %arg2[%c0_10, %c0_11, %c0_12, %c0_13] : memref<3x4x32x24xf32, #tpu.memory_space<vmem>>, vector<1x4x32x24xf32>
    %37 = vector.shape_cast %36 : vector<1x4x32x24xf32> to vector<4x32x24xf32>
    "tpu.trace_start"() <{level = 10 : i32, message = "hmc,hcd->hmd"}> : () -> ()
    %cst_14 = arith.constant dense<0.000000e+00> : vector<4x16x24xf32>
    %38 = tpu.matmul %35, %37, %cst_14 {dimension_numbers = #tpu.dot_dimension_numbers<[2], [1], [1], [2], [0, 0, 0, 1, 1, 2], [0], [0]>} : vector<4x16x32xf32>, vector<4x32x24xf32>, vector<4x16x24xf32> -> vector<4x16x24xf32>
    "tpu.trace_stop"() : () -> ()
    %39 = vector.extract_strided_slice %38 {offsets = [0, 0, 0], sizes = [4, 16, 8], strides = [1, 1, 1]} : vector<4x16x24xf32> to vector<4x16x8xf32>
    %40 = vector.extract_strided_slice %38 {offsets = [0, 0, 8], sizes = [4, 16, 8], strides = [1, 1, 1]} : vector<4x16x24xf32> to vector<4x16x8xf32>
    %41 = vector.extract_strided_slice %38 {offsets = [0, 0, 16], sizes = [4, 16, 8], strides = [1, 1, 1]} : vector<4x16x24xf32> to vector<4x16x8xf32>
    "tpu.trace_start"() <{level = 10 : i32, message = "hqd,hkd->hqk"}> : () -> ()
    %cst_15 = arith.constant dense<0.000000e+00> : vector<4x16x16xf32>
    %42 = tpu.matmul %39, %40, %cst_15 {dimension_numbers = #tpu.dot_dimension_numbers<[2], [2], [1], [1], [0, 0, 0, 1, 1, 1], [0], [0]>} : vector<4x16x8xf32>, vector<4x16x8xf32>, vector<4x16x16xf32> -> vector<4x16x16xf32>
    "tpu.trace_stop"() : () -> ()
    %cst_16 = arith.constant 0.353553385 : f32
    %43 = vector.broadcast %cst_16 : f32 to vector<4x16x16xf32>
    %44 = arith.mulf %42, %43 : vector<4x16x16xf32>
    %45 = vector.shape_cast %1 : vector<16x16xf32> to vector<1x16x16xf32>
    %46 = vector.broadcast %45 : vector<1x16x16xf32> to vector<4x16x16xf32>
    %47 = arith.addf %44, %46 : vector<4x16x16xf32>
    %cst_17 = arith.constant dense<0xFF800000> : vector<4x16xf32>
    %48 = vector.multi_reduction <maximumf>, %47, %cst_17 [2] : vector<4x16x16xf32> to vector<4x16xf32>
    %49 = vector.shape_cast %48 : vector<4x16xf32> to vector<4x16x1xf32>
    %50 = vector.broadcast %49 : vector<4x16x1xf32> to vector<4x16x16xf32>
    %51 = arith.subf %47, %50 : vector<4x16x16xf32>
    %52 = math.exp %51 : vector<4x16x16xf32>
    %cst_18 = arith.constant dense<0.000000e+00> : vector<4x16xf32>
    %53 = vector.multi_reduction <add>, %52, %cst_18 [2] : vector<4x16x16xf32> to vector<4x16xf32>
    %54 = vector.shape_cast %53 : vector<4x16xf32> to vector<4x16x1xf32>
    %55 = vector.broadcast %54 : vector<4x16x1xf32> to vector<4x16x16xf32>
    %56 = arith.divf %52, %55 : vector<4x16x16xf32>
    "tpu.trace_start"() <{level = 10 : i32, message = "hqk,hkd->hqd"}> : () -> ()
    %cst_19 = arith.constant dense<0.000000e+00> : vector<4x16x8xf32>
    %57 = tpu.matmul %56, %41, %cst_19 {dimension_numbers = #tpu.dot_dimension_numbers<[2], [1], [1], [2], [0, 0, 0, 1, 1, 2], [0], [0]>} : vector<4x16x16xf32>, vector<4x16x8xf32>, vector<4x16x8xf32> -> vector<4x16x8xf32>
    "tpu.trace_stop"() : () -> ()
    %c0_20 = arith.constant 0 : index
    %c0_21 = arith.constant 0 : index
    %c0_22 = arith.constant 0 : index
    %c0_23 = arith.constant 0 : index
    %58 = vector.load %arg3[%c0_20, %c0_21, %c0_22, %c0_23] : memref<3x4x8x32xf32, #tpu.memory_space<vmem>>, vector<1x4x8x32xf32>
    %59 = vector.shape_cast %58 : vector<1x4x8x32xf32> to vector<4x8x32xf32>
    "tpu.trace_start"() <{level = 10 : i32, message = "hmd,hde->hme"}> : () -> ()
    %cst_24 = arith.constant dense<0.000000e+00> : vector<4x16x32xf32>
    %60 = tpu.matmul %57, %59, %cst_24 {dimension_numbers = #tpu.dot_dimension_numbers<[2], [1], [1], [2], [0, 0, 0, 1, 1, 2], [0], [0]>} : vector<4x16x8xf32>, vector<4x8x32xf32>, vector<4x16x32xf32> -> vector<4x16x32xf32>
    "tpu.trace_stop"() : () -> ()
    %cst_25 = arith.constant dense<0.000000e+00> : vector<16x32xf32>
    %61 = vector.multi_reduction <add>, %60, %cst_25 [0] : vector<4x16x32xf32> to vector<16x32xf32>
    %62 = arith.addf %0, %61 : vector<16x32xf32>
    %63 = vector.broadcast %8 : vector<1x32xf32> to vector<16x32xf32>
    %64 = arith.addf %62, %63 : vector<16x32xf32>
    %cst_26 = arith.constant dense<0.000000e+00> : vector<16xf32>
    %65 = vector.multi_reduction <add>, %64, %cst_26 [1] : vector<16x32xf32> to vector<16xf32>
    %66 = vector.shape_cast %65 : vector<16xf32> to vector<16x1xf32>
    %cst_27 = arith.constant 3.200000e+01 : f32
    %67 = vector.broadcast %cst_27 : f32 to vector<16x1xf32>
    %68 = arith.divf %66, %67 : vector<16x1xf32>
    %69 = vector.broadcast %68 : vector<16x1xf32> to vector<16x32xf32>
    %70 = arith.subf %64, %69 : vector<16x32xf32>
    %71 = arith.mulf %70, %70 : vector<16x32xf32>
    %cst_28 = arith.constant dense<0.000000e+00> : vector<16xf32>
    %72 = vector.multi_reduction <add>, %71, %cst_28 [1] : vector<16x32xf32> to vector<16xf32>
    %73 = vector.shape_cast %72 : vector<16xf32> to vector<16x1xf32>
    %cst_29 = arith.constant 3.200000e+01 : f32
    %74 = vector.broadcast %cst_29 : f32 to vector<16x1xf32>
    %75 = arith.divf %73, %74 : vector<16x1xf32>
    %76 = vector.broadcast %68 : vector<16x1xf32> to vector<16x32xf32>
    %77 = arith.subf %64, %76 : vector<16x32xf32>
    %cst_30 = arith.constant 9.99999974E-6 : f32
    %78 = vector.broadcast %cst_30 : f32 to vector<16x1xf32>
    %79 = arith.addf %75, %78 : vector<16x1xf32>
    %80 = math.rsqrt %79 : vector<16x1xf32>
    %81 = vector.broadcast %80 : vector<16x1xf32> to vector<16x32xf32>
    %82 = arith.mulf %77, %81 : vector<16x32xf32>
    %83 = vector.broadcast %6 : vector<1x32xf32> to vector<16x32xf32>
    %84 = arith.mulf %82, %83 : vector<16x32xf32>
    %85 = vector.broadcast %7 : vector<1x32xf32> to vector<16x32xf32>
    %86 = arith.addf %84, %85 : vector<16x32xf32>
    %c0_31 = arith.constant 0 : index
    %c0_32 = arith.constant 0 : index
    %c0_33 = arith.constant 0 : index
    %87 = vector.load %arg4[%c0_31, %c0_32, %c0_33] : memref<3x32x128xf32, #tpu.memory_space<vmem>>, vector<1x32x128xf32>
    %88 = vector.shape_cast %87 : vector<1x32x128xf32> to vector<32x128xf32>
    %cst_34 = arith.constant dense<0.000000e+00> : vector<16x128xf32>
    %89 = tpu.matmul %86, %88, %cst_34 {dimension_numbers = #tpu.dot_dimension_numbers<[1], [0], [0], [1], [0, 0, 1, 1], [], []>} : vector<16x32xf32>, vector<32x128xf32>, vector<16x128xf32> -> vector<16x128xf32>
    %90 = vector.broadcast %10 : vector<1x128xf32> to vector<16x128xf32>
    %91 = arith.addf %89, %90 : vector<16x128xf32>
    %cst_35 = arith.constant 0.000000e+00 : f32
    %92 = vector.broadcast %cst_35 : f32 to vector<16x128xf32>
    %93 = arith.maximumf %91, %92 : vector<16x128xf32>
    %c0_36 = arith.constant 0 : index
    %c0_37 = arith.constant 0 : index
    %c0_38 = arith.constant 0 : index
    %94 = vector.load %arg5[%c0_36, %c0_37, %c0_38] : memref<3x128x32xf32, #tpu.memory_space<vmem>>, vector<1x128x32xf32>
    %95 = vector.shape_cast %94 : vector<1x128x32xf32> to vector<128x32xf32>
    %cst_39 = arith.constant dense<0.000000e+00> : vector<16x32xf32>
    %96 = tpu.matmul %93, %95, %cst_39 {dimension_numbers = #tpu.dot_dimension_numbers<[1], [0], [0], [1], [0, 0, 1, 1], [], []>} : vector<16x128xf32>, vector<128x32xf32>, vector<16x32xf32> -> vector<16x32xf32>
    %97 = arith.addf %64, %96 : vector<16x32xf32>
    %98 = vector.broadcast %9 : vector<1x32xf32> to vector<16x32xf32>
    %99 = arith.addf %97, %98 : vector<16x32xf32>
    %c1 = arith.constant 1 : index
    %c0_40 = arith.constant 0 : index
    %c0_41 = arith.constant 0 : index
    %100 = vector.load %arg6[%c1, %c0_40, %c0_41] : memref<3x8x128xf32, #tpu.memory_space<vmem>>, vector<1x8x128xf32>
    %101 = vector.shape_cast %100 : vector<1x8x128xf32> to vector<8x128xf32>
    %102 = vector.extract_strided_slice %101 {offsets = [0, 0], sizes = [1, 32], strides = [1, 1]} : vector<8x128xf32> to vector<1x32xf32>
    %103 = vector.extract_strided_slice %101 {offsets = [1, 0], sizes = [1, 32], strides = [1, 1]} : vector<8x128xf32> to vector<1x32xf32>
    %104 = vector.extract_strided_slice %101 {offsets = [2, 0], sizes = [1, 32], strides = [1, 1]} : vector<8x128xf32> to vector<1x32xf32>
    %105 = vector.extract_strided_slice %101 {offsets = [3, 0], sizes = [1, 32], strides = [1, 1]} : vector<8x128xf32> to vector<1x32xf32>
    %106 = vector.extract_strided_slice %101 {offsets = [4, 0], sizes = [1, 32], strides = [1, 1]} : vector<8x128xf32> to vector<1x32xf32>
    %107 = vector.extract_strided_slice %101 {offsets = [5, 0], sizes = [1, 32], strides = [1, 1]} : vector<8x128xf32> to vector<1x32xf32>
    %108 = vector.extract_strided_slice %101 {offsets = [6, 0], sizes = [1, 128], strides = [1, 1]} : vector<8x128xf32> to vector<1x128xf32>
    %cst_42 = arith.constant dense<0.000000e+00> : vector<16xf32>
    %109 = vector.multi_reduction <add>, %99, %cst_42 [1] : vector<16x32xf32> to vector<16xf32>
    %110 = vector.shape_cast %109 : vector<16xf32> to vector<16x1xf32>
    %cst_43 = arith.constant 3.200000e+01 : f32
    %111 = vector.broadcast %cst_43 : f32 to vector<16x1xf32>
    %112 = arith.divf %110, %111 : vector<16x1xf32>
    %113 = vector.broadcast %112 : vector<16x1xf32> to vector<16x32xf32>
    %114 = arith.subf %99, %113 : vector<16x32xf32>
    %115 = arith.mulf %114, %114 : vector<16x32xf32>
    %cst_44 = arith.constant dense<0.000000e+00> : vector<16xf32>
    %116 = vector.multi_reduction <add>, %115, %cst_44 [1] : vector<16x32xf32> to vector<16xf32>
    %117 = vector.shape_cast %116 : vector<16xf32> to vector<16x1xf32>
    %cst_45 = arith.constant 3.200000e+01 : f32
    %118 = vector.broadcast %cst_45 : f32 to vector<16x1xf32>
    %119 = arith.divf %117, %118 : vector<16x1xf32>
    %120 = vector.broadcast %112 : vector<16x1xf32> to vector<16x32xf32>
    %121 = arith.subf %99, %120 : vector<16x32xf32>
    %cst_46 = arith.constant 9.99999974E-6 : f32
    %122 = vector.broadcast %cst_46 : f32 to vector<16x1xf32>
    %123 = arith.addf %119, %122 : vector<16x1xf32>
    %124 = math.rsqrt %123 : vector<16x1xf32>
    %125 = vector.broadcast %124 : vector<16x1xf32> to vector<16x32xf32>
    %126 = arith.mulf %121, %125 : vector<16x32xf32>
    %127 = vector.broadcast %102 : vector<1x32xf32> to vector<16x32xf32>
    %128 = arith.mulf %126, %127 : vector<16x32xf32>
    %129 = vector.broadcast %103 : vector<1x32xf32> to vector<16x32xf32>
    %130 = arith.addf %128, %129 : vector<16x32xf32>
    %131 = vector.shape_cast %130 : vector<16x32xf32> to vector<1x16x32xf32>
    %132 = vector.shape_cast %131 : vector<1x16x32xf32> to vector<1x16x32xf32>
    %133 = vector.broadcast %132 : vector<1x16x32xf32> to vector<4x16x32xf32>
    %c1_47 = arith.constant 1 : index
    %c0_48 = arith.constant 0 : index
    %c0_49 = arith.constant 0 : index
    %c0_50 = arith.constant 0 : index
    %134 = vector.load %arg2[%c1_47, %c0_48, %c0_49, %c0_50] : memref<3x4x32x24xf32, #tpu.memory_space<vmem>>, vector<1x4x32x24xf32>
    %135 = vector.shape_cast %134 : vector<1x4x32x24xf32> to vector<4x32x24xf32>
    "tpu.trace_start"() <{level = 10 : i32, message = "hmc,hcd->hmd"}> : () -> ()
    %cst_51 = arith.constant dense<0.000000e+00> : vector<4x16x24xf32>
    %136 = tpu.matmul %133, %135, %cst_51 {dimension_numbers = #tpu.dot_dimension_numbers<[2], [1], [1], [2], [0, 0, 0, 1, 1, 2], [0], [0]>} : vector<4x16x32xf32>, vector<4x32x24xf32>, vector<4x16x24xf32> -> vector<4x16x24xf32>
    "tpu.trace_stop"() : () -> ()
    %137 = vector.extract_strided_slice %136 {offsets = [0, 0, 0], sizes = [4, 16, 8], strides = [1, 1, 1]} : vector<4x16x24xf32> to vector<4x16x8xf32>
    %138 = vector.extract_strided_slice %136 {offsets = [0, 0, 8], sizes = [4, 16, 8], strides = [1, 1, 1]} : vector<4x16x24xf32> to vector<4x16x8xf32>
    %139 = vector.extract_strided_slice %136 {offsets = [0, 0, 16], sizes = [4, 16, 8], strides = [1, 1, 1]} : vector<4x16x24xf32> to vector<4x16x8xf32>
    "tpu.trace_start"() <{level = 10 : i32, message = "hqd,hkd->hqk"}> : () -> ()
    %cst_52 = arith.constant dense<0.000000e+00> : vector<4x16x16xf32>
    %140 = tpu.matmul %137, %138, %cst_52 {dimension_numbers = #tpu.dot_dimension_numbers<[2], [2], [1], [1], [0, 0, 0, 1, 1, 1], [0], [0]>} : vector<4x16x8xf32>, vector<4x16x8xf32>, vector<4x16x16xf32> -> vector<4x16x16xf32>
    "tpu.trace_stop"() : () -> ()
    %cst_53 = arith.constant 0.353553385 : f32
    %141 = vector.broadcast %cst_53 : f32 to vector<4x16x16xf32>
    %142 = arith.mulf %140, %141 : vector<4x16x16xf32>
    %143 = vector.shape_cast %1 : vector<16x16xf32> to vector<1x16x16xf32>
    %144 = vector.broadcast %143 : vector<1x16x16xf32> to vector<4x16x16xf32>
    %145 = arith.addf %142, %144 : vector<4x16x16xf32>
    %cst_54 = arith.constant dense<0xFF800000> : vector<4x16xf32>
    %146 = vector.multi_reduction <maximumf>, %145, %cst_54 [2] : vector<4x16x16xf32> to vector<4x16xf32>
    %147 = vector.shape_cast %146 : vector<4x16xf32> to vector<4x16x1xf32>
    %148 = vector.broadcast %147 : vector<4x16x1xf32> to vector<4x16x16xf32>
    %149 = arith.subf %145, %148 : vector<4x16x16xf32>
    %150 = math.exp %149 : vector<4x16x16xf32>
    %cst_55 = arith.constant dense<0.000000e+00> : vector<4x16xf32>
    %151 = vector.multi_reduction <add>, %150, %cst_55 [2] : vector<4x16x16xf32> to vector<4x16xf32>
    %152 = vector.shape_cast %151 : vector<4x16xf32> to vector<4x16x1xf32>
    %153 = vector.broadcast %152 : vector<4x16x1xf32> to vector<4x16x16xf32>
    %154 = arith.divf %150, %153 : vector<4x16x16xf32>
    "tpu.trace_start"() <{level = 10 : i32, message = "hqk,hkd->hqd"}> : () -> ()
    %cst_56 = arith.constant dense<0.000000e+00> : vector<4x16x8xf32>
    %155 = tpu.matmul %154, %139, %cst_56 {dimension_numbers = #tpu.dot_dimension_numbers<[2], [1], [1], [2], [0, 0, 0, 1, 1, 2], [0], [0]>} : vector<4x16x16xf32>, vector<4x16x8xf32>, vector<4x16x8xf32> -> vector<4x16x8xf32>
    "tpu.trace_stop"() : () -> ()
    %c1_57 = arith.constant 1 : index
    %c0_58 = arith.constant 0 : index
    %c0_59 = arith.constant 0 : index
    %c0_60 = arith.constant 0 : index
    %156 = vector.load %arg3[%c1_57, %c0_58, %c0_59, %c0_60] : memref<3x4x8x32xf32, #tpu.memory_space<vmem>>, vector<1x4x8x32xf32>
    %157 = vector.shape_cast %156 : vector<1x4x8x32xf32> to vector<4x8x32xf32>
    "tpu.trace_start"() <{level = 10 : i32, message = "hmd,hde->hme"}> : () -> ()
    %cst_61 = arith.constant dense<0.000000e+00> : vector<4x16x32xf32>
    %158 = tpu.matmul %155, %157, %cst_61 {dimension_numbers = #tpu.dot_dimension_numbers<[2], [1], [1], [2], [0, 0, 0, 1, 1, 2], [0], [0]>} : vector<4x16x8xf32>, vector<4x8x32xf32>, vector<4x16x32xf32> -> vector<4x16x32xf32>
    "tpu.trace_stop"() : () -> ()
    %cst_62 = arith.constant dense<0.000000e+00> : vector<16x32xf32>
    %159 = vector.multi_reduction <add>, %158, %cst_62 [0] : vector<4x16x32xf32> to vector<16x32xf32>
    %160 = arith.addf %99, %159 : vector<16x32xf32>
    %161 = vector.broadcast %106 : vector<1x32xf32> to vector<16x32xf32>
    %162 = arith.addf %160, %161 : vector<16x32xf32>
    %cst_63 = arith.constant dense<0.000000e+00> : vector<16xf32>
    %163 = vector.multi_reduction <add>, %162, %cst_63 [1] : vector<16x32xf32> to vector<16xf32>
    %164 = vector.shape_cast %163 : vector<16xf32> to vector<16x1xf32>
    %cst_64 = arith.constant 3.200000e+01 : f32
    %165 = vector.broadcast %cst_64 : f32 to vector<16x1xf32>
    %166 = arith.divf %164, %165 : vector<16x1xf32>
    %167 = vector.broadcast %166 : vector<16x1xf32> to vector<16x32xf32>
    %168 = arith.subf %162, %167 : vector<16x32xf32>
    %169 = arith.mulf %168, %168 : vector<16x32xf32>
    %cst_65 = arith.constant dense<0.000000e+00> : vector<16xf32>
    %170 = vector.multi_reduction <add>, %169, %cst_65 [1] : vector<16x32xf32> to vector<16xf32>
    %171 = vector.shape_cast %170 : vector<16xf32> to vector<16x1xf32>
    %cst_66 = arith.constant 3.200000e+01 : f32
    %172 = vector.broadcast %cst_66 : f32 to vector<16x1xf32>
    %173 = arith.divf %171, %172 : vector<16x1xf32>
    %174 = vector.broadcast %166 : vector<16x1xf32> to vector<16x32xf32>
    %175 = arith.subf %162, %174 : vector<16x32xf32>
    %cst_67 = arith.constant 9.99999974E-6 : f32
    %176 = vector.broadcast %cst_67 : f32 to vector<16x1xf32>
    %177 = arith.addf %173, %176 : vector<16x1xf32>
    %178 = math.rsqrt %177 : vector<16x1xf32>
    %179 = vector.broadcast %178 : vector<16x1xf32> to vector<16x32xf32>
    %180 = arith.mulf %175, %179 : vector<16x32xf32>
    %181 = vector.broadcast %104 : vector<1x32xf32> to vector<16x32xf32>
    %182 = arith.mulf %180, %181 : vector<16x32xf32>
    %183 = vector.broadcast %105 : vector<1x32xf32> to vector<16x32xf32>
    %184 = arith.addf %182, %183 : vector<16x32xf32>
    %c1_68 = arith.constant 1 : index
    %c0_69 = arith.constant 0 : index
    %c0_70 = arith.constant 0 : index
    %185 = vector.load %arg4[%c1_68, %c0_69, %c0_70] : memref<3x32x128xf32, #tpu.memory_space<vmem>>, vector<1x32x128xf32>
    %186 = vector.shape_cast %185 : vector<1x32x128xf32> to vector<32x128xf32>
    %cst_71 = arith.constant dense<0.000000e+00> : vector<16x128xf32>
    %187 = tpu.matmul %184, %186, %cst_71 {dimension_numbers = #tpu.dot_dimension_numbers<[1], [0], [0], [1], [0, 0, 1, 1], [], []>} : vector<16x32xf32>, vector<32x128xf32>, vector<16x128xf32> -> vector<16x128xf32>
    %188 = vector.broadcast %108 : vector<1x128xf32> to vector<16x128xf32>
    %189 = arith.addf %187, %188 : vector<16x128xf32>
    %cst_72 = arith.constant 0.000000e+00 : f32
    %190 = vector.broadcast %cst_72 : f32 to vector<16x128xf32>
    %191 = arith.maximumf %189, %190 : vector<16x128xf32>
    %c1_73 = arith.constant 1 : index
    %c0_74 = arith.constant 0 : index
    %c0_75 = arith.constant 0 : index
    %192 = vector.load %arg5[%c1_73, %c0_74, %c0_75] : memref<3x128x32xf32, #tpu.memory_space<vmem>>, vector<1x128x32xf32>
    %193 = vector.shape_cast %192 : vector<1x128x32xf32> to vector<128x32xf32>
    %cst_76 = arith.constant dense<0.000000e+00> : vector<16x32xf32>
    %194 = tpu.matmul %191, %193, %cst_76 {dimension_numbers = #tpu.dot_dimension_numbers<[1], [0], [0], [1], [0, 0, 1, 1], [], []>} : vector<16x128xf32>, vector<128x32xf32>, vector<16x32xf32> -> vector<16x32xf32>
    %195 = arith.addf %162, %194 : vector<16x32xf32>
    %196 = vector.broadcast %107 : vector<1x32xf32> to vector<16x32xf32>
    %197 = arith.addf %195, %196 : vector<16x32xf32>
    %c2 = arith.constant 2 : index
    %c0_77 = arith.constant 0 : index
    %c0_78 = arith.constant 0 : index
    %198 = vector.load %arg6[%c2, %c0_77, %c0_78] : memref<3x8x128xf32, #tpu.memory_space<vmem>>, vector<1x8x128xf32>
    %199 = vector.shape_cast %198 : vector<1x8x128xf32> to vector<8x128xf32>
    %200 = vector.extract_strided_slice %199 {offsets = [0, 0], sizes = [1, 32], strides = [1, 1]} : vector<8x128xf32> to vector<1x32xf32>
    %201 = vector.extract_strided_slice %199 {offsets = [1, 0], sizes = [1, 32], strides = [1, 1]} : vector<8x128xf32> to vector<1x32xf32>
    %202 = vector.extract_strided_slice %199 {offsets = [2, 0], sizes = [1, 32], strides = [1, 1]} : vector<8x128xf32> to vector<1x32xf32>
    %203 = vector.extract_strided_slice %199 {offsets = [3, 0], sizes = [1, 32], strides = [1, 1]} : vector<8x128xf32> to vector<1x32xf32>
    %204 = vector.extract_strided_slice %199 {offsets = [4, 0], sizes = [1, 32], strides = [1, 1]} : vector<8x128xf32> to vector<1x32xf32>
    %205 = vector.extract_strided_slice %199 {offsets = [5, 0], sizes = [1, 32], strides = [1, 1]} : vector<8x128xf32> to vector<1x32xf32>
    %206 = vector.extract_strided_slice %199 {offsets = [6, 0], sizes = [1, 128], strides = [1, 1]} : vector<8x128xf32> to vector<1x128xf32>
    %cst_79 = arith.constant dense<0.000000e+00> : vector<16xf32>
    %207 = vector.multi_reduction <add>, %197, %cst_79 [1] : vector<16x32xf32> to vector<16xf32>
    %208 = vector.shape_cast %207 : vector<16xf32> to vector<16x1xf32>
    %cst_80 = arith.constant 3.200000e+01 : f32
    %209 = vector.broadcast %cst_80 : f32 to vector<16x1xf32>
    %210 = arith.divf %208, %209 : vector<16x1xf32>
    %211 = vector.broadcast %210 : vector<16x1xf32> to vector<16x32xf32>
    %212 = arith.subf %197, %211 : vector<16x32xf32>
    %213 = arith.mulf %212, %212 : vector<16x32xf32>
    %cst_81 = arith.constant dense<0.000000e+00> : vector<16xf32>
    %214 = vector.multi_reduction <add>, %213, %cst_81 [1] : vector<16x32xf32> to vector<16xf32>
    %215 = vector.shape_cast %214 : vector<16xf32> to vector<16x1xf32>
    %cst_82 = arith.constant 3.200000e+01 : f32
    %216 = vector.broadcast %cst_82 : f32 to vector<16x1xf32>
    %217 = arith.divf %215, %216 : vector<16x1xf32>
    %218 = vector.broadcast %210 : vector<16x1xf32> to vector<16x32xf32>
    %219 = arith.subf %197, %218 : vector<16x32xf32>
    %cst_83 = arith.constant 9.99999974E-6 : f32
    %220 = vector.broadcast %cst_83 : f32 to vector<16x1xf32>
    %221 = arith.addf %217, %220 : vector<16x1xf32>
    %222 = math.rsqrt %221 : vector<16x1xf32>
    %223 = vector.broadcast %222 : vector<16x1xf32> to vector<16x32xf32>
    %224 = arith.mulf %219, %223 : vector<16x32xf32>
    %225 = vector.broadcast %200 : vector<1x32xf32> to vector<16x32xf32>
    %226 = arith.mulf %224, %225 : vector<16x32xf32>
    %227 = vector.broadcast %201 : vector<1x32xf32> to vector<16x32xf32>
    %228 = arith.addf %226, %227 : vector<16x32xf32>
    %229 = vector.shape_cast %228 : vector<16x32xf32> to vector<1x16x32xf32>
    %230 = vector.shape_cast %229 : vector<1x16x32xf32> to vector<1x16x32xf32>
    %231 = vector.broadcast %230 : vector<1x16x32xf32> to vector<4x16x32xf32>
    %c2_84 = arith.constant 2 : index
    %c0_85 = arith.constant 0 : index
    %c0_86 = arith.constant 0 : index
    %c0_87 = arith.constant 0 : index
    %232 = vector.load %arg2[%c2_84, %c0_85, %c0_86, %c0_87] : memref<3x4x32x24xf32, #tpu.memory_space<vmem>>, vector<1x4x32x24xf32>
    %233 = vector.shape_cast %232 : vector<1x4x32x24xf32> to vector<4x32x24xf32>
    "tpu.trace_start"() <{level = 10 : i32, message = "hmc,hcd->hmd"}> : () -> ()
    %cst_88 = arith.constant dense<0.000000e+00> : vector<4x16x24xf32>
    %234 = tpu.matmul %231, %233, %cst_88 {dimension_numbers = #tpu.dot_dimension_numbers<[2], [1], [1], [2], [0, 0, 0, 1, 1, 2], [0], [0]>} : vector<4x16x32xf32>, vector<4x32x24xf32>, vector<4x16x24xf32> -> vector<4x16x24xf32>
    "tpu.trace_stop"() : () -> ()
    %235 = vector.extract_strided_slice %234 {offsets = [0, 0, 0], sizes = [4, 16, 8], strides = [1, 1, 1]} : vector<4x16x24xf32> to vector<4x16x8xf32>
    %236 = vector.extract_strided_slice %234 {offsets = [0, 0, 8], sizes = [4, 16, 8], strides = [1, 1, 1]} : vector<4x16x24xf32> to vector<4x16x8xf32>
    %237 = vector.extract_strided_slice %234 {offsets = [0, 0, 16], sizes = [4, 16, 8], strides = [1, 1, 1]} : vector<4x16x24xf32> to vector<4x16x8xf32>
    "tpu.trace_start"() <{level = 10 : i32, message = "hqd,hkd->hqk"}> : () -> ()
    %cst_89 = arith.constant dense<0.000000e+00> : vector<4x16x16xf32>
    %238 = tpu.matmul %235, %236, %cst_89 {dimension_numbers = #tpu.dot_dimension_numbers<[2], [2], [1], [1], [0, 0, 0, 1, 1, 1], [0], [0]>} : vector<4x16x8xf32>, vector<4x16x8xf32>, vector<4x16x16xf32> -> vector<4x16x16xf32>
    "tpu.trace_stop"() : () -> ()
    %cst_90 = arith.constant 0.353553385 : f32
    %239 = vector.broadcast %cst_90 : f32 to vector<4x16x16xf32>
    %240 = arith.mulf %238, %239 : vector<4x16x16xf32>
    %241 = vector.shape_cast %1 : vector<16x16xf32> to vector<1x16x16xf32>
    %242 = vector.broadcast %241 : vector<1x16x16xf32> to vector<4x16x16xf32>
    %243 = arith.addf %240, %242 : vector<4x16x16xf32>
    %cst_91 = arith.constant dense<0xFF800000> : vector<4x16xf32>
    %244 = vector.multi_reduction <maximumf>, %243, %cst_91 [2] : vector<4x16x16xf32> to vector<4x16xf32>
    %245 = vector.shape_cast %244 : vector<4x16xf32> to vector<4x16x1xf32>
    %246 = vector.broadcast %245 : vector<4x16x1xf32> to vector<4x16x16xf32>
    %247 = arith.subf %243, %246 : vector<4x16x16xf32>
    %248 = math.exp %247 : vector<4x16x16xf32>
    %cst_92 = arith.constant dense<0.000000e+00> : vector<4x16xf32>
    %249 = vector.multi_reduction <add>, %248, %cst_92 [2] : vector<4x16x16xf32> to vector<4x16xf32>
    %250 = vector.shape_cast %249 : vector<4x16xf32> to vector<4x16x1xf32>
    %251 = vector.broadcast %250 : vector<4x16x1xf32> to vector<4x16x16xf32>
    %252 = arith.divf %248, %251 : vector<4x16x16xf32>
    "tpu.trace_start"() <{level = 10 : i32, message = "hqk,hkd->hqd"}> : () -> ()
    %cst_93 = arith.constant dense<0.000000e+00> : vector<4x16x8xf32>
    %253 = tpu.matmul %252, %237, %cst_93 {dimension_numbers = #tpu.dot_dimension_numbers<[2], [1], [1], [2], [0, 0, 0, 1, 1, 2], [0], [0]>} : vector<4x16x16xf32>, vector<4x16x8xf32>, vector<4x16x8xf32> -> vector<4x16x8xf32>
    "tpu.trace_stop"() : () -> ()
    %c2_94 = arith.constant 2 : index
    %c0_95 = arith.constant 0 : index
    %c0_96 = arith.constant 0 : index
    %c0_97 = arith.constant 0 : index
    %254 = vector.load %arg3[%c2_94, %c0_95, %c0_96, %c0_97] : memref<3x4x8x32xf32, #tpu.memory_space<vmem>>, vector<1x4x8x32xf32>
    %255 = vector.shape_cast %254 : vector<1x4x8x32xf32> to vector<4x8x32xf32>
    "tpu.trace_start"() <{level = 10 : i32, message = "hmd,hde->hme"}> : () -> ()
    %cst_98 = arith.constant dense<0.000000e+00> : vector<4x16x32xf32>
    %256 = tpu.matmul %253, %255, %cst_98 {dimension_numbers = #tpu.dot_dimension_numbers<[2], [1], [1], [2], [0, 0, 0, 1, 1, 2], [0], [0]>} : vector<4x16x8xf32>, vector<4x8x32xf32>, vector<4x16x32xf32> -> vector<4x16x32xf32>
    "tpu.trace_stop"() : () -> ()
    %cst_99 = arith.constant dense<0.000000e+00> : vector<16x32xf32>
    %257 = vector.multi_reduction <add>, %256, %cst_99 [0] : vector<4x16x32xf32> to vector<16x32xf32>
    %258 = arith.addf %197, %257 : vector<16x32xf32>
    %259 = vector.broadcast %204 : vector<1x32xf32> to vector<16x32xf32>
    %260 = arith.addf %258, %259 : vector<16x32xf32>
    %cst_100 = arith.constant dense<0.000000e+00> : vector<16xf32>
    %261 = vector.multi_reduction <add>, %260, %cst_100 [1] : vector<16x32xf32> to vector<16xf32>
    %262 = vector.shape_cast %261 : vector<16xf32> to vector<16x1xf32>
    %cst_101 = arith.constant 3.200000e+01 : f32
    %263 = vector.broadcast %cst_101 : f32 to vector<16x1xf32>
    %264 = arith.divf %262, %263 : vector<16x1xf32>
    %265 = vector.broadcast %264 : vector<16x1xf32> to vector<16x32xf32>
    %266 = arith.subf %260, %265 : vector<16x32xf32>
    %267 = arith.mulf %266, %266 : vector<16x32xf32>
    %cst_102 = arith.constant dense<0.000000e+00> : vector<16xf32>
    %268 = vector.multi_reduction <add>, %267, %cst_102 [1] : vector<16x32xf32> to vector<16xf32>
    %269 = vector.shape_cast %268 : vector<16xf32> to vector<16x1xf32>
    %cst_103 = arith.constant 3.200000e+01 : f32
    %270 = vector.broadcast %cst_103 : f32 to vector<16x1xf32>
    %271 = arith.divf %269, %270 : vector<16x1xf32>
    %272 = vector.broadcast %264 : vector<16x1xf32> to vector<16x32xf32>
    %273 = arith.subf %260, %272 : vector<16x32xf32>
    %cst_104 = arith.constant 9.99999974E-6 : f32
    %274 = vector.broadcast %cst_104 : f32 to vector<16x1xf32>
    %275 = arith.addf %271, %274 : vector<16x1xf32>
    %276 = math.rsqrt %275 : vector<16x1xf32>
    %277 = vector.broadcast %276 : vector<16x1xf32> to vector<16x32xf32>
    %278 = arith.mulf %273, %277 : vector<16x32xf32>
    %279 = vector.broadcast %202 : vector<1x32xf32> to vector<16x32xf32>
    %280 = arith.mulf %278, %279 : vector<16x32xf32>
    %281 = vector.broadcast %203 : vector<1x32xf32> to vector<16x32xf32>
    %282 = arith.addf %280, %281 : vector<16x32xf32>
    %c2_105 = arith.constant 2 : index
    %c0_106 = arith.constant 0 : index
    %c0_107 = arith.constant 0 : index
    %283 = vector.load %arg4[%c2_105, %c0_106, %c0_107] : memref<3x32x128xf32, #tpu.memory_space<vmem>>, vector<1x32x128xf32>
    %284 = vector.shape_cast %283 : vector<1x32x128xf32> to vector<32x128xf32>
    %cst_108 = arith.constant dense<0.000000e+00> : vector<16x128xf32>
    %285 = tpu.matmul %282, %284, %cst_108 {dimension_numbers = #tpu.dot_dimension_numbers<[1], [0], [0], [1], [0, 0, 1, 1], [], []>} : vector<16x32xf32>, vector<32x128xf32>, vector<16x128xf32> -> vector<16x128xf32>
    %286 = vector.broadcast %206 : vector<1x128xf32> to vector<16x128xf32>
    %287 = arith.addf %285, %286 : vector<16x128xf32>
    %cst_109 = arith.constant 0.000000e+00 : f32
    %288 = vector.broadcast %cst_109 : f32 to vector<16x128xf32>
    %289 = arith.maximumf %287, %288 : vector<16x128xf32>
    %c2_110 = arith.constant 2 : index
    %c0_111 = arith.constant 0 : index
    %c0_112 = arith.constant 0 : index
    %290 = vector.load %arg5[%c2_110, %c0_111, %c0_112] : memref<3x128x32xf32, #tpu.memory_space<vmem>>, vector<1x128x32xf32>
    %291 = vector.shape_cast %290 : vector<1x128x32xf32> to vector<128x32xf32>
    %cst_113 = arith.constant dense<0.000000e+00> : vector<16x32xf32>
    %292 = tpu.matmul %289, %291, %cst_113 {dimension_numbers = #tpu.dot_dimension_numbers<[1], [0], [0], [1], [0, 0, 1, 1], [], []>} : vector<16x128xf32>, vector<128x32xf32>, vector<16x32xf32> -> vector<16x32xf32>
    %293 = arith.addf %260, %292 : vector<16x32xf32>
    %294 = vector.broadcast %205 : vector<1x32xf32> to vector<16x32xf32>
    %295 = arith.addf %293, %294 : vector<16x32xf32>
    %c0_114 = arith.constant 0 : index
    %c0_115 = arith.constant 0 : index
    %296 = vector.load %arg8[%c0_114, %c0_115] : memref<8x128xf32, #tpu.memory_space<vmem>>, vector<1x32xf32>
    %c1_116 = arith.constant 1 : index
    %c0_117 = arith.constant 0 : index
    %297 = vector.load %arg8[%c1_116, %c0_117] : memref<8x128xf32, #tpu.memory_space<vmem>>, vector<1x32xf32>
    %c2_118 = arith.constant 2 : index
    %c0_119 = arith.constant 0 : index
    %298 = vector.load %arg8[%c2_118, %c0_119] : memref<8x128xf32, #tpu.memory_space<vmem>>, vector<1x128xf32>
    %cst_120 = arith.constant dense<0.000000e+00> : vector<16xf32>
    %299 = vector.multi_reduction <add>, %295, %cst_120 [1] : vector<16x32xf32> to vector<16xf32>
    %300 = vector.shape_cast %299 : vector<16xf32> to vector<16x1xf32>
    %cst_121 = arith.constant 3.200000e+01 : f32
    %301 = vector.broadcast %cst_121 : f32 to vector<16x1xf32>
    %302 = arith.divf %300, %301 : vector<16x1xf32>
    %303 = vector.broadcast %302 : vector<16x1xf32> to vector<16x32xf32>
    %304 = arith.subf %295, %303 : vector<16x32xf32>
    %305 = arith.mulf %304, %304 : vector<16x32xf32>
    %cst_122 = arith.constant dense<0.000000e+00> : vector<16xf32>
    %306 = vector.multi_reduction <add>, %305, %cst_122 [1] : vector<16x32xf32> to vector<16xf32>
    %307 = vector.shape_cast %306 : vector<16xf32> to vector<16x1xf32>
    %cst_123 = arith.constant 3.200000e+01 : f32
    %308 = vector.broadcast %cst_123 : f32 to vector<16x1xf32>
    %309 = arith.divf %307, %308 : vector<16x1xf32>
    %310 = vector.broadcast %302 : vector<16x1xf32> to vector<16x32xf32>
    %311 = arith.subf %295, %310 : vector<16x32xf32>
    %cst_124 = arith.constant 9.99999974E-6 : f32
    %312 = vector.broadcast %cst_124 : f32 to vector<16x1xf32>
    %313 = arith.addf %309, %312 : vector<16x1xf32>
    %314 = math.rsqrt %313 : vector<16x1xf32>
    %315 = vector.broadcast %314 : vector<16x1xf32> to vector<16x32xf32>
    %316 = arith.mulf %311, %315 : vector<16x32xf32>
    %317 = vector.broadcast %296 : vector<1x32xf32> to vector<16x32xf32>
    %318 = arith.mulf %316, %317 : vector<16x32xf32>
    %319 = vector.broadcast %297 : vector<1x32xf32> to vector<16x32xf32>
    %320 = arith.addf %318, %319 : vector<16x32xf32>
    %c0_125 = arith.constant 0 : index
    %c0_126 = arith.constant 0 : index
    %321 = vector.load %arg7[%c0_125, %c0_126] : memref<32x128xf32, #tpu.memory_space<vmem>>, vector<32x128xf32>
    %cst_127 = arith.constant dense<0.000000e+00> : vector<16x128xf32>
    %322 = tpu.matmul %320, %321, %cst_127 {dimension_numbers = #tpu.dot_dimension_numbers<[1], [0], [0], [1], [0, 0, 1, 1], [], []>} : vector<16x32xf32>, vector<32x128xf32>, vector<16x128xf32> -> vector<16x128xf32>
    %323 = vector.broadcast %298 : vector<1x128xf32> to vector<16x128xf32>
    %324 = arith.addf %322, %323 : vector<16x128xf32>
    %c0_128 = arith.constant 0 : index
    %c0_129 = arith.constant 0 : index
    %325 = vector.load %arg9[%c0_128, %c0_129] : memref<16x128xf32, #tpu.memory_space<vmem>>, vector<16x128xf32>
    tpu.vector_store %arg9[%c0_128, %c0_129], %324 {strides = array<i32>} : memref<16x128xf32, #tpu.memory_space<vmem>>, vector<16x128xf32>,
    return
  }
}

</mosaic_0001>

<llo_original>
// kernel: transformer_forward.1
$region0: #{transformer_forward.1}
  #allocation0 [shape = 'u32[]', space=smem, size = 0x4, offset = 0x4, fixed_abs, tag = 'smem constant byte address 0x4 - core index']
  #allocation1 [shape = 'u32[144,128]{1,0:T(1,128)}', space=vmem, size = 0x12000, scoped, tag = 'internal scratch']
  %s0 = inlined_call_operand.vmem [shape: f32[16,32], index: 0, kind: input, shape index: {}]
  %s1 = inlined_call_operand.vmem [shape: f32[16,16], index: 1, kind: input, shape index: {}]
  %s2 = inlined_call_operand.vmem [shape: f32[3,4,32,24], index: 2, kind: input, shape index: {}]
  %s3 = inlined_call_operand.vmem [shape: f32[3,4,8,32], index: 3, kind: input, shape index: {}]
  %s4 = inlined_call_operand.vmem [shape: f32[3,32,128], index: 4, kind: input, shape index: {}]
  %s5 = inlined_call_operand.vmem [shape: f32[3,128,32], index: 5, kind: input, shape index: {}]
  %s6 = inlined_call_operand.vmem [shape: f32[3,8,128], index: 6, kind: input, shape index: {}]
  %s7 = inlined_call_operand.vmem [shape: f32[32,128], index: 7, kind: input, shape index: {}]
  %s8 = inlined_call_operand.vmem [shape: f32[8,128], index: 8, kind: input, shape index: {}]
  %s9 = inlined_call_operand.hbm [shape: f32[16,128], index: 9, kind: output, shape index: {}]
  %s10 = sld [smem:[#allocation0]]
  $region46: #{transformer_forward.1} parent=0
    _
  %s12 = ssub.s32 1, %s10
  %s13 = scalar_select 0, %s12, %s10
  $region1: #{transformer_forward.1} parent=0
    #allocation2 [shape = 'u8[8192]{0}', space=vmem, size = 0x2000, scoped, tag = 'output window, operand 0, single buffered']
    #allocation3 [shape = 's32[1]{0}', space=sflag, size = 0x4, scoped, tag = 'scoped memory for transformer_forward.1']
    %14 = vsyncpa [#allocation3], 0
    // Predicated region
    $region2: #{transformer_forward.1} parent=1 // pred_check
      _
    $region3: #{transformer_forward.1} parent=1 // pred_check_branch
      %16 = sbr.rel (0) target = $region5
    $region4: #{transformer_forward.1} parent=1 // pred_region
      _
    $region5: #{transformer_forward.1} parent=1 // pred_fallthru
      _
    // Predicated region
    $region6: #{transformer_forward.1} parent=1 // pred_check
      _
    $region7: #{transformer_forward.1} parent=1 // pred_check_branch
      %18 = sbr.rel (0) target = $region9
    $region8: #{transformer_forward.1} parent=1 // pred_region
      _
    $region9: #{transformer_forward.1} parent=1 // pred_fallthru
      _
    // Predicated region
    $region10: #{transformer_forward.1} parent=1 // pred_check
      _
    $region11: #{transformer_forward.1} parent=1 // pred_check_branch
      %20 = sbr.rel (0) target = $region13
    $region12: #{transformer_forward.1} parent=1 // pred_region
      _
    $region13: #{transformer_forward.1} parent=1 // pred_fallthru
      _
    // Predicated region
    $region14: #{transformer_forward.1} parent=1 // pred_check
      _
    $region15: #{transformer_forward.1} parent=1 // pred_check_branch
      %22 = sbr.rel (0) target = $region17
    $region16: #{transformer_forward.1} parent=1 // pred_region
      _
    $region17: #{transformer_forward.1} parent=1 // pred_fallthru
      _
    // Predicated region
    $region18: #{transformer_forward.1} parent=1 // pred_check
      _
    $region19: #{transformer_forward.1} parent=1 // pred_check_branch
      %24 = sbr.rel (0) target = $region21
    $region20: #{transformer_forward.1} parent=1 // pred_region
      _
    $region21: #{transformer_forward.1} parent=1 // pred_fallthru
      _
    // Predicated region
    $region22: #{transformer_forward.1} parent=1 // pred_check
      _
    $region23: #{transformer_forward.1} parent=1 // pred_check_branch
      %26 = sbr.rel (0) target = $region25
    $region24: #{transformer_forward.1} parent=1 // pred_region
      _
    $region25: #{transformer_forward.1} parent=1 // pred_fallthru
      _
    // Predicated region
    $region26: #{transformer_forward.1} parent=1 // pred_check
      _
    $region27: #{transformer_forward.1} parent=1 // pred_check_branch
      %28 = sbr.rel (0) target = $region29
    $region28: #{transformer_forward.1} parent=1 // pred_region
      _
    $region29: #{transformer_forward.1} parent=1 // pred_fallthru
      _
    // Predicated region
    $region30: #{transformer_forward.1} parent=1 // pred_check
      _
    $region31: #{transformer_forward.1} parent=1 // pred_check_branch
      %30 = sbr.rel (0) target = $region33
    $region32: #{transformer_forward.1} parent=1 // pred_region
      _
    $region33: #{transformer_forward.1} parent=1 // pred_fallthru
      _
    // Predicated region
    $region34: #{transformer_forward.1} parent=1 // pred_check
      _
    $region35: #{transformer_forward.1} parent=1 // pred_check_branch
      %32 = sbr.rel (0) target = $region37
    $region36: #{transformer_forward.1} parent=1 // pred_region
      _
    $region37: #{transformer_forward.1} parent=1 // pred_fallthru
      _
    %v33 = vld [vmem:[%s0] sm:$0xff]
    %v34 = vld [vmem:[%s0 + $0x8] sm:$0xff]
    %v35 = vld [vmem:[%s1] sm:$0xff]
    %v36 = vld [vmem:[%s1 + $0x8] sm:$0xff]
    %v37 = vld [vmem:[%s6] sm:$0xff]
    %vm38 = vcmask 261120
    %v39 = vsel %vm38, %v33, 0.0
    %40 = vadd.xlane.f32.xlu0 %v39
    %v41 = vpop.xlane.xlu0 %40
    %v42 = vsel %vm38, %v34, 0.0
    %43 = vadd.xlane.f32.xlu0 %v42
    %v44 = vpop.xlane.xlu0 %43
    %v45 = vrcp.pop 32.0
    %v46 = vmul.f32 %v41, %v45
    %v47 = vmul.f32 %v44, %v45
    %v48 = vsub.f32 %v33, %v46
    %v49 = vsub.f32 %v34, %v47
    %v50 = vmul.f32 %v48, %v48
    %v51 = vmul.f32 %v49, %v49
    %v52 = vsel %vm38, %v50, 0.0
    %53 = vadd.xlane.f32.xlu0 %v52
    %v54 = vpop.xlane.xlu0 %53
    %v55 = vsel %vm38, %v51, 0.0
    %56 = vadd.xlane.f32.xlu0 %v55
    %v57 = vpop.xlane.xlu0 %56
    %v58 = vmul.f32 %v54, %v45
    %v59 = vmul.f32 %v57, %v45
    %v60 = vadd.f32 %v58, 1e-05
    %v61 = vadd.f32 %v59, 1e-05
    %v62 = vrsqrt.pop %v60
    %v63 = vrsqrt.pop %v61
    %v64 = vmul.f32 %v48, %v62
    %v65 = vmul.f32 %v49, %v63
    %v66 = vlaneseq
    %v67 = vshrl.u32 %v66, 7
    %v68 = vsub.s32 0, %v67
    %v69 = vrot.slane %v37, %v68
    %v70 = vmul.f32 %v64, %v69
    %v71 = vmul.f32 %v65, %v69
    %v72 = vlaneseq
    %v73 = vshrl.u32 %v72, 7
    %v74 = vsub.s32 1, %v73
    %v75 = vrot.slane %v37, %v74
    %v76 = vadd.f32 %v70, %v75
    %v77 = vadd.f32 %v71, %v75
    %v78 = vld [vmem:[%s2] sm:$0xff]
    %v79 = vld [vmem:[%s2 + $0x8] sm:$0xff]
    %v80 = vld [vmem:[%s2 + $0x10] sm:$0xff]
    %v81 = vld [vmem:[%s2 + $0x18] sm:$0xff]
    %v82 = vld [vmem:[%s2 + $0x20] sm:$0xff]
    %v83 = vld [vmem:[%s2 + $0x28] sm:$0xff]
    %v84 = vld [vmem:[%s2 + $0x30] sm:$0xff]
    %v85 = vld [vmem:[%s2 + $0x38] sm:$0xff]
    %v86 = vld [vmem:[%s2 + $0x40] sm:$0xff]
    %v87 = vld [vmem:[%s2 + $0x48] sm:$0xff]
    %v88 = vld [vmem:[%s2 + $0x50] sm:$0xff]
    %v89 = vld [vmem:[%s2 + $0x58] sm:$0xff]
    %v90 = vld [vmem:[%s2 + $0x60] sm:$0xff]
    %v91 = vld [vmem:[%s2 + $0x68] sm:$0xff]
    %v92 = vld [vmem:[%s2 + $0x70] sm:$0xff]
    %v93 = vld [vmem:[%s2 + $0x78] sm:$0xff]
    %v95 = vsel %vm38, %v76, 0
    %v98 = vsel %vm38, %v77, 0
    %100 = vmatprep.subr.mxu0 0.0
    %101 = vmatpush1.msra.mxu0 0.0
    %102 = vmatprep.subr.mxu0 0.0
    %103 = vmatpush1.msra.mxu0 0.0
    %104 = vmatprep.subr.mxu0 0.0
    %105 = vmatpush1.msra.mxu0 0.0
    %106 = vmatprep.subr.mxu0 0.0
    %107 = vmatpush1.msra.mxu0 0.0
    %108 = vmatprep.subr.mxu0 0.0
    %109 = vmatpush1.msra.mxu0 0.0
    %110 = vmatprep.subr.mxu0 0.0
    %111 = vmatpush1.msra.mxu0 0.0
    %112 = vmatprep.subr.mxu0 0.0
    %113 = vmatpush1.msra.mxu0 0.0
    %114 = vmatprep.subr.mxu0 0.0
    %115 = vmatpush1.msra.mxu0 0.0
    %116 = vmatprep.subr.mxu0 0.0
    %117 = vmatpush1.msra.mxu0 0.0
    %118 = vmatprep.subr.mxu0 0.0
    %119 = vmatpush1.msra.mxu0 0.0
    %120 = vmatprep.subr.mxu0 0.0
    %121 = vmatpush1.msra.mxu0 0.0
    %122 = vmatprep.subr.mxu0 0.0
    %123 = vmatpush1.msra.mxu0 0.0
    %124 = vmatprep.subr.mxu0 0.0
    %125 = vmatpush1.msra.mxu0 %v81
    %126 = vmatprep.subr.mxu0 0.0
    %127 = vmatpush1.msra.mxu0 %v80
    %128 = vmatprep.subr.mxu0 0.0
    %129 = vmatpush1.msra.mxu0 %v79
    %130 = vmatprep.subr.mxu0 0.0
    %131 = vmatpush1.msra.mxu0 %v78
    %132 = vmatprep.subr.mxu0 0.0
    %133 = vmatpush2.msra.mxu0 0.0
    %134 = vmatprep.subr.mxu0 0.0
    %135 = vmatpush2.msra.mxu0 0.0
    %136 = vmatprep.subr.mxu0 0.0
    %137 = vmatpush2.msra.mxu0 0.0
    %138 = vmatprep.subr.mxu0 0.0
    %139 = vmatpush2.msra.mxu0 0.0
    %140 = vmatprep.subr.mxu0 0.0
    %141 = vmatpush2.msra.mxu0 0.0
    %142 = vmatprep.subr.mxu0 0.0
    %143 = vmatpush2.msra.mxu0 0.0
    %144 = vmatprep.subr.mxu0 0.0
    %145 = vmatpush2.msra.mxu0 0.0
    %146 = vmatprep.subr.mxu0 0.0
    %147 = vmatpush2.msra.mxu0 0.0
    %148 = vmatprep.subr.mxu0 0.0
    %149 = vmatpush2.msra.mxu0 0.0
    %150 = vmatprep.subr.mxu0 0.0
    %151 = vmatpush2.msra.mxu0 0.0
    %152 = vmatprep.subr.mxu0 0.0
    %153 = vmatpush2.msra.mxu0 0.0
    %154 = vmatprep.subr.mxu0 0.0
    %155 = vmatpush2.msra.mxu0 0.0
    %156 = vmatprep.subr.mxu0 0.0
    %157 = vmatpush2.msra.mxu0 0.0
    %158 = vmatprep.subr.mxu0 0.0
    %159 = vmatpush2.msra.mxu0 0.0
    %160 = vmatprep.subr.mxu0 0.0
    %161 = vmatpush2.msra.mxu0 0.0
    %162 = vmatprep.subr.mxu0 0.0
    %163 = vmatpush2.msra.mxu0 0.0
    %164 = vmatprep.mubr.f32.mxu0 0.0
    %165 = vmatmul.mubr.f32.gmra.mxu0 %v95
    %v166 = vpop.f32.mrf.mxu0
    %v167 = vadd.f32 0.0, %v166
    %v168 = vpop.f32.mrf.mxu0
    %169 = vmatprep.mubr.f32.mxu0 0.0
    %170 = vmatmul.mubr.f32.gmra.mxu0 %v98
    %v171 = vpop.f32.mrf.mxu0
    %v172 = vadd.f32 0.0, %v171
    %v173 = vpop.f32.mrf.mxu0
    %174 = vdwg.mxu0
    %175 = vmatprep.subr.mxu0 0.0
    %176 = vmatpush1.msra.mxu0 0.0
    %177 = vmatprep.subr.mxu0 0.0
    %178 = vmatpush1.msra.mxu0 0.0
    %179 = vmatprep.subr.mxu0 0.0
    %180 = vmatpush1.msra.mxu0 0.0
    %181 = vmatprep.subr.mxu0 0.0
    %182 = vmatpush1.msra.mxu0 0.0
    %183 = vmatprep.subr.mxu0 0.0
    %184 = vmatpush1.msra.mxu0 0.0
    %185 = vmatprep.subr.mxu0 0.0
    %186 = vmatpush1.msra.mxu0 0.0
    %187 = vmatprep.subr.mxu0 0.0
    %188 = vmatpush1.msra.mxu0 0.0
    %189 = vmatprep.subr.mxu0 0.0
    %190 = vmatpush1.msra.mxu0 0.0
    %191 = vmatprep.subr.mxu0 0.0
    %192 = vmatpush1.msra.mxu0 0.0
    %193 = vmatprep.subr.mxu0 0.0
    %194 = vmatpush1.msra.mxu0 0.0
    %195 = vmatprep.subr.mxu0 0.0
    %196 = vmatpush1.msra.mxu0 0.0
    %197 = vmatprep.subr.mxu0 0.0
    %198 = vmatpush1.msra.mxu0 0.0
    %199 = vmatprep.subr.mxu0 0.0
    %200 = vmatpush1.msra.mxu0 %v85
    %201 = vmatprep.subr.mxu0 0.0
    %202 = vmatpush1.msra.mxu0 %v84
    %203 = vmatprep.subr.mxu0 0.0
    %204 = vmatpush1.msra.mxu0 %v83
    %205 = vmatprep.subr.mxu0 0.0
    %206 = vmatpush1.msra.mxu0 %v82
    %207 = vmatprep.subr.mxu0 0.0
    %208 = vmatpush2.msra.mxu0 0.0
    %209 = vmatprep.subr.mxu0 0.0
    %210 = vmatpush2.msra.mxu0 0.0
    %211 = vmatprep.subr.mxu0 0.0
    %212 = vmatpush2.msra.mxu0 0.0
    %213 = vmatprep.subr.mxu0 0.0
    %214 = vmatpush2.msra.mxu0 0.0
    %215 = vmatprep.subr.mxu0 0.0
    %216 = vmatpush2.msra.mxu0 0.0
    %217 = vmatprep.subr.mxu0 0.0
    %218 = vmatpush2.msra.mxu0 0.0
    %219 = vmatprep.subr.mxu0 0.0
    %220 = vmatpush2.msra.mxu0 0.0
    %221 = vmatprep.subr.mxu0 0.0
    %222 = vmatpush2.msra.mxu0 0.0
    %223 = vmatprep.subr.mxu0 0.0
    %224 = vmatpush2.msra.mxu0 0.0
    %225 = vmatprep.subr.mxu0 0.0
    %226 = vmatpush2.msra.mxu0 0.0
    %227 = vmatprep.subr.mxu0 0.0
    %228 = vmatpush2.msra.mxu0 0.0
    %229 = vmatprep.subr.mxu0 0.0
    %230 = vmatpush2.msra.mxu0 0.0
    %231 = vmatprep.subr.mxu0 0.0
    %232 = vmatpush2.msra.mxu0 0.0
    %233 = vmatprep.subr.mxu0 0.0
    %234 = vmatpush2.msra.mxu0 0.0
    %235 = vmatprep.subr.mxu0 0.0
    %236 = vmatpush2.msra.mxu0 0.0
    %237 = vmatprep.subr.mxu0 0.0
    %238 = vmatpush2.msra.mxu0 0.0
    %239 = vmatprep.mubr.f32.mxu0 0.0
    %240 = vmatmul.mubr.f32.gmra.mxu0 %v95
    %v241 = vpop.f32.mrf.mxu0
    %v242 = vadd.f32 0.0, %v241
    %v243 = vpop.f32.mrf.mxu0
    %244 = vmatprep.mubr.f32.mxu0 0.0
    %245 = vmatmul.mubr.f32.gmra.mxu0 %v98
    %v246 = vpop.f32.mrf.mxu0
    %v247 = vadd.f32 0.0, %v246
    %v248 = vpop.f32.mrf.mxu0
    %249 = vdwg.mxu0
    %250 = vmatprep.subr.mxu0 0.0
    %251 = vmatpush1.msra.mxu0 0.0
    %252 = vmatprep.subr.mxu0 0.0
    %253 = vmatpush1.msra.mxu0 0.0
    %254 = vmatprep.subr.mxu0 0.0
    %255 = vmatpush1.msra.mxu0 0.0
    %256 = vmatprep.subr.mxu0 0.0
    %257 = vmatpush1.msra.mxu0 0.0
    %258 = vmatprep.subr.mxu0 0.0
    %259 = vmatpush1.msra.mxu0 0.0
    %260 = vmatprep.subr.mxu0 0.0
    %261 = vmatpush1.msra.mxu0 0.0
    %262 = vmatprep.subr.mxu0 0.0
    %263 = vmatpush1.msra.mxu0 0.0
    %264 = vmatprep.subr.mxu0 0.0
    %265 = vmatpush1.msra.mxu0 0.0
    %266 = vmatprep.subr.mxu0 0.0
    %267 = vmatpush1.msra.mxu0 0.0
    %268 = vmatprep.subr.mxu0 0.0
    %269 = vmatpush1.msra.mxu0 0.0
    %270 = vmatprep.subr.mxu0 0.0
    %271 = vmatpush1.msra.mxu0 0.0
    %272 = vmatprep.subr.mxu0 0.0
    %273 = vmatpush1.msra.mxu0 0.0
    %274 = vmatprep.subr.mxu0 0.0
    %275 = vmatpush1.msra.mxu0 %v89
    %276 = vmatprep.subr.mxu0 0.0
    %277 = vmatpush1.msra.mxu0 %v88
    %278 = vmatprep.subr.mxu0 0.0
    %279 = vmatpush1.msra.mxu0 %v87
    %280 = vmatprep.subr.mxu0 0.0
    %281 = vmatpush1.msra.mxu0 %v86
    %282 = vmatprep.subr.mxu0 0.0
    %283 = vmatpush2.msra.mxu0 0.0
    %284 = vmatprep.subr.mxu0 0.0
    %285 = vmatpush2.msra.mxu0 0.0
    %286 = vmatprep.subr.mxu0 0.0
    %287 = vmatpush2.msra.mxu0 0.0
    %288 = vmatprep.subr.mxu0 0.0
    %289 = vmatpush2.msra.mxu0 0.0
    %290 = vmatprep.subr.mxu0 0.0
    %291 = vmatpush2.msra.mxu0 0.0
    %292 = vmatprep.subr.mxu0 0.0
    %293 = vmatpush2.msra.mxu0 0.0
    %294 = vmatprep.subr.mxu0 0.0
    %295 = vmatpush2.msra.mxu0 0.0
    %296 = vmatprep.subr.mxu0 0.0
    %297 = vmatpush2.msra.mxu0 0.0
    %298 = vmatprep.subr.mxu0 0.0
    %299 = vmatpush2.msra.mxu0 0.0
    %300 = vmatprep.subr.mxu0 0.0
    %301 = vmatpush2.msra.mxu0 0.0
    %302 = vmatprep.subr.mxu0 0.0
    %303 = vmatpush2.msra.mxu0 0.0
    %304 = vmatprep.subr.mxu0 0.0
    %305 = vmatpush2.msra.mxu0 0.0
    %306 = vmatprep.subr.mxu0 0.0
    %307 = vmatpush2.msra.mxu0 0.0
    %308 = vmatprep.subr.mxu0 0.0
    %309 = vmatpush2.msra.mxu0 0.0
    %310 = vmatprep.subr.mxu0 0.0
    %311 = vmatpush2.msra.mxu0 0.0
    %312 = vmatprep.subr.mxu0 0.0
    %313 = vmatpush2.msra.mxu0 0.0
    %314 = vmatprep.mubr.f32.mxu0 0.0
    %315 = vmatmul.mubr.f32.gmra.mxu0 %v95
    %v316 = vpop.f32.mrf.mxu0
    %v317 = vadd.f32 0.0, %v316
    %v318 = vpop.f32.mrf.mxu0
    %319 = vmatprep.mubr.f32.mxu0 0.0
    %320 = vmatmul.mubr.f32.gmra.mxu0 %v98
    %v321 = vpop.f32.mrf.mxu0
    %v322 = vadd.f32 0.0, %v321
    %v323 = vpop.f32.mrf.mxu0
    %324 = vdwg.mxu0
    %325 = vmatprep.subr.mxu0 0.0
    %326 = vmatpush1.msra.mxu0 0.0
    %327 = vmatprep.subr.mxu0 0.0
    %328 = vmatpush1.msra.mxu0 0.0
    %329 = vmatprep.subr.mxu0 0.0
    %330 = vmatpush1.msra.mxu0 0.0
    %331 = vmatprep.subr.mxu0 0.0
    %332 = vmatpush1.msra.mxu0 0.0
    %333 = vmatprep.subr.mxu0 0.0
    %334 = vmatpush1.msra.mxu0 0.0
    %335 = vmatprep.subr.mxu0 0.0
    %336 = vmatpush1.msra.mxu0 0.0
    %337 = vmatprep.subr.mxu0 0.0
    %338 = vmatpush1.msra.mxu0 0.0
    %339 = vmatprep.subr.mxu0 0.0
    %340 = vmatpush1.msra.mxu0 0.0
    %341 = vmatprep.subr.mxu0 0.0
    %342 = vmatpush1.msra.mxu0 0.0
    %343 = vmatprep.subr.mxu0 0.0
    %344 = vmatpush1.msra.mxu0 0.0
    %345 = vmatprep.subr.mxu0 0.0
    %346 = vmatpush1.msra.mxu0 0.0
    %347 = vmatprep.subr.mxu0 0.0
    %348 = vmatpush1.msra.mxu0 0.0
    %349 = vmatprep.subr.mxu0 0.0
    %350 = vmatpush1.msra.mxu0 %v93
    %351 = vmatprep.subr.mxu0 0.0
    %352 = vmatpush1.msra.mxu0 %v92
    %353 = vmatprep.subr.mxu0 0.0
    %354 = vmatpush1.msra.mxu0 %v91
    %355 = vmatprep.subr.mxu0 0.0
    %356 = vmatpush1.msra.mxu0 %v90
    %357 = vmatprep.subr.mxu0 0.0
    %358 = vmatpush2.msra.mxu0 0.0
    %359 = vmatprep.subr.mxu0 0.0
    %360 = vmatpush2.msra.mxu0 0.0
    %361 = vmatprep.subr.mxu0 0.0
    %362 = vmatpush2.msra.mxu0 0.0
    %363 = vmatprep.subr.mxu0 0.0
    %364 = vmatpush2.msra.mxu0 0.0
    %365 = vmatprep.subr.mxu0 0.0
    %366 = vmatpush2.msra.mxu0 0.0
    %367 = vmatprep.subr.mxu0 0.0
    %368 = vmatpush2.msra.mxu0 0.0
    %369 = vmatprep.subr.mxu0 0.0
    %370 = vmatpush2.msra.mxu0 0.0
    %371 = vmatprep.subr.mxu0 0.0
    %372 = vmatpush2.msra.mxu0 0.0
    %373 = vmatprep.subr.mxu0 0.0
    %374 = vmatpush2.msra.mxu0 0.0
    %375 = vmatprep.subr.mxu0 0.0
    %376 = vmatpush2.msra.mxu0 0.0
    %377 = vmatprep.subr.mxu0 0.0
    %378 = vmatpush2.msra.mxu0 0.0
    %379 = vmatprep.subr.mxu0 0.0
    %380 = vmatpush2.msra.mxu0 0.0
    %381 = vmatprep.subr.mxu0 0.0
    %382 = vmatpush2.msra.mxu0 0.0
    %383 = vmatprep.subr.mxu0 0.0
    %384 = vmatpush2.msra.mxu0 0.0
    %385 = vmatprep.subr.mxu0 0.0
    %386 = vmatpush2.msra.mxu0 0.0
    %387 = vmatprep.subr.mxu0 0.0
    %388 = vmatpush2.msra.mxu0 0.0
    %389 = vmatprep.mubr.f32.mxu0 0.0
    %390 = vmatmul.mubr.f32.gmra.mxu0 %v95
    %v391 = vpop.f32.mrf.mxu0
    %v392 = vadd.f32 0.0, %v391
    %v393 = vpop.f32.mrf.mxu0
    %394 = vmatprep.mubr.f32.mxu0 0.0
    %395 = vmatmul.mubr.f32.gmra.mxu0 %v98
    %v396 = vpop.f32.mrf.mxu0
    %v397 = vadd.f32 0.0, %v396
    %v398 = vpop.f32.mrf.mxu0
    %399 = vdwg.mxu0
    %402 = vrot.lane.b32.xlu0 %v167, 120
    %v403 = vpop.permute.xlu0 %402
    %404 = vrot.lane.b32.xlu0 %v172, 120
    %v405 = vpop.permute.xlu0 %404
    %vm406 = vcmask 64512
    %v407 = vsel %vm406, %v167, 0
    %v409 = vsel %vm406, %v172, 0
    %v411 = vsel %vm406, %v403, 0
    %v413 = vsel %vm406, %v405, 0
    %415 = vmatprep.subr.mxu0 0.0
    %416 = vmatpush1.xpose.msra.mxu0 0.0
    %417 = vmatprep.subr.mxu0 0.0
    %418 = vmatpush1.xpose.msra.mxu0 0.0
    %419 = vmatprep.subr.mxu0 0.0
    %420 = vmatpush1.xpose.msra.mxu0 0.0
    %421 = vmatprep.subr.mxu0 0.0
    %422 = vmatpush1.xpose.msra.mxu0 0.0
    %423 = vmatprep.subr.mxu0 0.0
    %424 = vmatpush1.xpose.msra.mxu0 0.0
    %425 = vmatprep.subr.mxu0 0.0
    %426 = vmatpush1.xpose.msra.mxu0 0.0
    %427 = vmatprep.subr.mxu0 0.0
    %428 = vmatpush1.xpose.msra.mxu0 0.0
    %429 = vmatprep.subr.mxu0 0.0
    %430 = vmatpush1.xpose.msra.mxu0 0.0
    %431 = vmatprep.subr.mxu0 0.0
    %432 = vmatpush1.xpose.msra.mxu0 0.0
    %433 = vmatprep.subr.mxu0 0.0
    %434 = vmatpush1.xpose.msra.mxu0 0.0
    %435 = vmatprep.subr.mxu0 0.0
    %436 = vmatpush1.xpose.msra.mxu0 0.0
    %437 = vmatprep.subr.mxu0 0.0
    %438 = vmatpush1.xpose.msra.mxu0 0.0
    %439 = vmatprep.subr.mxu0 0.0
    %440 = vmatpush1.xpose.msra.mxu0 0.0
    %441 = vmatprep.subr.mxu0 0.0
    %442 = vmatpush1.xpose.msra.mxu0 0.0
    %443 = vmatprep.subr.mxu0 0.0
    %444 = vmatpush1.xpose.msra.mxu0 %v413
    %445 = vmatprep.subr.mxu0 0.0
    %446 = vmatpush1.xpose.msra.mxu0 %v411
    %447 = vmatprep.subr.mxu0 0.0
    %448 = vmatpush2.xpose.msra.mxu0 0.0
    %449 = vmatprep.subr.mxu0 0.0
    %450 = vmatpush2.xpose.msra.mxu0 0.0
    %451 = vmatprep.subr.mxu0 0.0
    %452 = vmatpush2.xpose.msra.mxu0 0.0
    %453 = vmatprep.subr.mxu0 0.0
    %454 = vmatpush2.xpose.msra.mxu0 0.0
    %455 = vmatprep.subr.mxu0 0.0
    %456 = vmatpush2.xpose.msra.mxu0 0.0
    %457 = vmatprep.subr.mxu0 0.0
    %458 = vmatpush2.xpose.msra.mxu0 0.0
    %459 = vmatprep.subr.mxu0 0.0
    %460 = vmatpush2.xpose.msra.mxu0 0.0
    %461 = vmatprep.subr.mxu0 0.0
    %462 = vmatpush2.xpose.msra.mxu0 0.0
    %463 = vmatprep.subr.mxu0 0.0
    %464 = vmatpush2.xpose.msra.mxu0 0.0
    %465 = vmatprep.subr.mxu0 0.0
    %466 = vmatpush2.xpose.msra.mxu0 0.0
    %467 = vmatprep.subr.mxu0 0.0
    %468 = vmatpush2.xpose.msra.mxu0 0.0
    %469 = vmatprep.subr.mxu0 0.0
    %470 = vmatpush2.xpose.msra.mxu0 0.0
    %471 = vmatprep.subr.mxu0 0.0
    %472 = vmatpush2.xpose.msra.mxu0 0.0
    %473 = vmatprep.subr.mxu0 0.0
    %474 = vmatpush2.xpose.msra.mxu0 0.0
    %475 = vmatprep.subr.mxu0 0.0
    %476 = vmatpush2.xpose.msra.mxu0 0.0
    %477 = vmatprep.subr.mxu0 0.0
    %478 = vmatpush2.xpose.msra.mxu0 0.0
    %479 = vmatprep.mubr.f32.mxu0 0.0
    %480 = vmatmul.mubr.f32.gmra.mxu0 %v407
    %v481 = vpop.f32.mrf.mxu0
    %v482 = vadd.f32 0.0, %v481
    %v483 = vpop.f32.mrf.mxu0
    %484 = vmatprep.mubr.f32.mxu0 0.0
    %485 = vmatmul.mubr.f32.gmra.mxu0 %v409
    %v486 = vpop.f32.mrf.mxu0
    %v487 = vadd.f32 0.0, %v486
    %v488 = vpop.f32.mrf.mxu0
    %489 = vdwg.mxu0
    %492 = vrot.lane.b32.xlu0 %v242, 120
    %v493 = vpop.permute.xlu0 %492
    %494 = vrot.lane.b32.xlu0 %v247, 120
    %v495 = vpop.permute.xlu0 %494
    %v496 = vsel %vm406, %v242, 0
    %v498 = vsel %vm406, %v247, 0
    %v500 = vsel %vm406, %v493, 0
    %v502 = vsel %vm406, %v495, 0
    %504 = vmatprep.subr.mxu0 0.0
    %505 = vmatpush1.xpose.msra.mxu0 0.0
    %506 = vmatprep.subr.mxu0 0.0
    %507 = vmatpush1.xpose.msra.mxu0 0.0
    %508 = vmatprep.subr.mxu0 0.0
    %509 = vmatpush1.xpose.msra.mxu0 0.0
    %510 = vmatprep.subr.mxu0 0.0
    %511 = vmatpush1.xpose.msra.mxu0 0.0
    %512 = vmatprep.subr.mxu0 0.0
    %513 = vmatpush1.xpose.msra.mxu0 0.0
    %514 = vmatprep.subr.mxu0 0.0
    %515 = vmatpush1.xpose.msra.mxu0 0.0
    %516 = vmatprep.subr.mxu0 0.0
    %517 = vmatpush1.xpose.msra.mxu0 0.0
    %518 = vmatprep.subr.mxu0 0.0
    %519 = vmatpush1.xpose.msra.mxu0 0.0
    %520 = vmatprep.subr.mxu0 0.0
    %521 = vmatpush1.xpose.msra.mxu0 0.0
    %522 = vmatprep.subr.mxu0 0.0
    %523 = vmatpush1.xpose.msra.mxu0 0.0
    %524 = vmatprep.subr.mxu0 0.0
    %525 = vmatpush1.xpose.msra.mxu0 0.0
    %526 = vmatprep.subr.mxu0 0.0
    %527 = vmatpush1.xpose.msra.mxu0 0.0
    %528 = vmatprep.subr.mxu0 0.0
    %529 = vmatpush1.xpose.msra.mxu0 0.0
    %530 = vmatprep.subr.mxu0 0.0
    %531 = vmatpush1.xpose.msra.mxu0 0.0
    %532 = vmatprep.subr.mxu0 0.0
    %533 = vmatpush1.xpose.msra.mxu0 %v502
    %534 = vmatprep.subr.mxu0 0.0
    %535 = vmatpush1.xpose.msra.mxu0 %v500
    %536 = vmatprep.subr.mxu0 0.0
    %537 = vmatpush2.xpose.msra.mxu0 0.0
    %538 = vmatprep.subr.mxu0 0.0
    %539 = vmatpush2.xpose.msra.mxu0 0.0
    %540 = vmatprep.subr.mxu0 0.0
    %541 = vmatpush2.xpose.msra.mxu0 0.0
    %542 = vmatprep.subr.mxu0 0.0
    %543 = vmatpush2.xpose.msra.mxu0 0.0
    %544 = vmatprep.subr.mxu0 0.0
    %545 = vmatpush2.xpose.msra.mxu0 0.0
    %546 = vmatprep.subr.mxu0 0.0
    %547 = vmatpush2.xpose.msra.mxu0 0.0
    %548 = vmatprep.subr.mxu0 0.0
    %549 = vmatpush2.xpose.msra.mxu0 0.0
    %550 = vmatprep.subr.mxu0 0.0
    %551 = vmatpush2.xpose.msra.mxu0 0.0
    %552 = vmatprep.subr.mxu0 0.0
    %553 = vmatpush2.xpose.msra.mxu0 0.0
    %554 = vmatprep.subr.mxu0 0.0
    %555 = vmatpush2.xpose.msra.mxu0 0.0
    %556 = vmatprep.subr.mxu0 0.0
    %557 = vmatpush2.xpose.msra.mxu0 0.0
    %558 = vmatprep.subr.mxu0 0.0
    %559 = vmatpush2.xpose.msra.mxu0 0.0
    %560 = vmatprep.subr.mxu0 0.0
    %561 = vmatpush2.xpose.msra.mxu0 0.0
    %562 = vmatprep.subr.mxu0 0.0
    %563 = vmatpush2.xpose.msra.mxu0 0.0
    %564 = vmatprep.subr.mxu0 0.0
    %565 = vmatpush2.xpose.msra.mxu0 0.0
    %566 = vmatprep.subr.mxu0 0.0
    %567 = vmatpush2.xpose.msra.mxu0 0.0
    %568 = vmatprep.mubr.f32.mxu0 0.0
    %569 = vmatmul.mubr.f32.gmra.mxu0 %v496
    %v570 = vpop.f32.mrf.mxu0
    %v571 = vadd.f32 0.0, %v570
    %v572 = vpop.f32.mrf.mxu0
    %573 = vmatprep.mubr.f32.mxu0 0.0
    %574 = vmatmul.mubr.f32.gmra.mxu0 %v498
    %v575 = vpop.f32.mrf.mxu0
    %v576 = vadd.f32 0.0, %v575
    %v577 = vpop.f32.mrf.mxu0
    %578 = vdwg.mxu0
    %581 = vrot.lane.b32.xlu0 %v317, 120
    %v582 = vpop.permute.xlu0 %581
    %583 = vrot.lane.b32.xlu0 %v322, 120
    %v584 = vpop.permute.xlu0 %583
    %v585 = vsel %vm406, %v317, 0
    %v587 = vsel %vm406, %v322, 0
    %v589 = vsel %vm406, %v582, 0
    %v591 = vsel %vm406, %v584, 0
    %593 = vmatprep.subr.mxu0 0.0
    %594 = vmatpush1.xpose.msra.mxu0 0.0
    %595 = vmatprep.subr.mxu0 0.0
    %596 = vmatpush1.xpose.msra.mxu0 0.0
    %597 = vmatprep.subr.mxu0 0.0
    %598 = vmatpush1.xpose.msra.mxu0 0.0
    %599 = vmatprep.subr.mxu0 0.0
    %600 = vmatpush1.xpose.msra.mxu0 0.0
    %601 = vmatprep.subr.mxu0 0.0
    %602 = vmatpush1.xpose.msra.mxu0 0.0
    %603 = vmatprep.subr.mxu0 0.0
    %604 = vmatpush1.xpose.msra.mxu0 0.0
    %605 = vmatprep.subr.mxu0 0.0
    %606 = vmatpush1.xpose.msra.mxu0 0.0
    %607 = vmatprep.subr.mxu0 0.0
    %608 = vmatpush1.xpose.msra.mxu0 0.0
    %609 = vmatprep.subr.mxu0 0.0
    %610 = vmatpush1.xpose.msra.mxu0 0.0
    %611 = vmatprep.subr.mxu0 0.0
    %612 = vmatpush1.xpose.msra.mxu0 0.0
    %613 = vmatprep.subr.mxu0 0.0
    %614 = vmatpush1.xpose.msra.mxu0 0.0
    %615 = vmatprep.subr.mxu0 0.0
    %616 = vmatpush1.xpose.msra.mxu0 0.0
    %617 = vmatprep.subr.mxu0 0.0
    %618 = vmatpush1.xpose.msra.mxu0 0.0
    %619 = vmatprep.subr.mxu0 0.0
    %620 = vmatpush1.xpose.msra.mxu0 0.0
    %621 = vmatprep.subr.mxu0 0.0
    %622 = vmatpush1.xpose.msra.mxu0 %v591
    %623 = vmatprep.subr.mxu0 0.0
    %624 = vmatpush1.xpose.msra.mxu0 %v589
    %625 = vmatprep.subr.mxu0 0.0
    %626 = vmatpush2.xpose.msra.mxu0 0.0
    %627 = vmatprep.subr.mxu0 0.0
    %628 = vmatpush2.xpose.msra.mxu0 0.0
    %629 = vmatprep.subr.mxu0 0.0
    %630 = vmatpush2.xpose.msra.mxu0 0.0
    %631 = vmatprep.subr.mxu0 0.0
    %632 = vmatpush2.xpose.msra.mxu0 0.0
    %633 = vmatprep.subr.mxu0 0.0
    %634 = vmatpush2.xpose.msra.mxu0 0.0
    %635 = vmatprep.subr.mxu0 0.0
    %636 = vmatpush2.xpose.msra.mxu0 0.0
    %637 = vmatprep.subr.mxu0 0.0
    %638 = vmatpush2.xpose.msra.mxu0 0.0
    %639 = vmatprep.subr.mxu0 0.0
    %640 = vmatpush2.xpose.msra.mxu0 0.0
    %641 = vmatprep.subr.mxu0 0.0
    %642 = vmatpush2.xpose.msra.mxu0 0.0
    %643 = vmatprep.subr.mxu0 0.0
    %644 = vmatpush2.xpose.msra.mxu0 0.0
    %645 = vmatprep.subr.mxu0 0.0
    %646 = vmatpush2.xpose.msra.mxu0 0.0
    %647 = vmatprep.subr.mxu0 0.0
    %648 = vmatpush2.xpose.msra.mxu0 0.0
    %649 = vmatprep.subr.mxu0 0.0
    %650 = vmatpush2.xpose.msra.mxu0 0.0
    %651 = vmatprep.subr.mxu0 0.0
    %652 = vmatpush2.xpose.msra.mxu0 0.0
    %653 = vmatprep.subr.mxu0 0.0
    %654 = vmatpush2.xpose.msra.mxu0 0.0
    %655 = vmatprep.subr.mxu0 0.0
    %656 = vmatpush2.xpose.msra.mxu0 0.0
    %657 = vmatprep.mubr.f32.mxu0 0.0
    %658 = vmatmul.mubr.f32.gmra.mxu0 %v585
    %v659 = vpop.f32.mrf.mxu0
    %v660 = vadd.f32 0.0, %v659
    %v661 = vpop.f32.mrf.mxu0
    %662 = vmatprep.mubr.f32.mxu0 0.0
    %663 = vmatmul.mubr.f32.gmra.mxu0 %v587
    %v664 = vpop.f32.mrf.mxu0
    %v665 = vadd.f32 0.0, %v664
    %v666 = vpop.f32.mrf.mxu0
    %667 = vdwg.mxu0
    %670 = vrot.lane.b32.xlu0 %v392, 120
    %v671 = vpop.permute.xlu0 %670
    %672 = vrot.lane.b32.xlu0 %v397, 120
    %v673 = vpop.permute.xlu0 %672
    %v674 = vsel %vm406, %v392, 0
    %v676 = vsel %vm406, %v397, 0
    %v678 = vsel %vm406, %v671, 0
    %v680 = vsel %vm406, %v673, 0
    %682 = vmatprep.subr.mxu0 0.0
    %683 = vmatpush1.xpose.msra.mxu0 0.0
    %684 = vmatprep.subr.mxu0 0.0
    %685 = vmatpush1.xpose.msra.mxu0 0.0
    %686 = vmatprep.subr.mxu0 0.0
    %687 = vmatpush1.xpose.msra.mxu0 0.0
    %688 = vmatprep.subr.mxu0 0.0
    %689 = vmatpush1.xpose.msra.mxu0 0.0
    %690 = vmatprep.subr.mxu0 0.0
    %691 = vmatpush1.xpose.msra.mxu0 0.0
    %692 = vmatprep.subr.mxu0 0.0
    %693 = vmatpush1.xpose.msra.mxu0 0.0
    %694 = vmatprep.subr.mxu0 0.0
    %695 = vmatpush1.xpose.msra.mxu0 0.0
    %696 = vmatprep.subr.mxu0 0.0
    %697 = vmatpush1.xpose.msra.mxu0 0.0
    %698 = vmatprep.subr.mxu0 0.0
    %699 = vmatpush1.xpose.msra.mxu0 0.0
    %700 = vmatprep.subr.mxu0 0.0
    %701 = vmatpush1.xpose.msra.mxu0 0.0
    %702 = vmatprep.subr.mxu0 0.0
    %703 = vmatpush1.xpose.msra.mxu0 0.0
    %704 = vmatprep.subr.mxu0 0.0
    %705 = vmatpush1.xpose.msra.mxu0 0.0
    %706 = vmatprep.subr.mxu0 0.0
    %707 = vmatpush1.xpose.msra.mxu0 0.0
    %708 = vmatprep.subr.mxu0 0.0
    %709 = vmatpush1.xpose.msra.mxu0 0.0
    %710 = vmatprep.subr.mxu0 0.0
    %711 = vmatpush1.xpose.msra.mxu0 %v680
    %712 = vmatprep.subr.mxu0 0.0
    %713 = vmatpush1.xpose.msra.mxu0 %v678
    %714 = vmatprep.subr.mxu0 0.0
    %715 = vmatpush2.xpose.msra.mxu0 0.0
    %716 = vmatprep.subr.mxu0 0.0
    %717 = vmatpush2.xpose.msra.mxu0 0.0
    %718 = vmatprep.subr.mxu0 0.0
    %719 = vmatpush2.xpose.msra.mxu0 0.0
    %720 = vmatprep.subr.mxu0 0.0
    %721 = vmatpush2.xpose.msra.mxu0 0.0
    %722 = vmatprep.subr.mxu0 0.0
    %723 = vmatpush2.xpose.msra.mxu0 0.0
    %724 = vmatprep.subr.mxu0 0.0
    %725 = vmatpush2.xpose.msra.mxu0 0.0
    %726 = vmatprep.subr.mxu0 0.0
    %727 = vmatpush2.xpose.msra.mxu0 0.0
    %728 = vmatprep.subr.mxu0 0.0
    %729 = vmatpush2.xpose.msra.mxu0 0.0
    %730 = vmatprep.subr.mxu0 0.0
    %731 = vmatpush2.xpose.msra.mxu0 0.0
    %732 = vmatprep.subr.mxu0 0.0
    %733 = vmatpush2.xpose.msra.mxu0 0.0
    %734 = vmatprep.subr.mxu0 0.0
    %735 = vmatpush2.xpose.msra.mxu0 0.0
    %736 = vmatprep.subr.mxu0 0.0
    %737 = vmatpush2.xpose.msra.mxu0 0.0
    %738 = vmatprep.subr.mxu0 0.0
    %739 = vmatpush2.xpose.msra.mxu0 0.0
    %740 = vmatprep.subr.mxu0 0.0
    %741 = vmatpush2.xpose.msra.mxu0 0.0
    %742 = vmatprep.subr.mxu0 0.0
    %743 = vmatpush2.xpose.msra.mxu0 0.0
    %744 = vmatprep.subr.mxu0 0.0
    %745 = vmatpush2.xpose.msra.mxu0 0.0
    %746 = vmatprep.mubr.f32.mxu0 0.0
    %747 = vmatmul.mubr.f32.gmra.mxu0 %v674
    %v748 = vpop.f32.mrf.mxu0
    %v749 = vadd.f32 0.0, %v748
    %v750 = vpop.f32.mrf.mxu0
    %751 = vmatprep.mubr.f32.mxu0 0.0
    %752 = vmatmul.mubr.f32.gmra.mxu0 %v676
    %v753 = vpop.f32.mrf.mxu0
    %v754 = vadd.f32 0.0, %v753
    %v755 = vpop.f32.mrf.mxu0
    %756 = vdwg.mxu0
    %v757 = vmul.f32 %v482, 0.35355338
    %v758 = vmul.f32 %v487, 0.35355338
    %v759 = vmul.f32 %v571, 0.35355338
    %v760 = vmul.f32 %v576, 0.35355338
    %v761 = vmul.f32 %v660, 0.35355338
    %v762 = vmul.f32 %v665, 0.35355338
    %v763 = vmul.f32 %v749, 0.35355338
    %v764 = vmul.f32 %v754, 0.35355338
    %v765 = vadd.f32 %v757, %v35
    %v766 = vadd.f32 %v758, %v36
    %v767 = vadd.f32 %v759, %v35
    %v768 = vadd.f32 %v760, %v36
    %v769 = vadd.f32 %v761, %v35
    %v770 = vadd.f32 %v762, %v36
    %v771 = vadd.f32 %v763, %v35
    %v772 = vadd.f32 %v764, %v36
    %vm773 = vcmask 130048
    %v774 = vsel %vm773, %v765, -inf
    %775 = vmax.xlane.f32.xlu0 %v774
    %v776 = vpop.xlane.xlu0 %775
    %v777 = vsel %vm773, %v766, -inf
    %778 = vmax.xlane.f32.xlu0 %v777
    %v779 = vpop.xlane.xlu0 %778
    %v780 = vsel %vm773, %v767, -inf
    %781 = vmax.xlane.f32.xlu0 %v780
    %v782 = vpop.xlane.xlu0 %781
    %v783 = vsel %vm773, %v768, -inf
    %784 = vmax.xlane.f32.xlu0 %v783
    %v785 = vpop.xlane.xlu0 %784
    %v786 = vsel %vm773, %v769, -inf
    %787 = vmax.xlane.f32.xlu0 %v786
    %v788 = vpop.xlane.xlu0 %787
    %v789 = vsel %vm773, %v770, -inf
    %790 = vmax.xlane.f32.xlu0 %v789
    %v791 = vpop.xlane.xlu0 %790
    %v792 = vsel %vm773, %v771, -inf
    %793 = vmax.xlane.f32.xlu0 %v792
    %v794 = vpop.xlane.xlu0 %793
    %v795 = vsel %vm773, %v772, -inf
    %796 = vmax.xlane.f32.xlu0 %v795
    %v797 = vpop.xlane.xlu0 %796
    %v798 = vsub.f32 %v765, %v776
    %v799 = vsub.f32 %v766, %v779
    %v800 = vsub.f32 %v767, %v782
    %v801 = vsub.f32 %v768, %v785
    %v802 = vsub.f32 %v769, %v788
    %v803 = vsub.f32 %v770, %v791
    %v804 = vsub.f32 %v771, %v794
    %v805 = vsub.f32 %v772, %v797
    %v806 = vmul.f32 %v798, 1.442695
    %v807 = vpow.pop %v806
    %v808 = vmul.f32 %v799, 1.442695
    %v809 = vpow.pop %v808
    %v810 = vmul.f32 %v800, 1.442695
    %v811 = vpow.pop %v810
    %v812 = vmul.f32 %v801, 1.442695
    %v813 = vpow.pop %v812
    %v814 = vmul.f32 %v802, 1.442695
    %v815 = vpow.pop %v814
    %v816 = vmul.f32 %v803, 1.442695
    %v817 = vpow.pop %v816
    %v818 = vmul.f32 %v804, 1.442695
    %v819 = vpow.pop %v818
    %v820 = vmul.f32 %v805, 1.442695
    %v821 = vpow.pop %v820
    %v822 = vsel %vm773, %v807, 0.0
    %823 = vadd.xlane.f32.xlu0 %v822
    %v824 = vpop.xlane.xlu0 %823
    %v825 = vsel %vm773, %v809, 0.0
    %826 = vadd.xlane.f32.xlu0 %v825
    %v827 = vpop.xlane.xlu0 %826
    %v828 = vsel %vm773, %v811, 0.0
    %829 = vadd.xlane.f32.xlu0 %v828
    %v830 = vpop.xlane.xlu0 %829
    %v831 = vsel %vm773, %v813, 0.0
    %832 = vadd.xlane.f32.xlu0 %v831
    %v833 = vpop.xlane.xlu0 %832
    %v834 = vsel %vm773, %v815, 0.0
    %835 = vadd.xlane.f32.xlu0 %v834
    %v836 = vpop.xlane.xlu0 %835
    %v837 = vsel %vm773, %v817, 0.0
    %838 = vadd.xlane.f32.xlu0 %v837
    %v839 = vpop.xlane.xlu0 %838
    %v840 = vsel %vm773, %v819, 0.0
    %841 = vadd.xlane.f32.xlu0 %v840
    %v842 = vpop.xlane.xlu0 %841
    %v843 = vsel %vm773, %v821, 0.0
    %844 = vadd.xlane.f32.xlu0 %v843
    %v845 = vpop.xlane.xlu0 %844
    %v846 = vrcp.pop %v824
    %v847 = vmul.f32 %v807, %v846
    %v848 = vrcp.pop %v827
    %v849 = vmul.f32 %v809, %v848
    %v850 = vrcp.pop %v830
    %v851 = vmul.f32 %v811, %v850
    %v852 = vrcp.pop %v833
    %v853 = vmul.f32 %v813, %v852
    %v854 = vrcp.pop %v836
    %v855 = vmul.f32 %v815, %v854
    %v856 = vrcp.pop %v839
    %v857 = vmul.f32 %v817, %v856
    %v858 = vrcp.pop %v842
    %v859 = vmul.f32 %v819, %v858
    %v860 = vrcp.pop %v845
    %v861 = vmul.f32 %v821, %v860
    %862 = vrot.lane.b32.xlu0 %v167, 112
    %v863 = vpop.permute.xlu0 %862
    %864 = vrot.lane.b32.xlu0 %v172, 112
    %v865 = vpop.permute.xlu0 %864
    %v869 = vsel %vm773, %v847, 0
    %v872 = vsel %vm773, %v849, 0
    %874 = vmatprep.subr.mxu0 0.0
    %875 = vmatpush1.msra.mxu0 0.0
    %876 = vmatprep.subr.mxu0 0.0
    %877 = vmatpush1.msra.mxu0 0.0
    %878 = vmatprep.subr.mxu0 0.0
    %879 = vmatpush1.msra.mxu0 0.0
    %880 = vmatprep.subr.mxu0 0.0
    %881 = vmatpush1.msra.mxu0 0.0
    %882 = vmatprep.subr.mxu0 0.0
    %883 = vmatpush1.msra.mxu0 0.0
    %884 = vmatprep.subr.mxu0 0.0
    %885 = vmatpush1.msra.mxu0 0.0
    %886 = vmatprep.subr.mxu0 0.0
    %887 = vmatpush1.msra.mxu0 0.0
    %888 = vmatprep.subr.mxu0 0.0
    %889 = vmatpush1.msra.mxu0 0.0
    %890 = vmatprep.subr.mxu0 0.0
    %891 = vmatpush1.msra.mxu0 0.0
    %892 = vmatprep.subr.mxu0 0.0
    %893 = vmatpush1.msra.mxu0 0.0
    %894 = vmatprep.subr.mxu0 0.0
    %895 = vmatpush1.msra.mxu0 0.0
    %896 = vmatprep.subr.mxu0 0.0
    %897 = vmatpush1.msra.mxu0 0.0
    %898 = vmatprep.subr.mxu0 0.0
    %899 = vmatpush1.msra.mxu0 0.0
    %900 = vmatprep.subr.mxu0 0.0
    %901 = vmatpush1.msra.mxu0 0.0
    %902 = vmatprep.subr.mxu0 0.0
    %903 = vmatpush1.msra.mxu0 %v865
    %904 = vmatprep.subr.mxu0 0.0
    %905 = vmatpush1.msra.mxu0 %v863
    %906 = vmatprep.subr.mxu0 0.0
    %907 = vmatpush2.msra.mxu0 0.0
    %908 = vmatprep.subr.mxu0 0.0
    %909 = vmatpush2.msra.mxu0 0.0
    %910 = vmatprep.subr.mxu0 0.0
    %911 = vmatpush2.msra.mxu0 0.0
    %912 = vmatprep.subr.mxu0 0.0
    %913 = vmatpush2.msra.mxu0 0.0
    %914 = vmatprep.subr.mxu0 0.0
    %915 = vmatpush2.msra.mxu0 0.0
    %916 = vmatprep.subr.mxu0 0.0
    %917 = vmatpush2.msra.mxu0 0.0
    %918 = vmatprep.subr.mxu0 0.0
    %919 = vmatpush2.msra.mxu0 0.0
    %920 = vmatprep.subr.mxu0 0.0
    %921 = vmatpush2.msra.mxu0 0.0
    %922 = vmatprep.subr.mxu0 0.0
    %923 = vmatpush2.msra.mxu0 0.0
    %924 = vmatprep.subr.mxu0 0.0
    %925 = vmatpush2.msra.mxu0 0.0
    %926 = vmatprep.subr.mxu0 0.0
    %927 = vmatpush2.msra.mxu0 0.0
    %928 = vmatprep.subr.mxu0 0.0
    %929 = vmatpush2.msra.mxu0 0.0
    %930 = vmatprep.subr.mxu0 0.0
    %931 = vmatpush2.msra.mxu0 0.0
    %932 = vmatprep.subr.mxu0 0.0
    %933 = vmatpush2.msra.mxu0 0.0
    %934 = vmatprep.subr.mxu0 0.0
    %935 = vmatpush2.msra.mxu0 0.0
    %936 = vmatprep.subr.mxu0 0.0
    %937 = vmatpush2.msra.mxu0 0.0
    %938 = vmatprep.mubr.f32.mxu0 0.0
    %939 = vmatmul.mubr.f32.gmra.mxu0 %v869
    %v940 = vpop.f32.mrf.mxu0
    %v941 = vadd.f32 0.0, %v940
    %v942 = vpop.f32.mrf.mxu0
    %943 = vmatprep.mubr.f32.mxu0 0.0
    %944 = vmatmul.mubr.f32.gmra.mxu0 %v872
    %v945 = vpop.f32.mrf.mxu0
    %v946 = vadd.f32 0.0, %v945
    %v947 = vpop.f32.mrf.mxu0
    %948 = vdwg.mxu0
    %949 = vrot.lane.b32.xlu0 %v242, 112
    %v950 = vpop.permute.xlu0 %949
    %951 = vrot.lane.b32.xlu0 %v247, 112
    %v952 = vpop.permute.xlu0 %951
    %v956 = vsel %vm773, %v851, 0
    %v959 = vsel %vm773, %v853, 0
    %961 = vmatprep.subr.mxu0 0.0
    %962 = vmatpush1.msra.mxu0 0.0
    %963 = vmatprep.subr.mxu0 0.0
    %964 = vmatpush1.msra.mxu0 0.0
    %965 = vmatprep.subr.mxu0 0.0
    %966 = vmatpush1.msra.mxu0 0.0
    %967 = vmatprep.subr.mxu0 0.0
    %968 = vmatpush1.msra.mxu0 0.0
    %969 = vmatprep.subr.mxu0 0.0
    %970 = vmatpush1.msra.mxu0 0.0
    %971 = vmatprep.subr.mxu0 0.0
    %972 = vmatpush1.msra.mxu0 0.0
    %973 = vmatprep.subr.mxu0 0.0
    %974 = vmatpush1.msra.mxu0 0.0
    %975 = vmatprep.subr.mxu0 0.0
    %976 = vmatpush1.msra.mxu0 0.0
    %977 = vmatprep.subr.mxu0 0.0
    %978 = vmatpush1.msra.mxu0 0.0
    %979 = vmatprep.subr.mxu0 0.0
    %980 = vmatpush1.msra.mxu0 0.0
    %981 = vmatprep.subr.mxu0 0.0
    %982 = vmatpush1.msra.mxu0 0.0
    %983 = vmatprep.subr.mxu0 0.0
    %984 = vmatpush1.msra.mxu0 0.0
    %985 = vmatprep.subr.mxu0 0.0
    %986 = vmatpush1.msra.mxu0 0.0
    %987 = vmatprep.subr.mxu0 0.0
    %988 = vmatpush1.msra.mxu0 0.0
    %989 = vmatprep.subr.mxu0 0.0
    %990 = vmatpush1.msra.mxu0 %v952
    %991 = vmatprep.subr.mxu0 0.0
    %992 = vmatpush1.msra.mxu0 %v950
    %993 = vmatprep.subr.mxu0 0.0
    %994 = vmatpush2.msra.mxu0 0.0
    %995 = vmatprep.subr.mxu0 0.0
    %996 = vmatpush2.msra.mxu0 0.0
    %997 = vmatprep.subr.mxu0 0.0
    %998 = vmatpush2.msra.mxu0 0.0
    %999 = vmatprep.subr.mxu0 0.0
    %1000 = vmatpush2.msra.mxu0 0.0
    %1001 = vmatprep.subr.mxu0 0.0
    %1002 = vmatpush2.msra.mxu0 0.0
    %1003 = vmatprep.subr.mxu0 0.0
    %1004 = vmatpush2.msra.mxu0 0.0
    %1005 = vmatprep.subr.mxu0 0.0
    %1006 = vmatpush2.msra.mxu0 0.0
    %1007 = vmatprep.subr.mxu0 0.0
    %1008 = vmatpush2.msra.mxu0 0.0
    %1009 = vmatprep.subr.mxu0 0.0
    %1010 = vmatpush2.msra.mxu0 0.0
    %1011 = vmatprep.subr.mxu0 0.0
    %1012 = vmatpush2.msra.mxu0 0.0
    %1013 = vmatprep.subr.mxu0 0.0
    %1014 = vmatpush2.msra.mxu0 0.0
    %1015 = vmatprep.subr.mxu0 0.0
    %1016 = vmatpush2.msra.mxu0 0.0
    %1017 = vmatprep.subr.mxu0 0.0
    %1018 = vmatpush2.msra.mxu0 0.0
    %1019 = vmatprep.subr.mxu0 0.0
    %1020 = vmatpush2.msra.mxu0 0.0
    %1021 = vmatprep.subr.mxu0 0.0
    %1022 = vmatpush2.msra.mxu0 0.0
    %1023 = vmatprep.subr.mxu0 0.0
    %1024 = vmatpush2.msra.mxu0 0.0
    %1025 = vmatprep.mubr.f32.mxu0 0.0
    %1026 = vmatmul.mubr.f32.gmra.mxu0 %v956
    %v1027 = vpop.f32.mrf.mxu0
    %v1028 = vadd.f32 0.0, %v1027
    %v1029 = vpop.f32.mrf.mxu0
    %1030 = vmatprep.mubr.f32.mxu0 0.0
    %1031 = vmatmul.mubr.f32.gmra.mxu0 %v959
    %v1032 = vpop.f32.mrf.mxu0
    %v1033 = vadd.f32 0.0, %v1032
    %v1034 = vpop.f32.mrf.mxu0
    %1035 = vdwg.mxu0
    %1036 = vrot.lane.b32.xlu0 %v317, 112
    %v1037 = vpop.permute.xlu0 %1036
    %1038 = vrot.lane.b32.xlu0 %v322, 112
    %v1039 = vpop.permute.xlu0 %1038
    %v1043 = vsel %vm773, %v855, 0
    %v1046 = vsel %vm773, %v857, 0
    %1048 = vmatprep.subr.mxu0 0.0
    %1049 = vmatpush1.msra.mxu0 0.0
    %1050 = vmatprep.subr.mxu0 0.0
    %1051 = vmatpush1.msra.mxu0 0.0
    %1052 = vmatprep.subr.mxu0 0.0
    %1053 = vmatpush1.msra.mxu0 0.0
    %1054 = vmatprep.subr.mxu0 0.0
    %1055 = vmatpush1.msra.mxu0 0.0
    %1056 = vmatprep.subr.mxu0 0.0
    %1057 = vmatpush1.msra.mxu0 0.0
    %1058 = vmatprep.subr.mxu0 0.0
    %1059 = vmatpush1.msra.mxu0 0.0
    %1060 = vmatprep.subr.mxu0 0.0
    %1061 = vmatpush1.msra.mxu0 0.0
    %1062 = vmatprep.subr.mxu0 0.0
    %1063 = vmatpush1.msra.mxu0 0.0
    %1064 = vmatprep.subr.mxu0 0.0
    %1065 = vmatpush1.msra.mxu0 0.0
    %1066 = vmatprep.subr.mxu0 0.0
    %1067 = vmatpush1.msra.mxu0 0.0
    %1068 = vmatprep.subr.mxu0 0.0
    %1069 = vmatpush1.msra.mxu0 0.0
    %1070 = vmatprep.subr.mxu0 0.0
    %1071 = vmatpush1.msra.mxu0 0.0
    %1072 = vmatprep.subr.mxu0 0.0
    %1073 = vmatpush1.msra.mxu0 0.0
    %1074 = vmatprep.subr.mxu0 0.0
    %1075 = vmatpush1.msra.mxu0 0.0
    %1076 = vmatprep.subr.mxu0 0.0
    %1077 = vmatpush1.msra.mxu0 %v1039
    %1078 = vmatprep.subr.mxu0 0.0
    %1079 = vmatpush1.msra.mxu0 %v1037
    %1080 = vmatprep.subr.mxu0 0.0
    %1081 = vmatpush2.msra.mxu0 0.0
    %1082 = vmatprep.subr.mxu0 0.0
    %1083 = vmatpush2.msra.mxu0 0.0
    %1084 = vmatprep.subr.mxu0 0.0
    %1085 = vmatpush2.msra.mxu0 0.0
    %1086 = vmatprep.subr.mxu0 0.0
    %1087 = vmatpush2.msra.mxu0 0.0
    %1088 = vmatprep.subr.mxu0 0.0
    %1089 = vmatpush2.msra.mxu0 0.0
    %1090 = vmatprep.subr.mxu0 0.0
    %1091 = vmatpush2.msra.mxu0 0.0
    %1092 = vmatprep.subr.mxu0 0.0
    %1093 = vmatpush2.msra.mxu0 0.0
    %1094 = vmatprep.subr.mxu0 0.0
    %1095 = vmatpush2.msra.mxu0 0.0
    %1096 = vmatprep.subr.mxu0 0.0
    %1097 = vmatpush2.msra.mxu0 0.0
    %1098 = vmatprep.subr.mxu0 0.0
    %1099 = vmatpush2.msra.mxu0 0.0
    %1100 = vmatprep.subr.mxu0 0.0
    %1101 = vmatpush2.msra.mxu0 0.0
    %1102 = vmatprep.subr.mxu0 0.0
    %1103 = vmatpush2.msra.mxu0 0.0
    %1104 = vmatprep.subr.mxu0 0.0
    %1105 = vmatpush2.msra.mxu0 0.0
    %1106 = vmatprep.subr.mxu0 0.0
    %1107 = vmatpush2.msra.mxu0 0.0
    %1108 = vmatprep.subr.mxu0 0.0
    %1109 = vmatpush2.msra.mxu0 0.0
    %1110 = vmatprep.subr.mxu0 0.0
    %1111 = vmatpush2.msra.mxu0 0.0
    %1112 = vmatprep.mubr.f32.mxu0 0.0
    %1113 = vmatmul.mubr.f32.gmra.mxu0 %v1043
    %v1114 = vpop.f32.mrf.mxu0
    %v1115 = vadd.f32 0.0, %v1114
    %v1116 = vpop.f32.mrf.mxu0
    %1117 = vmatprep.mubr.f32.mxu0 0.0
    %1118 = vmatmul.mubr.f32.gmra.mxu0 %v1046
    %v1119 = vpop.f32.mrf.mxu0
    %v1120 = vadd.f32 0.0, %v1119
    %v1121 = vpop.f32.mrf.mxu0
    %1122 = vdwg.mxu0
    %1123 = vrot.lane.b32.xlu0 %v392, 112
    %v1124 = vpop.permute.xlu0 %1123
    %1125 = vrot.lane.b32.xlu0 %v397, 112
    %v1126 = vpop.permute.xlu0 %1125
    %v1130 = vsel %vm773, %v859, 0
    %v1133 = vsel %vm773, %v861, 0
    %1135 = vmatprep.subr.mxu0 0.0
    %1136 = vmatpush1.msra.mxu0 0.0
    %1137 = vmatprep.subr.mxu0 0.0
    %1138 = vmatpush1.msra.mxu0 0.0
    %1139 = vmatprep.subr.mxu0 0.0
    %1140 = vmatpush1.msra.mxu0 0.0
    %1141 = vmatprep.subr.mxu0 0.0
    %1142 = vmatpush1.msra.mxu0 0.0
    %1143 = vmatprep.subr.mxu0 0.0
    %1144 = vmatpush1.msra.mxu0 0.0
    %1145 = vmatprep.subr.mxu0 0.0
    %1146 = vmatpush1.msra.mxu0 0.0
    %1147 = vmatprep.subr.mxu0 0.0
    %1148 = vmatpush1.msra.mxu0 0.0
    %1149 = vmatprep.subr.mxu0 0.0
    %1150 = vmatpush1.msra.mxu0 0.0
    %1151 = vmatprep.subr.mxu0 0.0
    %1152 = vmatpush1.msra.mxu0 0.0
    %1153 = vmatprep.subr.mxu0 0.0
    %1154 = vmatpush1.msra.mxu0 0.0
    %1155 = vmatprep.subr.mxu0 0.0
    %1156 = vmatpush1.msra.mxu0 0.0
    %1157 = vmatprep.subr.mxu0 0.0
    %1158 = vmatpush1.msra.mxu0 0.0
    %1159 = vmatprep.subr.mxu0 0.0
    %1160 = vmatpush1.msra.mxu0 0.0
    %1161 = vmatprep.subr.mxu0 0.0
    %1162 = vmatpush1.msra.mxu0 0.0
    %1163 = vmatprep.subr.mxu0 0.0
    %1164 = vmatpush1.msra.mxu0 %v1126
    %1165 = vmatprep.subr.mxu0 0.0
    %1166 = vmatpush1.msra.mxu0 %v1124
    %1167 = vmatprep.subr.mxu0 0.0
    %1168 = vmatpush2.msra.mxu0 0.0
    %1169 = vmatprep.subr.mxu0 0.0
    %1170 = vmatpush2.msra.mxu0 0.0
    %1171 = vmatprep.subr.mxu0 0.0
    %1172 = vmatpush2.msra.mxu0 0.0
    %1173 = vmatprep.subr.mxu0 0.0
    %1174 = vmatpush2.msra.mxu0 0.0
    %1175 = vmatprep.subr.mxu0 0.0
    %1176 = vmatpush2.msra.mxu0 0.0
    %1177 = vmatprep.subr.mxu0 0.0
    %1178 = vmatpush2.msra.mxu0 0.0
    %1179 = vmatprep.subr.mxu0 0.0
    %1180 = vmatpush2.msra.mxu0 0.0
    %1181 = vmatprep.subr.mxu0 0.0
    %1182 = vmatpush2.msra.mxu0 0.0
    %1183 = vmatprep.subr.mxu0 0.0
    %1184 = vmatpush2.msra.mxu0 0.0
    %1185 = vmatprep.subr.mxu0 0.0
    %1186 = vmatpush2.msra.mxu0 0.0
    %1187 = vmatprep.subr.mxu0 0.0
    %1188 = vmatpush2.msra.mxu0 0.0
    %1189 = vmatprep.subr.mxu0 0.0
    %1190 = vmatpush2.msra.mxu0 0.0
    %1191 = vmatprep.subr.mxu0 0.0
    %1192 = vmatpush2.msra.mxu0 0.0
    %1193 = vmatprep.subr.mxu0 0.0
    %1194 = vmatpush2.msra.mxu0 0.0
    %1195 = vmatprep.subr.mxu0 0.0
    %1196 = vmatpush2.msra.mxu0 0.0
    %1197 = vmatprep.subr.mxu0 0.0
    %1198 = vmatpush2.msra.mxu0 0.0
    %1199 = vmatprep.mubr.f32.mxu0 0.0
    %1200 = vmatmul.mubr.f32.gmra.mxu0 %v1130
    %v1201 = vpop.f32.mrf.mxu0
    %v1202 = vadd.f32 0.0, %v1201
    %v1203 = vpop.f32.mrf.mxu0
    %1204 = vmatprep.mubr.f32.mxu0 0.0
    %1205 = vmatmul.mubr.f32.gmra.mxu0 %v1133
    %v1206 = vpop.f32.mrf.mxu0
    %v1207 = vadd.f32 0.0, %v1206
    %v1208 = vpop.f32.mrf.mxu0
    %1209 = vdwg.mxu0
    %v1210 = vld [vmem:[%s3] sm:$0xff]
    %v1211 = vld [vmem:[%s3 + $0x8] sm:$0xff]
    %v1212 = vld [vmem:[%s3 + $0x10] sm:$0xff]
    %v1213 = vld [vmem:[%s3 + $0x18] sm:$0xff]
    %v1215 = vsel %vm406, %v941, 0
    %v1218 = vsel %vm406, %v946, 0
    %1220 = vmatprep.subr.mxu0 0.0
    %1221 = vmatpush1.msra.mxu0 0.0
    %1222 = vmatprep.subr.mxu0 0.0
    %1223 = vmatpush1.msra.mxu0 0.0
    %1224 = vmatprep.subr.mxu0 0.0
    %1225 = vmatpush1.msra.mxu0 0.0
    %1226 = vmatprep.subr.mxu0 0.0
    %1227 = vmatpush1.msra.mxu0 0.0
    %1228 = vmatprep.subr.mxu0 0.0
    %1229 = vmatpush1.msra.mxu0 0.0
    %1230 = vmatprep.subr.mxu0 0.0
    %1231 = vmatpush1.msra.mxu0 0.0
    %1232 = vmatprep.subr.mxu0 0.0
    %1233 = vmatpush1.msra.mxu0 0.0
    %1234 = vmatprep.subr.mxu0 0.0
    %1235 = vmatpush1.msra.mxu0 0.0
    %1236 = vmatprep.subr.mxu0 0.0
    %1237 = vmatpush1.msra.mxu0 0.0
    %1238 = vmatprep.subr.mxu0 0.0
    %1239 = vmatpush1.msra.mxu0 0.0
    %1240 = vmatprep.subr.mxu0 0.0
    %1241 = vmatpush1.msra.mxu0 0.0
    %1242 = vmatprep.subr.mxu0 0.0
    %1243 = vmatpush1.msra.mxu0 0.0
    %1244 = vmatprep.subr.mxu0 0.0
    %1245 = vmatpush1.msra.mxu0 0.0
    %1246 = vmatprep.subr.mxu0 0.0
    %1247 = vmatpush1.msra.mxu0 0.0
    %1248 = vmatprep.subr.mxu0 0.0
    %1249 = vmatpush1.msra.mxu0 0.0
    %1250 = vmatprep.subr.mxu0 0.0
    %1251 = vmatpush1.msra.mxu0 %v1210
    %1252 = vmatprep.subr.mxu0 0.0
    %1253 = vmatpush2.msra.mxu0 0.0
    %1254 = vmatprep.subr.mxu0 0.0
    %1255 = vmatpush2.msra.mxu0 0.0
    %1256 = vmatprep.subr.mxu0 0.0
    %1257 = vmatpush2.msra.mxu0 0.0
    %1258 = vmatprep.subr.mxu0 0.0
    %1259 = vmatpush2.msra.mxu0 0.0
    %1260 = vmatprep.subr.mxu0 0.0
    %1261 = vmatpush2.msra.mxu0 0.0
    %1262 = vmatprep.subr.mxu0 0.0
    %1263 = vmatpush2.msra.mxu0 0.0
    %1264 = vmatprep.subr.mxu0 0.0
    %1265 = vmatpush2.msra.mxu0 0.0
    %1266 = vmatprep.subr.mxu0 0.0
    %1267 = vmatpush2.msra.mxu0 0.0
    %1268 = vmatprep.subr.mxu0 0.0
    %1269 = vmatpush2.msra.mxu0 0.0
    %1270 = vmatprep.subr.mxu0 0.0
    %1271 = vmatpush2.msra.mxu0 0.0
    %1272 = vmatprep.subr.mxu0 0.0
    %1273 = vmatpush2.msra.mxu0 0.0
    %1274 = vmatprep.subr.mxu0 0.0
    %1275 = vmatpush2.msra.mxu0 0.0
    %1276 = vmatprep.subr.mxu0 0.0
    %1277 = vmatpush2.msra.mxu0 0.0
    %1278 = vmatprep.subr.mxu0 0.0
    %1279 = vmatpush2.msra.mxu0 0.0
    %1280 = vmatprep.subr.mxu0 0.0
    %1281 = vmatpush2.msra.mxu0 0.0
    %1282 = vmatprep.subr.mxu0 0.0
    %1283 = vmatpush2.msra.mxu0 0.0
    %1284 = vmatprep.mubr.f32.mxu0 0.0
    %1285 = vmatmul.mubr.f32.gmra.mxu0 %v1215
    %v1286 = vpop.f32.mrf.mxu0
    %v1287 = vadd.f32 0.0, %v1286
    %v1288 = vpop.f32.mrf.mxu0
    %1289 = vmatprep.mubr.f32.mxu0 0.0
    %1290 = vmatmul.mubr.f32.gmra.mxu0 %v1218
    %v1291 = vpop.f32.mrf.mxu0
    %v1292 = vadd.f32 0.0, %v1291
    %v1293 = vpop.f32.mrf.mxu0
    %1294 = vdwg.mxu0
    %v1296 = vsel %vm406, %v1028, 0
    %v1299 = vsel %vm406, %v1033, 0
    %1301 = vmatprep.subr.mxu0 0.0
    %1302 = vmatpush1.msra.mxu0 0.0
    %1303 = vmatprep.subr.mxu0 0.0
    %1304 = vmatpush1.msra.mxu0 0.0
    %1305 = vmatprep.subr.mxu0 0.0
    %1306 = vmatpush1.msra.mxu0 0.0
    %1307 = vmatprep.subr.mxu0 0.0
    %1308 = vmatpush1.msra.mxu0 0.0
    %1309 = vmatprep.subr.mxu0 0.0
    %1310 = vmatpush1.msra.mxu0 0.0
    %1311 = vmatprep.subr.mxu0 0.0
    %1312 = vmatpush1.msra.mxu0 0.0
    %1313 = vmatprep.subr.mxu0 0.0
    %1314 = vmatpush1.msra.mxu0 0.0
    %1315 = vmatprep.subr.mxu0 0.0
    %1316 = vmatpush1.msra.mxu0 0.0
    %1317 = vmatprep.subr.mxu0 0.0
    %1318 = vmatpush1.msra.mxu0 0.0
    %1319 = vmatprep.subr.mxu0 0.0
    %1320 = vmatpush1.msra.mxu0 0.0
    %1321 = vmatprep.subr.mxu0 0.0
    %1322 = vmatpush1.msra.mxu0 0.0
    %1323 = vmatprep.subr.mxu0 0.0
    %1324 = vmatpush1.msra.mxu0 0.0
    %1325 = vmatprep.subr.mxu0 0.0
    %1326 = vmatpush1.msra.mxu0 0.0
    %1327 = vmatprep.subr.mxu0 0.0
    %1328 = vmatpush1.msra.mxu0 0.0
    %1329 = vmatprep.subr.mxu0 0.0
    %1330 = vmatpush1.msra.mxu0 0.0
    %1331 = vmatprep.subr.mxu0 0.0
    %1332 = vmatpush1.msra.mxu0 %v1211
    %1333 = vmatprep.subr.mxu0 0.0
    %1334 = vmatpush2.msra.mxu0 0.0
    %1335 = vmatprep.subr.mxu0 0.0
    %1336 = vmatpush2.msra.mxu0 0.0
    %1337 = vmatprep.subr.mxu0 0.0
    %1338 = vmatpush2.msra.mxu0 0.0
    %1339 = vmatprep.subr.mxu0 0.0
    %1340 = vmatpush2.msra.mxu0 0.0
    %1341 = vmatprep.subr.mxu0 0.0
    %1342 = vmatpush2.msra.mxu0 0.0
    %1343 = vmatprep.subr.mxu0 0.0
    %1344 = vmatpush2.msra.mxu0 0.0
    %1345 = vmatprep.subr.mxu0 0.0
    %1346 = vmatpush2.msra.mxu0 0.0
    %1347 = vmatprep.subr.mxu0 0.0
    %1348 = vmatpush2.msra.mxu0 0.0
    %1349 = vmatprep.subr.mxu0 0.0
    %1350 = vmatpush2.msra.mxu0 0.0
    %1351 = vmatprep.subr.mxu0 0.0
    %1352 = vmatpush2.msra.mxu0 0.0
    %1353 = vmatprep.subr.mxu0 0.0
    %1354 = vmatpush2.msra.mxu0 0.0
    %1355 = vmatprep.subr.mxu0 0.0
    %1356 = vmatpush2.msra.mxu0 0.0
    %1357 = vmatprep.subr.mxu0 0.0
    %1358 = vmatpush2.msra.mxu0 0.0
    %1359 = vmatprep.subr.mxu0 0.0
    %1360 = vmatpush2.msra.mxu0 0.0
    %1361 = vmatprep.subr.mxu0 0.0
    %1362 = vmatpush2.msra.mxu0 0.0
    %1363 = vmatprep.subr.mxu0 0.0
    %1364 = vmatpush2.msra.mxu0 0.0
    %1365 = vmatprep.mubr.f32.mxu0 0.0
    %1366 = vmatmul.mubr.f32.gmra.mxu0 %v1296
    %v1367 = vpop.f32.mrf.mxu0
    %v1368 = vadd.f32 0.0, %v1367
    %v1369 = vpop.f32.mrf.mxu0
    %1370 = vmatprep.mubr.f32.mxu0 0.0
    %1371 = vmatmul.mubr.f32.gmra.mxu0 %v1299
    %v1372 = vpop.f32.mrf.mxu0
    %v1373 = vadd.f32 0.0, %v1372
    %v1374 = vpop.f32.mrf.mxu0
    %1375 = vdwg.mxu0
    %v1377 = vsel %vm406, %v1115, 0
    %v1380 = vsel %vm406, %v1120, 0
    %1382 = vmatprep.subr.mxu0 0.0
    %1383 = vmatpush1.msra.mxu0 0.0
    %1384 = vmatprep.subr.mxu0 0.0
    %1385 = vmatpush1.msra.mxu0 0.0
    %1386 = vmatprep.subr.mxu0 0.0
    %1387 = vmatpush1.msra.mxu0 0.0
    %1388 = vmatprep.subr.mxu0 0.0
    %1389 = vmatpush1.msra.mxu0 0.0
    %1390 = vmatprep.subr.mxu0 0.0
    %1391 = vmatpush1.msra.mxu0 0.0
    %1392 = vmatprep.subr.mxu0 0.0
    %1393 = vmatpush1.msra.mxu0 0.0
    %1394 = vmatprep.subr.mxu0 0.0
    %1395 = vmatpush1.msra.mxu0 0.0
    %1396 = vmatprep.subr.mxu0 0.0
    %1397 = vmatpush1.msra.mxu0 0.0
    %1398 = vmatprep.subr.mxu0 0.0
    %1399 = vmatpush1.msra.mxu0 0.0
    %1400 = vmatprep.subr.mxu0 0.0
    %1401 = vmatpush1.msra.mxu0 0.0
    %1402 = vmatprep.subr.mxu0 0.0
    %1403 = vmatpush1.msra.mxu0 0.0
    %1404 = vmatprep.subr.mxu0 0.0
    %1405 = vmatpush1.msra.mxu0 0.0
    %1406 = vmatprep.subr.mxu0 0.0
    %1407 = vmatpush1.msra.mxu0 0.0
    %1408 = vmatprep.subr.mxu0 0.0
    %1409 = vmatpush1.msra.mxu0 0.0
    %1410 = vmatprep.subr.mxu0 0.0
    %1411 = vmatpush1.msra.mxu0 0.0
    %1412 = vmatprep.subr.mxu0 0.0
    %1413 = vmatpush1.msra.mxu0 %v1212
    %1414 = vmatprep.subr.mxu0 0.0
    %1415 = vmatpush2.msra.mxu0 0.0
    %1416 = vmatprep.subr.mxu0 0.0
    %1417 = vmatpush2.msra.mxu0 0.0
    %1418 = vmatprep.subr.mxu0 0.0
    %1419 = vmatpush2.msra.mxu0 0.0
    %1420 = vmatprep.subr.mxu0 0.0
    %1421 = vmatpush2.msra.mxu0 0.0
    %1422 = vmatprep.subr.mxu0 0.0
    %1423 = vmatpush2.msra.mxu0 0.0
    %1424 = vmatprep.subr.mxu0 0.0
    %1425 = vmatpush2.msra.mxu0 0.0
    %1426 = vmatprep.subr.mxu0 0.0
    %1427 = vmatpush2.msra.mxu0 0.0
    %1428 = vmatprep.subr.mxu0 0.0
    %1429 = vmatpush2.msra.mxu0 0.0
    %1430 = vmatprep.subr.mxu0 0.0
    %1431 = vmatpush2.msra.mxu0 0.0
    %1432 = vmatprep.subr.mxu0 0.0
    %1433 = vmatpush2.msra.mxu0 0.0
    %1434 = vmatprep.subr.mxu0 0.0
    %1435 = vmatpush2.msra.mxu0 0.0
    %1436 = vmatprep.subr.mxu0 0.0
    %1437 = vmatpush2.msra.mxu0 0.0
    %1438 = vmatprep.subr.mxu0 0.0
    %1439 = vmatpush2.msra.mxu0 0.0
    %1440 = vmatprep.subr.mxu0 0.0
    %1441 = vmatpush2.msra.mxu0 0.0
    %1442 = vmatprep.subr.mxu0 0.0
    %1443 = vmatpush2.msra.mxu0 0.0
    %1444 = vmatprep.subr.mxu0 0.0
    %1445 = vmatpush2.msra.mxu0 0.0
    %1446 = vmatprep.mubr.f32.mxu0 0.0
    %1447 = vmatmul.mubr.f32.gmra.mxu0 %v1377
    %v1448 = vpop.f32.mrf.mxu0
    %v1449 = vadd.f32 0.0, %v1448
    %v1450 = vpop.f32.mrf.mxu0
    %1451 = vmatprep.mubr.f32.mxu0 0.0
    %1452 = vmatmul.mubr.f32.gmra.mxu0 %v1380
    %v1453 = vpop.f32.mrf.mxu0
    %v1454 = vadd.f32 0.0, %v1453
    %v1455 = vpop.f32.mrf.mxu0
    %1456 = vdwg.mxu0
    %v1458 = vsel %vm406, %v1202, 0
    %v1461 = vsel %vm406, %v1207, 0
    %1463 = vmatprep.subr.mxu0 0.0
    %1464 = vmatpush1.msra.mxu0 0.0
    %1465 = vmatprep.subr.mxu0 0.0
    %1466 = vmatpush1.msra.mxu0 0.0
    %1467 = vmatprep.subr.mxu0 0.0
    %1468 = vmatpush1.msra.mxu0 0.0
    %1469 = vmatprep.subr.mxu0 0.0
    %1470 = vmatpush1.msra.mxu0 0.0
    %1471 = vmatprep.subr.mxu0 0.0
    %1472 = vmatpush1.msra.mxu0 0.0
    %1473 = vmatprep.subr.mxu0 0.0
    %1474 = vmatpush1.msra.mxu0 0.0
    %1475 = vmatprep.subr.mxu0 0.0
    %1476 = vmatpush1.msra.mxu0 0.0
    %1477 = vmatprep.subr.mxu0 0.0
    %1478 = vmatpush1.msra.mxu0 0.0
    %1479 = vmatprep.subr.mxu0 0.0
    %1480 = vmatpush1.msra.mxu0 0.0
    %1481 = vmatprep.subr.mxu0 0.0
    %1482 = vmatpush1.msra.mxu0 0.0
    %1483 = vmatprep.subr.mxu0 0.0
    %1484 = vmatpush1.msra.mxu0 0.0
    %1485 = vmatprep.subr.mxu0 0.0
    %1486 = vmatpush1.msra.mxu0 0.0
    %1487 = vmatprep.subr.mxu0 0.0
    %1488 = vmatpush1.msra.mxu0 0.0
    %1489 = vmatprep.subr.mxu0 0.0
    %1490 = vmatpush1.msra.mxu0 0.0
    %1491 = vmatprep.subr.mxu0 0.0
    %1492 = vmatpush1.msra.mxu0 0.0
    %1493 = vmatprep.subr.mxu0 0.0
    %1494 = vmatpush1.msra.mxu0 %v1213
    %1495 = vmatprep.subr.mxu0 0.0
    %1496 = vmatpush2.msra.mxu0 0.0
    %1497 = vmatprep.subr.mxu0 0.0
    %1498 = vmatpush2.msra.mxu0 0.0
    %1499 = vmatprep.subr.mxu0 0.0
    %1500 = vmatpush2.msra.mxu0 0.0
    %1501 = vmatprep.subr.mxu0 0.0
    %1502 = vmatpush2.msra.mxu0 0.0
    %1503 = vmatprep.subr.mxu0 0.0
    %1504 = vmatpush2.msra.mxu0 0.0
    %1505 = vmatprep.subr.mxu0 0.0
    %1506 = vmatpush2.msra.mxu0 0.0
    %1507 = vmatprep.subr.mxu0 0.0
    %1508 = vmatpush2.msra.mxu0 0.0
    %1509 = vmatprep.subr.mxu0 0.0
    %1510 = vmatpush2.msra.mxu0 0.0
    %1511 = vmatprep.subr.mxu0 0.0
    %1512 = vmatpush2.msra.mxu0 0.0
    %1513 = vmatprep.subr.mxu0 0.0
    %1514 = vmatpush2.msra.mxu0 0.0
    %1515 = vmatprep.subr.mxu0 0.0
    %1516 = vmatpush2.msra.mxu0 0.0
    %1517 = vmatprep.subr.mxu0 0.0
    %1518 = vmatpush2.msra.mxu0 0.0
    %1519 = vmatprep.subr.mxu0 0.0
    %1520 = vmatpush2.msra.mxu0 0.0
    %1521 = vmatprep.subr.mxu0 0.0
    %1522 = vmatpush2.msra.mxu0 0.0
    %1523 = vmatprep.subr.mxu0 0.0
    %1524 = vmatpush2.msra.mxu0 0.0
    %1525 = vmatprep.subr.mxu0 0.0
    %1526 = vmatpush2.msra.mxu0 0.0
    %1527 = vmatprep.mubr.f32.mxu0 0.0
    %1528 = vmatmul.mubr.f32.gmra.mxu0 %v1458
    %v1529 = vpop.f32.mrf.mxu0
    %v1530 = vadd.f32 0.0, %v1529
    %v1531 = vpop.f32.mrf.mxu0
    %1532 = vmatprep.mubr.f32.mxu0 0.0
    %1533 = vmatmul.mubr.f32.gmra.mxu0 %v1461
    %v1534 = vpop.f32.mrf.mxu0
    %v1535 = vadd.f32 0.0, %v1534
    %v1536 = vpop.f32.mrf.mxu0
    %1537 = vdwg.mxu0
    %v1538 = vsel %vm38, %v1287, 0.0
    %v1539 = vsel %vm38, %v1368, 0.0
    %v1540 = vadd.f32 %v1538, %v1539
    %v1541 = vsel %vm38, %v1449, 0.0
    %v1542 = vadd.f32 %v1540, %v1541
    %v1543 = vsel %vm38, %v1530, 0.0
    %v1544 = vadd.f32 %v1542, %v1543
    %v1545 = vsel %vm38, %v1292, 0.0
    %v1546 = vsel %vm38, %v1373, 0.0
    %v1547 = vadd.f32 %v1545, %v1546
    %v1548 = vsel %vm38, %v1454, 0.0
    %v1549 = vadd.f32 %v1547, %v1548
    %v1550 = vsel %vm38, %v1535, 0.0
    %v1551 = vadd.f32 %v1549, %v1550
    %v1552 = vadd.f32 %v33, %v1544
    %v1553 = vadd.f32 %v34, %v1551
    %v1554 = vlaneseq
    %v1555 = vshrl.u32 %v1554, 7
    %v1556 = vsub.s32 4, %v1555
    %v1557 = vrot.slane %v37, %v1556
    %v1558 = vadd.f32 %v1552, %v1557
    %v1559 = vadd.f32 %v1553, %v1557
    %v1560 = vsel %vm38, %v1558, 0.0
    %1561 = vadd.xlane.f32.xlu0 %v1560
    %v1562 = vpop.xlane.xlu0 %1561
    %v1563 = vsel %vm38, %v1559, 0.0
    %1564 = vadd.xlane.f32.xlu0 %v1563
    %v1565 = vpop.xlane.xlu0 %1564
    %v1566 = vmul.f32 %v1562, %v45
    %v1567 = vmul.f32 %v1565, %v45
    %v1568 = vsub.f32 %v1558, %v1566
    %v1569 = vsub.f32 %v1559, %v1567
    %v1570 = vmul.f32 %v1568, %v1568
    %v1571 = vmul.f32 %v1569, %v1569
    %v1572 = vsel %vm38, %v1570, 0.0
    %1573 = vadd.xlane.f32.xlu0 %v1572
    %v1574 = vpop.xlane.xlu0 %1573
    %v1575 = vsel %vm38, %v1571, 0.0
    %1576 = vadd.xlane.f32.xlu0 %v1575
    %v1577 = vpop.xlane.xlu0 %1576
    %v1578 = vmul.f32 %v1574, %v45
    %v1579 = vmul.f32 %v1577, %v45
    %v1580 = vadd.f32 %v1578, 1e-05
    %v1581 = vadd.f32 %v1579, 1e-05
    %v1582 = vrsqrt.pop %v1580
    %v1583 = vrsqrt.pop %v1581
    %v1584 = vmul.f32 %v1568, %v1582
    %v1585 = vmul.f32 %v1569, %v1583
    %v1586 = vlaneseq
    %v1587 = vshrl.u32 %v1586, 7
    %v1588 = vsub.s32 2, %v1587
    %v1589 = vrot.slane %v37, %v1588
    %v1590 = vmul.f32 %v1584, %v1589
    %v1591 = vmul.f32 %v1585, %v1589
    %v1592 = vlaneseq
    %v1593 = vshrl.u32 %v1592, 7
    %v1594 = vsub.s32 3, %v1593
    %v1595 = vrot.slane %v37, %v1594
    %v1596 = vadd.f32 %v1590, %v1595
    %v1597 = vadd.f32 %v1591, %v1595
    %v1598 = vld [vmem:[%s4] sm:$0xff]
    %v1599 = vld [vmem:[%s4 + $0x8] sm:$0xff]
    %v1600 = vld [vmem:[%s4 + $0x10] sm:$0xff]
    %v1601 = vld [vmem:[%s4 + $0x18] sm:$0xff]
    %v1602 = vlaneseq
    %v1603 = vshrl.u32 %v1602, 7
    %v1604 = vsub.s32 6, %v1603
    %v1605 = vrot.slane %v37, %v1604
    %v1607 = vsel %vm38, %v1596, 0
    %v1610 = vsel %vm38, %v1597, 0
    %1612 = vmatprep.subr.mxu0 0.0
    %1613 = vmatpush1.msra.mxu0 0.0
    %1614 = vmatprep.subr.mxu0 0.0
    %1615 = vmatpush1.msra.mxu0 0.0
    %1616 = vmatprep.subr.mxu0 0.0
    %1617 = vmatpush1.msra.mxu0 0.0
    %1618 = vmatprep.subr.mxu0 0.0
    %1619 = vmatpush1.msra.mxu0 0.0
    %1620 = vmatprep.subr.mxu0 0.0
    %1621 = vmatpush1.msra.mxu0 0.0
    %1622 = vmatprep.subr.mxu0 0.0
    %1623 = vmatpush1.msra.mxu0 0.0
    %1624 = vmatprep.subr.mxu0 0.0
    %1625 = vmatpush1.msra.mxu0 0.0
    %1626 = vmatprep.subr.mxu0 0.0
    %1627 = vmatpush1.msra.mxu0 0.0
    %1628 = vmatprep.subr.mxu0 0.0
    %1629 = vmatpush1.msra.mxu0 0.0
    %1630 = vmatprep.subr.mxu0 0.0
    %1631 = vmatpush1.msra.mxu0 0.0
    %1632 = vmatprep.subr.mxu0 0.0
    %1633 = vmatpush1.msra.mxu0 0.0
    %1634 = vmatprep.subr.mxu0 0.0
    %1635 = vmatpush1.msra.mxu0 0.0
    %1636 = vmatprep.subr.mxu0 0.0
    %1637 = vmatpush1.msra.mxu0 %v1601
    %1638 = vmatprep.subr.mxu0 0.0
    %1639 = vmatpush1.msra.mxu0 %v1600
    %1640 = vmatprep.subr.mxu0 0.0
    %1641 = vmatpush1.msra.mxu0 %v1599
    %1642 = vmatprep.subr.mxu0 0.0
    %1643 = vmatpush1.msra.mxu0 %v1598
    %1644 = vmatprep.subr.mxu0 0.0
    %1645 = vmatpush2.msra.mxu0 0.0
    %1646 = vmatprep.subr.mxu0 0.0
    %1647 = vmatpush2.msra.mxu0 0.0
    %1648 = vmatprep.subr.mxu0 0.0
    %1649 = vmatpush2.msra.mxu0 0.0
    %1650 = vmatprep.subr.mxu0 0.0
    %1651 = vmatpush2.msra.mxu0 0.0
    %1652 = vmatprep.subr.mxu0 0.0
    %1653 = vmatpush2.msra.mxu0 0.0
    %1654 = vmatprep.subr.mxu0 0.0
    %1655 = vmatpush2.msra.mxu0 0.0
    %1656 = vmatprep.subr.mxu0 0.0
    %1657 = vmatpush2.msra.mxu0 0.0
    %1658 = vmatprep.subr.mxu0 0.0
    %1659 = vmatpush2.msra.mxu0 0.0
    %1660 = vmatprep.subr.mxu0 0.0
    %1661 = vmatpush2.msra.mxu0 0.0
    %1662 = vmatprep.subr.mxu0 0.0
    %1663 = vmatpush2.msra.mxu0 0.0
    %1664 = vmatprep.subr.mxu0 0.0
    %1665 = vmatpush2.msra.mxu0 0.0
    %1666 = vmatprep.subr.mxu0 0.0
    %1667 = vmatpush2.msra.mxu0 0.0
    %1668 = vmatprep.subr.mxu0 0.0
    %1669 = vmatpush2.msra.mxu0 0.0
    %1670 = vmatprep.subr.mxu0 0.0
    %1671 = vmatpush2.msra.mxu0 0.0
    %1672 = vmatprep.subr.mxu0 0.0
    %1673 = vmatpush2.msra.mxu0 0.0
    %1674 = vmatprep.subr.mxu0 0.0
    %1675 = vmatpush2.msra.mxu0 0.0
    %1676 = vmatprep.mubr.f32.mxu0 0.0
    %1677 = vmatmul.mubr.f32.gmra.mxu0 %v1607
    %v1678 = vpop.f32.mrf.mxu0
    %v1679 = vadd.f32 %v1605, %v1678
    %v1680 = vpop.f32.mrf.mxu0
    %1681 = vmatprep.mubr.f32.mxu0 0.0
    %1682 = vmatmul.mubr.f32.gmra.mxu0 %v1610
    %v1683 = vpop.f32.mrf.mxu0
    %v1684 = vadd.f32 %v1605, %v1683
    %v1685 = vpop.f32.mrf.mxu0
    %1686 = vdwg.mxu0
    %v1687 = vmax.f32 %v1679, 0.0
    %v1688 = vmax.f32 %v1684, 0.0
    %v1689 = vld [vmem:[%s5] sm:$0xff]
    %v1690 = vld [vmem:[%s5 + $0x8] sm:$0xff]
    %v1691 = vld [vmem:[%s5 + $0x10] sm:$0xff]
    %v1692 = vld [vmem:[%s5 + $0x18] sm:$0xff]
    %v1693 = vld [vmem:[%s5 + $0x20] sm:$0xff]
    %v1694 = vld [vmem:[%s5 + $0x28] sm:$0xff]
    %v1695 = vld [vmem:[%s5 + $0x30] sm:$0xff]
    %v1696 = vld [vmem:[%s5 + $0x38] sm:$0xff]
    %v1697 = vld [vmem:[%s5 + $0x40] sm:$0xff]
    %v1698 = vld [vmem:[%s5 + $0x48] sm:$0xff]
    %v1699 = vld [vmem:[%s5 + $0x50] sm:$0xff]
    %v1700 = vld [vmem:[%s5 + $0x58] sm:$0xff]
    %v1701 = vld [vmem:[%s5 + $0x60] sm:$0xff]
    %v1702 = vld [vmem:[%s5 + $0x68] sm:$0xff]
    %v1703 = vld [vmem:[%s5 + $0x70] sm:$0xff]
    %v1704 = vld [vmem:[%s5 + $0x78] sm:$0xff]
    %1705 = vmatprep.subr.mxu0 0.0
    %1706 = vmatpush1.msra.mxu0 %v1704
    %1707 = vmatprep.subr.mxu0 0.0
    %1708 = vmatpush1.msra.mxu0 %v1703
    %1709 = vmatprep.subr.mxu0 0.0
    %1710 = vmatpush1.msra.mxu0 %v1702
    %1711 = vmatprep.subr.mxu0 0.0
    %1712 = vmatpush1.msra.mxu0 %v1701
    %1713 = vmatprep.subr.mxu0 0.0
    %1714 = vmatpush1.msra.mxu0 %v1700
    %1715 = vmatprep.subr.mxu0 0.0
    %1716 = vmatpush1.msra.mxu0 %v1699
    %1717 = vmatprep.subr.mxu0 0.0
    %1718 = vmatpush1.msra.mxu0 %v1698
    %1719 = vmatprep.subr.mxu0 0.0
    %1720 = vmatpush1.msra.mxu0 %v1697
    %1721 = vmatprep.subr.mxu0 0.0
    %1722 = vmatpush1.msra.mxu0 %v1696
    %1723 = vmatprep.subr.mxu0 0.0
    %1724 = vmatpush1.msra.mxu0 %v1695
    %1725 = vmatprep.subr.mxu0 0.0
    %1726 = vmatpush1.msra.mxu0 %v1694
    %1727 = vmatprep.subr.mxu0 0.0
    %1728 = vmatpush1.msra.mxu0 %v1693
    %1729 = vmatprep.subr.mxu0 0.0
    %1730 = vmatpush1.msra.mxu0 %v1692
    %1731 = vmatprep.subr.mxu0 0.0
    %1732 = vmatpush1.msra.mxu0 %v1691
    %1733 = vmatprep.subr.mxu0 0.0
    %1734 = vmatpush1.msra.mxu0 %v1690
    %1735 = vmatprep.subr.mxu0 0.0
    %1736 = vmatpush1.msra.mxu0 %v1689
    %1737 = vmatprep.subr.mxu0 0.0
    %1738 = vmatpush2.msra.mxu0 0.0
    %1739 = vmatprep.subr.mxu0 0.0
    %1740 = vmatpush2.msra.mxu0 0.0
    %1741 = vmatprep.subr.mxu0 0.0
    %1742 = vmatpush2.msra.mxu0 0.0
    %1743 = vmatprep.subr.mxu0 0.0
    %1744 = vmatpush2.msra.mxu0 0.0
    %1745 = vmatprep.subr.mxu0 0.0
    %1746 = vmatpush2.msra.mxu0 0.0
    %1747 = vmatprep.subr.mxu0 0.0
    %1748 = vmatpush2.msra.mxu0 0.0
    %1749 = vmatprep.subr.mxu0 0.0
    %1750 = vmatpush2.msra.mxu0 0.0
    %1751 = vmatprep.subr.mxu0 0.0
    %1752 = vmatpush2.msra.mxu0 0.0
    %1753 = vmatprep.subr.mxu0 0.0
    %1754 = vmatpush2.msra.mxu0 0.0
    %1755 = vmatprep.subr.mxu0 0.0
    %1756 = vmatpush2.msra.mxu0 0.0
    %1757 = vmatprep.subr.mxu0 0.0
    %1758 = vmatpush2.msra.mxu0 0.0
    %1759 = vmatprep.subr.mxu0 0.0
    %1760 = vmatpush2.msra.mxu0 0.0
    %1761 = vmatprep.subr.mxu0 0.0
    %1762 = vmatpush2.msra.mxu0 0.0
    %1763 = vmatprep.subr.mxu0 0.0
    %1764 = vmatpush2.msra.mxu0 0.0
    %1765 = vmatprep.subr.mxu0 0.0
    %1766 = vmatpush2.msra.mxu0 0.0
    %1767 = vmatprep.subr.mxu0 0.0
    %1768 = vmatpush2.msra.mxu0 0.0
    %1769 = vmatprep.mubr.f32.mxu0 0.0
    %1770 = vmatmul.mubr.f32.gmra.mxu0 %v1687
    %v1771 = vpop.f32.mrf.mxu0
    %v1772 = vadd.f32 0.0, %v1771
    %v1773 = vpop.f32.mrf.mxu0
    %1774 = vmatprep.mubr.f32.mxu0 0.0
    %1775 = vmatmul.mubr.f32.gmra.mxu0 %v1688
    %v1776 = vpop.f32.mrf.mxu0
    %v1777 = vadd.f32 0.0, %v1776
    %v1778 = vpop.f32.mrf.mxu0
    %1779 = vdwg.mxu0
    %v1780 = vadd.f32 %v1558, %v1772
    %v1781 = vadd.f32 %v1559, %v1777
    %v1782 = vlaneseq
    %v1783 = vshrl.u32 %v1782, 7
    %v1784 = vsub.s32 5, %v1783
    %v1785 = vrot.slane %v37, %v1784
    %v1786 = vadd.f32 %v1780, %v1785
    %v1787 = vadd.f32 %v1781, %v1785
    %s1788 = scalar_lea.vmem %s6, 8
    %v1789 = vld [vmem:[%s1788] sm:$0xff]
    %v1790 = vsel %vm38, %v1786, 0.0
    %1791 = vadd.xlane.f32.xlu0 %v1790
    %v1792 = vpop.xlane.xlu0 %1791
    %v1793 = vsel %vm38, %v1787, 0.0
    %1794 = vadd.xlane.f32.xlu0 %v1793
    %v1795 = vpop.xlane.xlu0 %1794
    %v1796 = vmul.f32 %v1792, %v45
    %v1797 = vmul.f32 %v1795, %v45
    %v1798 = vsub.f32 %v1786, %v1796
    %v1799 = vsub.f32 %v1787, %v1797
    %v1800 = vmul.f32 %v1798, %v1798
    %v1801 = vmul.f32 %v1799, %v1799
    %v1802 = vsel %vm38, %v1800, 0.0
    %1803 = vadd.xlane.f32.xlu0 %v1802
    %v1804 = vpop.xlane.xlu0 %1803
    %v1805 = vsel %vm38, %v1801, 0.0
    %1806 = vadd.xlane.f32.xlu0 %v1805
    %v1807 = vpop.xlane.xlu0 %1806
    %v1808 = vmul.f32 %v1804, %v45
    %v1809 = vmul.f32 %v1807, %v45
    %v1810 = vadd.f32 %v1808, 1e-05
    %v1811 = vadd.f32 %v1809, 1e-05
    %v1812 = vrsqrt.pop %v1810
    %v1813 = vrsqrt.pop %v1811
    %v1814 = vmul.f32 %v1798, %v1812
    %v1815 = vmul.f32 %v1799, %v1813
    %v1816 = vlaneseq
    %v1817 = vshrl.u32 %v1816, 7
    %v1818 = vsub.s32 0, %v1817
    %v1819 = vrot.slane %v1789, %v1818
    %v1820 = vmul.f32 %v1814, %v1819
    %v1821 = vmul.f32 %v1815, %v1819
    %v1822 = vlaneseq
    %v1823 = vshrl.u32 %v1822, 7
    %v1824 = vsub.s32 1, %v1823
    %v1825 = vrot.slane %v1789, %v1824
    %v1826 = vadd.f32 %v1820, %v1825
    %v1827 = vadd.f32 %v1821, %v1825
    %s1828 = scalar_lea.vmem %s2, 128
    %v1829 = vld [vmem:[%s1828] sm:$0xff]
    %v1830 = vld [vmem:[%s1828 + $0x8] sm:$0xff]
    %v1831 = vld [vmem:[%s1828 + $0x10] sm:$0xff]
    %v1832 = vld [vmem:[%s1828 + $0x18] sm:$0xff]
    %v1833 = vld [vmem:[%s1828 + $0x20] sm:$0xff]
    %v1834 = vld [vmem:[%s1828 + $0x28] sm:$0xff]
    %v1835 = vld [vmem:[%s1828 + $0x30] sm:$0xff]
    %v1836 = vld [vmem:[%s1828 + $0x38] sm:$0xff]
    %v1837 = vld [vmem:[%s1828 + $0x40] sm:$0xff]
    %v1838 = vld [vmem:[%s1828 + $0x48] sm:$0xff]
    %v1839 = vld [vmem:[%s1828 + $0x50] sm:$0xff]
    %v1840 = vld [vmem:[%s1828 + $0x58] sm:$0xff]
    %v1841 = vld [vmem:[%s1828 + $0x60] sm:$0xff]
    %v1842 = vld [vmem:[%s1828 + $0x68] sm:$0xff]
    %v1843 = vld [vmem:[%s1828 + $0x70] sm:$0xff]
    %v1844 = vld [vmem:[%s1828 + $0x78] sm:$0xff]
    %v1846 = vsel %vm38, %v1826, 0
    %v1849 = vsel %vm38, %v1827, 0
    %1851 = vmatprep.subr.mxu0 0.0
    %1852 = vmatpush1.msra.mxu0 0.0
    %1853 = vmatprep.subr.mxu0 0.0
    %1854 = vmatpush1.msra.mxu0 0.0
    %1855 = vmatprep.subr.mxu0 0.0
    %1856 = vmatpush1.msra.mxu0 0.0
    %1857 = vmatprep.subr.mxu0 0.0
    %1858 = vmatpush1.msra.mxu0 0.0
    %1859 = vmatprep.subr.mxu0 0.0
    %1860 = vmatpush1.msra.mxu0 0.0
    %1861 = vmatprep.subr.mxu0 0.0
    %1862 = vmatpush1.msra.mxu0 0.0
    %1863 = vmatprep.subr.mxu0 0.0
    %1864 = vmatpush1.msra.mxu0 0.0
    %1865 = vmatprep.subr.mxu0 0.0
    %1866 = vmatpush1.msra.mxu0 0.0
    %1867 = vmatprep.subr.mxu0 0.0
    %1868 = vmatpush1.msra.mxu0 0.0
    %1869 = vmatprep.subr.mxu0 0.0
    %1870 = vmatpush1.msra.mxu0 0.0
    %1871 = vmatprep.subr.mxu0 0.0
    %1872 = vmatpush1.msra.mxu0 0.0
    %1873 = vmatprep.subr.mxu0 0.0
    %1874 = vmatpush1.msra.mxu0 0.0
    %1875 = vmatprep.subr.mxu0 0.0
    %1876 = vmatpush1.msra.mxu0 %v1832
    %1877 = vmatprep.subr.mxu0 0.0
    %1878 = vmatpush1.msra.mxu0 %v1831
    %1879 = vmatprep.subr.mxu0 0.0
    %1880 = vmatpush1.msra.mxu0 %v1830
    %1881 = vmatprep.subr.mxu0 0.0
    %1882 = vmatpush1.msra.mxu0 %v1829
    %1883 = vmatprep.subr.mxu0 0.0
    %1884 = vmatpush2.msra.mxu0 0.0
    %1885 = vmatprep.subr.mxu0 0.0
    %1886 = vmatpush2.msra.mxu0 0.0
    %1887 = vmatprep.subr.mxu0 0.0
    %1888 = vmatpush2.msra.mxu0 0.0
    %1889 = vmatprep.subr.mxu0 0.0
    %1890 = vmatpush2.msra.mxu0 0.0
    %1891 = vmatprep.subr.mxu0 0.0
    %1892 = vmatpush2.msra.mxu0 0.0
    %1893 = vmatprep.subr.mxu0 0.0
    %1894 = vmatpush2.msra.mxu0 0.0
    %1895 = vmatprep.subr.mxu0 0.0
    %1896 = vmatpush2.msra.mxu0 0.0
    %1897 = vmatprep.subr.mxu0 0.0
    %1898 = vmatpush2.msra.mxu0 0.0
    %1899 = vmatprep.subr.mxu0 0.0
    %1900 = vmatpush2.msra.mxu0 0.0
    %1901 = vmatprep.subr.mxu0 0.0
    %1902 = vmatpush2.msra.mxu0 0.0
    %1903 = vmatprep.subr.mxu0 0.0
    %1904 = vmatpush2.msra.mxu0 0.0
    %1905 = vmatprep.subr.mxu0 0.0
    %1906 = vmatpush2.msra.mxu0 0.0
    %1907 = vmatprep.subr.mxu0 0.0
    %1908 = vmatpush2.msra.mxu0 0.0
    %1909 = vmatprep.subr.mxu0 0.0
    %1910 = vmatpush2.msra.mxu0 0.0
    %1911 = vmatprep.subr.mxu0 0.0
    %1912 = vmatpush2.msra.mxu0 0.0
    %1913 = vmatprep.subr.mxu0 0.0
    %1914 = vmatpush2.msra.mxu0 0.0
    %1915 = vmatprep.mubr.f32.mxu0 0.0
    %1916 = vmatmul.mubr.f32.gmra.mxu0 %v1846
    %v1917 = vpop.f32.mrf.mxu0
    %v1918 = vadd.f32 0.0, %v1917
    %v1919 = vpop.f32.mrf.mxu0
    %1920 = vmatprep.mubr.f32.mxu0 0.0
    %1921 = vmatmul.mubr.f32.gmra.mxu0 %v1849
    %v1922 = vpop.f32.mrf.mxu0
    %v1923 = vadd.f32 0.0, %v1922
    %v1924 = vpop.f32.mrf.mxu0
    %1925 = vdwg.mxu0
    %1926 = vmatprep.subr.mxu0 0.0
    %1927 = vmatpush1.msra.mxu0 0.0
    %1928 = vmatprep.subr.mxu0 0.0
    %1929 = vmatpush1.msra.mxu0 0.0
    %1930 = vmatprep.subr.mxu0 0.0
    %1931 = vmatpush1.msra.mxu0 0.0
    %1932 = vmatprep.subr.mxu0 0.0
    %1933 = vmatpush1.msra.mxu0 0.0
    %1934 = vmatprep.subr.mxu0 0.0
    %1935 = vmatpush1.msra.mxu0 0.0
    %1936 = vmatprep.subr.mxu0 0.0
    %1937 = vmatpush1.msra.mxu0 0.0
    %1938 = vmatprep.subr.mxu0 0.0
    %1939 = vmatpush1.msra.mxu0 0.0
    %1940 = vmatprep.subr.mxu0 0.0
    %1941 = vmatpush1.msra.mxu0 0.0
    %1942 = vmatprep.subr.mxu0 0.0
    %1943 = vmatpush1.msra.mxu0 0.0
    %1944 = vmatprep.subr.mxu0 0.0
    %1945 = vmatpush1.msra.mxu0 0.0
    %1946 = vmatprep.subr.mxu0 0.0
    %1947 = vmatpush1.msra.mxu0 0.0
    %1948 = vmatprep.subr.mxu0 0.0
    %1949 = vmatpush1.msra.mxu0 0.0
    %1950 = vmatprep.subr.mxu0 0.0
    %1951 = vmatpush1.msra.mxu0 %v1836
    %1952 = vmatprep.subr.mxu0 0.0
    %1953 = vmatpush1.msra.mxu0 %v1835
    %1954 = vmatprep.subr.mxu0 0.0
    %1955 = vmatpush1.msra.mxu0 %v1834
    %1956 = vmatprep.subr.mxu0 0.0
    %1957 = vmatpush1.msra.mxu0 %v1833
    %1958 = vmatprep.subr.mxu0 0.0
    %1959 = vmatpush2.msra.mxu0 0.0
    %1960 = vmatprep.subr.mxu0 0.0
    %1961 = vmatpush2.msra.mxu0 0.0
    %1962 = vmatprep.subr.mxu0 0.0
    %1963 = vmatpush2.msra.mxu0 0.0
    %1964 = vmatprep.subr.mxu0 0.0
    %1965 = vmatpush2.msra.mxu0 0.0
    %1966 = vmatprep.subr.mxu0 0.0
    %1967 = vmatpush2.msra.mxu0 0.0
    %1968 = vmatprep.subr.mxu0 0.0
    %1969 = vmatpush2.msra.mxu0 0.0
    %1970 = vmatprep.subr.mxu0 0.0
    %1971 = vmatpush2.msra.mxu0 0.0
    %1972 = vmatprep.subr.mxu0 0.0
    %1973 = vmatpush2.msra.mxu0 0.0
    %1974 = vmatprep.subr.mxu0 0.0
    %1975 = vmatpush2.msra.mxu0 0.0
    %1976 = vmatprep.subr.mxu0 0.0
    %1977 = vmatpush2.msra.mxu0 0.0
    %1978 = vmatprep.subr.mxu0 0.0
    %1979 = vmatpush2.msra.mxu0 0.0
    %1980 = vmatprep.subr.mxu0 0.0
    %1981 = vmatpush2.msra.mxu0 0.0
    %1982 = vmatprep.subr.mxu0 0.0
    %1983 = vmatpush2.msra.mxu0 0.0
    %1984 = vmatprep.subr.mxu0 0.0
    %1985 = vmatpush2.msra.mxu0 0.0
    %1986 = vmatprep.subr.mxu0 0.0
    %1987 = vmatpush2.msra.mxu0 0.0
    %1988 = vmatprep.subr.mxu0 0.0
    %1989 = vmatpush2.msra.mxu0 0.0
    %1990 = vmatprep.mubr.f32.mxu0 0.0
    %1991 = vmatmul.mubr.f32.gmra.mxu0 %v1846
    %v1992 = vpop.f32.mrf.mxu0
    %v1993 = vadd.f32 0.0, %v1992
    %v1994 = vpop.f32.mrf.mxu0
    %1995 = vmatprep.mubr.f32.mxu0 0.0
    %1996 = vmatmul.mubr.f32.gmra.mxu0 %v1849
    %v1997 = vpop.f32.mrf.mxu0
    %v1998 = vadd.f32 0.0, %v1997
    %v1999 = vpop.f32.mrf.mxu0
    %2000 = vdwg.mxu0
    %2001 = vmatprep.subr.mxu0 0.0
    %2002 = vmatpush1.msra.mxu0 0.0
    %2003 = vmatprep.subr.mxu0 0.0
    %2004 = vmatpush1.msra.mxu0 0.0
    %2005 = vmatprep.subr.mxu0 0.0
    %2006 = vmatpush1.msra.mxu0 0.0
    %2007 = vmatprep.subr.mxu0 0.0
    %2008 = vmatpush1.msra.mxu0 0.0
    %2009 = vmatprep.subr.mxu0 0.0
    %2010 = vmatpush1.msra.mxu0 0.0
    %2011 = vmatprep.subr.mxu0 0.0
    %2012 = vmatpush1.msra.mxu0 0.0
    %2013 = vmatprep.subr.mxu0 0.0
    %2014 = vmatpush1.msra.mxu0 0.0
    %2015 = vmatprep.subr.mxu0 0.0
    %2016 = vmatpush1.msra.mxu0 0.0
    %2017 = vmatprep.subr.mxu0 0.0
    %2018 = vmatpush1.msra.mxu0 0.0
    %2019 = vmatprep.subr.mxu0 0.0
    %2020 = vmatpush1.msra.mxu0 0.0
    %2021 = vmatprep.subr.mxu0 0.0
    %2022 = vmatpush1.msra.mxu0 0.0
    %2023 = vmatprep.subr.mxu0 0.0
    %2024 = vmatpush1.msra.mxu0 0.0
    %2025 = vmatprep.subr.mxu0 0.0
    %2026 = vmatpush1.msra.mxu0 %v1840
    %2027 = vmatprep.subr.mxu0 0.0
    %2028 = vmatpush1.msra.mxu0 %v1839
    %2029 = vmatprep.subr.mxu0 0.0
    %2030 = vmatpush1.msra.mxu0 %v1838
    %2031 = vmatprep.subr.mxu0 0.0
    %2032 = vmatpush1.msra.mxu0 %v1837
    %2033 = vmatprep.subr.mxu0 0.0
    %2034 = vmatpush2.msra.mxu0 0.0
    %2035 = vmatprep.subr.mxu0 0.0
    %2036 = vmatpush2.msra.mxu0 0.0
    %2037 = vmatprep.subr.mxu0 0.0
    %2038 = vmatpush2.msra.mxu0 0.0
    %2039 = vmatprep.subr.mxu0 0.0
    %2040 = vmatpush2.msra.mxu0 0.0
    %2041 = vmatprep.subr.mxu0 0.0
    %2042 = vmatpush2.msra.mxu0 0.0
    %2043 = vmatprep.subr.mxu0 0.0
    %2044 = vmatpush2.msra.mxu0 0.0
    %2045 = vmatprep.subr.mxu0 0.0
    %2046 = vmatpush2.msra.mxu0 0.0
    %2047 = vmatprep.subr.mxu0 0.0
    %2048 = vmatpush2.msra.mxu0 0.0
    %2049 = vmatprep.subr.mxu0 0.0
    %2050 = vmatpush2.msra.mxu0 0.0
    %2051 = vmatprep.subr.mxu0 0.0
    %2052 = vmatpush2.msra.mxu0 0.0
    %2053 = vmatprep.subr.mxu0 0.0
    %2054 = vmatpush2.msra.mxu0 0.0
    %2055 = vmatprep.subr.mxu0 0.0
    %2056 = vmatpush2.msra.mxu0 0.0
    %2057 = vmatprep.subr.mxu0 0.0
    %2058 = vmatpush2.msra.mxu0 0.0
    %2059 = vmatprep.subr.mxu0 0.0
    %2060 = vmatpush2.msra.mxu0 0.0
    %2061 = vmatprep.subr.mxu0 0.0
    %2062 = vmatpush2.msra.mxu0 0.0
    %2063 = vmatprep.subr.mxu0 0.0
    %2064 = vmatpush2.msra.mxu0 0.0
    %2065 = vmatprep.mubr.f32.mxu0 0.0
    %2066 = vmatmul.mubr.f32.gmra.mxu0 %v1846
    %v2067 = vpop.f32.mrf.mxu0
    %v2068 = vadd.f32 0.0, %v2067
    %v2069 = vpop.f32.mrf.mxu0
    %2070 = vmatprep.mubr.f32.mxu0 0.0
    %2071 = vmatmul.mubr.f32.gmra.mxu0 %v1849
    %v2072 = vpop.f32.mrf.mxu0
    %v2073 = vadd.f32 0.0, %v2072
    %v2074 = vpop.f32.mrf.mxu0
    %2075 = vdwg.mxu0
    %2076 = vmatprep.subr.mxu0 0.0
    %2077 = vmatpush1.msra.mxu0 0.0
    %2078 = vmatprep.subr.mxu0 0.0
    %2079 = vmatpush1.msra.mxu0 0.0
    %2080 = vmatprep.subr.mxu0 0.0
    %2081 = vmatpush1.msra.mxu0 0.0
    %2082 = vmatprep.subr.mxu0 0.0
    %2083 = vmatpush1.msra.mxu0 0.0
    %2084 = vmatprep.subr.mxu0 0.0
    %2085 = vmatpush1.msra.mxu0 0.0
    %2086 = vmatprep.subr.mxu0 0.0
    %2087 = vmatpush1.msra.mxu0 0.0
    %2088 = vmatprep.subr.mxu0 0.0
    %2089 = vmatpush1.msra.mxu0 0.0
    %2090 = vmatprep.subr.mxu0 0.0
    %2091 = vmatpush1.msra.mxu0 0.0
    %2092 = vmatprep.subr.mxu0 0.0
    %2093 = vmatpush1.msra.mxu0 0.0
    %2094 = vmatprep.subr.mxu0 0.0
    %2095 = vmatpush1.msra.mxu0 0.0
    %2096 = vmatprep.subr.mxu0 0.0
    %2097 = vmatpush1.msra.mxu0 0.0
    %2098 = vmatprep.subr.mxu0 0.0
    %2099 = vmatpush1.msra.mxu0 0.0
    %2100 = vmatprep.subr.mxu0 0.0
    %2101 = vmatpush1.msra.mxu0 %v1844
    %2102 = vmatprep.subr.mxu0 0.0
    %2103 = vmatpush1.msra.mxu0 %v1843
    %2104 = vmatprep.subr.mxu0 0.0
    %2105 = vmatpush1.msra.mxu0 %v1842
    %2106 = vmatprep.subr.mxu0 0.0
    %2107 = vmatpush1.msra.mxu0 %v1841
    %2108 = vmatprep.subr.mxu0 0.0
    %2109 = vmatpush2.msra.mxu0 0.0
    %2110 = vmatprep.subr.mxu0 0.0
    %2111 = vmatpush2.msra.mxu0 0.0
    %2112 = vmatprep.subr.mxu0 0.0
    %2113 = vmatpush2.msra.mxu0 0.0
    %2114 = vmatprep.subr.mxu0 0.0
    %2115 = vmatpush2.msra.mxu0 0.0
    %2116 = vmatprep.subr.mxu0 0.0
    %2117 = vmatpush2.msra.mxu0 0.0
    %2118 = vmatprep.subr.mxu0 0.0
    %2119 = vmatpush2.msra.mxu0 0.0
    %2120 = vmatprep.subr.mxu0 0.0
    %2121 = vmatpush2.msra.mxu0 0.0
    %2122 = vmatprep.subr.mxu0 0.0
    %2123 = vmatpush2.msra.mxu0 0.0
    %2124 = vmatprep.subr.mxu0 0.0
    %2125 = vmatpush2.msra.mxu0 0.0
    %2126 = vmatprep.subr.mxu0 0.0
    %2127 = vmatpush2.msra.mxu0 0.0
    %2128 = vmatprep.subr.mxu0 0.0
    %2129 = vmatpush2.msra.mxu0 0.0
    %2130 = vmatprep.subr.mxu0 0.0
    %2131 = vmatpush2.msra.mxu0 0.0
    %2132 = vmatprep.subr.mxu0 0.0
    %2133 = vmatpush2.msra.mxu0 0.0
    %2134 = vmatprep.subr.mxu0 0.0
    %2135 = vmatpush2.msra.mxu0 0.0
    %2136 = vmatprep.subr.mxu0 0.0
    %2137 = vmatpush2.msra.mxu0 0.0
    %2138 = vmatprep.subr.mxu0 0.0
    %2139 = vmatpush2.msra.mxu0 0.0
    %2140 = vmatprep.mubr.f32.mxu0 0.0
    %2141 = vmatmul.mubr.f32.gmra.mxu0 %v1846
    %v2142 = vpop.f32.mrf.mxu0
    %v2143 = vadd.f32 0.0, %v2142
    %v2144 = vpop.f32.mrf.mxu0
    %2145 = vmatprep.mubr.f32.mxu0 0.0
    %2146 = vmatmul.mubr.f32.gmra.mxu0 %v1849
    %v2147 = vpop.f32.mrf.mxu0
    %v2148 = vadd.f32 0.0, %v2147
    %v2149 = vpop.f32.mrf.mxu0
    %2150 = vdwg.mxu0
    %2153 = vrot.lane.b32.xlu0 %v1918, 120
    %v2154 = vpop.permute.xlu0 %2153
    %2155 = vrot.lane.b32.xlu0 %v1923, 120
    %v2156 = vpop.permute.xlu0 %2155
    %v2157 = vsel %vm406, %v1918, 0
    %v2159 = vsel %vm406, %v1923, 0
    %v2161 = vsel %vm406, %v2154, 0
    %v2163 = vsel %vm406, %v2156, 0
    %2165 = vmatprep.subr.mxu0 0.0
    %2166 = vmatpush1.xpose.msra.mxu0 0.0
    %2167 = vmatprep.subr.mxu0 0.0
    %2168 = vmatpush1.xpose.msra.mxu0 0.0
    %2169 = vmatprep.subr.mxu0 0.0
    %2170 = vmatpush1.xpose.msra.mxu0 0.0
    %2171 = vmatprep.subr.mxu0 0.0
    %2172 = vmatpush1.xpose.msra.mxu0 0.0
    %2173 = vmatprep.subr.mxu0 0.0
    %2174 = vmatpush1.xpose.msra.mxu0 0.0
    %2175 = vmatprep.subr.mxu0 0.0
    %2176 = vmatpush1.xpose.msra.mxu0 0.0
    %2177 = vmatprep.subr.mxu0 0.0
    %2178 = vmatpush1.xpose.msra.mxu0 0.0
    %2179 = vmatprep.subr.mxu0 0.0
    %2180 = vmatpush1.xpose.msra.mxu0 0.0
    %2181 = vmatprep.subr.mxu0 0.0
    %2182 = vmatpush1.xpose.msra.mxu0 0.0
    %2183 = vmatprep.subr.mxu0 0.0
    %2184 = vmatpush1.xpose.msra.mxu0 0.0
    %2185 = vmatprep.subr.mxu0 0.0
    %2186 = vmatpush1.xpose.msra.mxu0 0.0
    %2187 = vmatprep.subr.mxu0 0.0
    %2188 = vmatpush1.xpose.msra.mxu0 0.0
    %2189 = vmatprep.subr.mxu0 0.0
    %2190 = vmatpush1.xpose.msra.mxu0 0.0
    %2191 = vmatprep.subr.mxu0 0.0
    %2192 = vmatpush1.xpose.msra.mxu0 0.0
    %2193 = vmatprep.subr.mxu0 0.0
    %2194 = vmatpush1.xpose.msra.mxu0 %v2163
    %2195 = vmatprep.subr.mxu0 0.0
    %2196 = vmatpush1.xpose.msra.mxu0 %v2161
    %2197 = vmatprep.subr.mxu0 0.0
    %2198 = vmatpush2.xpose.msra.mxu0 0.0
    %2199 = vmatprep.subr.mxu0 0.0
    %2200 = vmatpush2.xpose.msra.mxu0 0.0
    %2201 = vmatprep.subr.mxu0 0.0
    %2202 = vmatpush2.xpose.msra.mxu0 0.0
    %2203 = vmatprep.subr.mxu0 0.0
    %2204 = vmatpush2.xpose.msra.mxu0 0.0
    %2205 = vmatprep.subr.mxu0 0.0
    %2206 = vmatpush2.xpose.msra.mxu0 0.0
    %2207 = vmatprep.subr.mxu0 0.0
    %2208 = vmatpush2.xpose.msra.mxu0 0.0
    %2209 = vmatprep.subr.mxu0 0.0
    %2210 = vmatpush2.xpose.msra.mxu0 0.0
    %2211 = vmatprep.subr.mxu0 0.0
    %2212 = vmatpush2.xpose.msra.mxu0 0.0
    %2213 = vmatprep.subr.mxu0 0.0
    %2214 = vmatpush2.xpose.msra.mxu0 0.0
    %2215 = vmatprep.subr.mxu0 0.0
    %2216 = vmatpush2.xpose.msra.mxu0 0.0
    %2217 = vmatprep.subr.mxu0 0.0
    %2218 = vmatpush2.xpose.msra.mxu0 0.0
    %2219 = vmatprep.subr.mxu0 0.0
    %2220 = vmatpush2.xpose.msra.mxu0 0.0
    %2221 = vmatprep.subr.mxu0 0.0
    %2222 = vmatpush2.xpose.msra.mxu0 0.0
    %2223 = vmatprep.subr.mxu0 0.0
    %2224 = vmatpush2.xpose.msra.mxu0 0.0
    %2225 = vmatprep.subr.mxu0 0.0
    %2226 = vmatpush2.xpose.msra.mxu0 0.0
    %2227 = vmatprep.subr.mxu0 0.0
    %2228 = vmatpush2.xpose.msra.mxu0 0.0
    %2229 = vmatprep.mubr.f32.mxu0 0.0
    %2230 = vmatmul.mubr.f32.gmra.mxu0 %v2157
    %v2231 = vpop.f32.mrf.mxu0
    %v2232 = vadd.f32 0.0, %v2231
    %v2233 = vpop.f32.mrf.mxu0
    %2234 = vmatprep.mubr.f32.mxu0 0.0
    %2235 = vmatmul.mubr.f32.gmra.mxu0 %v2159
    %v2236 = vpop.f32.mrf.mxu0
    %v2237 = vadd.f32 0.0, %v2236
    %v2238 = vpop.f32.mrf.mxu0
    %2239 = vdwg.mxu0
    %2242 = vrot.lane.b32.xlu0 %v1993, 120
    %v2243 = vpop.permute.xlu0 %2242
    %2244 = vrot.lane.b32.xlu0 %v1998, 120
    %v2245 = vpop.permute.xlu0 %2244
    %v2246 = vsel %vm406, %v1993, 0
    %v2248 = vsel %vm406, %v1998, 0
    %v2250 = vsel %vm406, %v2243, 0
    %v2252 = vsel %vm406, %v2245, 0
    %2254 = vmatprep.subr.mxu0 0.0
    %2255 = vmatpush1.xpose.msra.mxu0 0.0
    %2256 = vmatprep.subr.mxu0 0.0
    %2257 = vmatpush1.xpose.msra.mxu0 0.0
    %2258 = vmatprep.subr.mxu0 0.0
    %2259 = vmatpush1.xpose.msra.mxu0 0.0
    %2260 = vmatprep.subr.mxu0 0.0
    %2261 = vmatpush1.xpose.msra.mxu0 0.0
    %2262 = vmatprep.subr.mxu0 0.0
    %2263 = vmatpush1.xpose.msra.mxu0 0.0
    %2264 = vmatprep.subr.mxu0 0.0
    %2265 = vmatpush1.xpose.msra.mxu0 0.0
    %2266 = vmatprep.subr.mxu0 0.0
    %2267 = vmatpush1.xpose.msra.mxu0 0.0
    %2268 = vmatprep.subr.mxu0 0.0
    %2269 = vmatpush1.xpose.msra.mxu0 0.0
    %2270 = vmatprep.subr.mxu0 0.0
    %2271 = vmatpush1.xpose.msra.mxu0 0.0
    %2272 = vmatprep.subr.mxu0 0.0
    %2273 = vmatpush1.xpose.msra.mxu0 0.0
    %2274 = vmatprep.subr.mxu0 0.0
    %2275 = vmatpush1.xpose.msra.mxu0 0.0
    %2276 = vmatprep.subr.mxu0 0.0
    %2277 = vmatpush1.xpose.msra.mxu0 0.0
    %2278 = vmatprep.subr.mxu0 0.0
    %2279 = vmatpush1.xpose.msra.mxu0 0.0
    %2280 = vmatprep.subr.mxu0 0.0
    %2281 = vmatpush1.xpose.msra.mxu0 0.0
    %2282 = vmatprep.subr.mxu0 0.0
    %2283 = vmatpush1.xpose.msra.mxu0 %v2252
    %2284 = vmatprep.subr.mxu0 0.0
    %2285 = vmatpush1.xpose.msra.mxu0 %v2250
    %2286 = vmatprep.subr.mxu0 0.0
    %2287 = vmatpush2.xpose.msra.mxu0 0.0
    %2288 = vmatprep.subr.mxu0 0.0
    %2289 = vmatpush2.xpose.msra.mxu0 0.0
    %2290 = vmatprep.subr.mxu0 0.0
    %2291 = vmatpush2.xpose.msra.mxu0 0.0
    %2292 = vmatprep.subr.mxu0 0.0
    %2293 = vmatpush2.xpose.msra.mxu0 0.0
    %2294 = vmatprep.subr.mxu0 0.0
    %2295 = vmatpush2.xpose.msra.mxu0 0.0
    %2296 = vmatprep.subr.mxu0 0.0
    %2297 = vmatpush2.xpose.msra.mxu0 0.0
    %2298 = vmatprep.subr.mxu0 0.0
    %2299 = vmatpush2.xpose.msra.mxu0 0.0
    %2300 = vmatprep.subr.mxu0 0.0
    %2301 = vmatpush2.xpose.msra.mxu0 0.0
    %2302 = vmatprep.subr.mxu0 0.0
    %2303 = vmatpush2.xpose.msra.mxu0 0.0
    %2304 = vmatprep.subr.mxu0 0.0
    %2305 = vmatpush2.xpose.msra.mxu0 0.0
    %2306 = vmatprep.subr.mxu0 0.0
    %2307 = vmatpush2.xpose.msra.mxu0 0.0
    %2308 = vmatprep.subr.mxu0 0.0
    %2309 = vmatpush2.xpose.msra.mxu0 0.0
    %2310 = vmatprep.subr.mxu0 0.0
    %2311 = vmatpush2.xpose.msra.mxu0 0.0
    %2312 = vmatprep.subr.mxu0 0.0
    %2313 = vmatpush2.xpose.msra.mxu0 0.0
    %2314 = vmatprep.subr.mxu0 0.0
    %2315 = vmatpush2.xpose.msra.mxu0 0.0
    %2316 = vmatprep.subr.mxu0 0.0
    %2317 = vmatpush2.xpose.msra.mxu0 0.0
    %2318 = vmatprep.mubr.f32.mxu0 0.0
    %2319 = vmatmul.mubr.f32.gmra.mxu0 %v2246
    %v2320 = vpop.f32.mrf.mxu0
    %v2321 = vadd.f32 0.0, %v2320
    %v2322 = vpop.f32.mrf.mxu0
    %2323 = vmatprep.mubr.f32.mxu0 0.0
    %2324 = vmatmul.mubr.f32.gmra.mxu0 %v2248
    %v2325 = vpop.f32.mrf.mxu0
    %v2326 = vadd.f32 0.0, %v2325
    %v2327 = vpop.f32.mrf.mxu0
    %2328 = vdwg.mxu0
    %2331 = vrot.lane.b32.xlu0 %v2068, 120
    %v2332 = vpop.permute.xlu0 %2331
    %2333 = vrot.lane.b32.xlu0 %v2073, 120
    %v2334 = vpop.permute.xlu0 %2333
    %v2335 = vsel %vm406, %v2068, 0
    %v2337 = vsel %vm406, %v2073, 0
    %v2339 = vsel %vm406, %v2332, 0
    %v2341 = vsel %vm406, %v2334, 0
    %2343 = vmatprep.subr.mxu0 0.0
    %2344 = vmatpush1.xpose.msra.mxu0 0.0
    %2345 = vmatprep.subr.mxu0 0.0
    %2346 = vmatpush1.xpose.msra.mxu0 0.0
    %2347 = vmatprep.subr.mxu0 0.0
    %2348 = vmatpush1.xpose.msra.mxu0 0.0
    %2349 = vmatprep.subr.mxu0 0.0
    %2350 = vmatpush1.xpose.msra.mxu0 0.0
    %2351 = vmatprep.subr.mxu0 0.0
    %2352 = vmatpush1.xpose.msra.mxu0 0.0
    %2353 = vmatprep.subr.mxu0 0.0
    %2354 = vmatpush1.xpose.msra.mxu0 0.0
    %2355 = vmatprep.subr.mxu0 0.0
    %2356 = vmatpush1.xpose.msra.mxu0 0.0
    %2357 = vmatprep.subr.mxu0 0.0
    %2358 = vmatpush1.xpose.msra.mxu0 0.0
    %2359 = vmatprep.subr.mxu0 0.0
    %2360 = vmatpush1.xpose.msra.mxu0 0.0
    %2361 = vmatprep.subr.mxu0 0.0
    %2362 = vmatpush1.xpose.msra.mxu0 0.0
    %2363 = vmatprep.subr.mxu0 0.0
    %2364 = vmatpush1.xpose.msra.mxu0 0.0
    %2365 = vmatprep.subr.mxu0 0.0
    %2366 = vmatpush1.xpose.msra.mxu0 0.0
    %2367 = vmatprep.subr.mxu0 0.0
    %2368 = vmatpush1.xpose.msra.mxu0 0.0
    %2369 = vmatprep.subr.mxu0 0.0
    %2370 = vmatpush1.xpose.msra.mxu0 0.0
    %2371 = vmatprep.subr.mxu0 0.0
    %2372 = vmatpush1.xpose.msra.mxu0 %v2341
    %2373 = vmatprep.subr.mxu0 0.0
    %2374 = vmatpush1.xpose.msra.mxu0 %v2339
    %2375 = vmatprep.subr.mxu0 0.0
    %2376 = vmatpush2.xpose.msra.mxu0 0.0
    %2377 = vmatprep.subr.mxu0 0.0
    %2378 = vmatpush2.xpose.msra.mxu0 0.0
    %2379 = vmatprep.subr.mxu0 0.0
    %2380 = vmatpush2.xpose.msra.mxu0 0.0
    %2381 = vmatprep.subr.mxu0 0.0
    %2382 = vmatpush2.xpose.msra.mxu0 0.0
    %2383 = vmatprep.subr.mxu0 0.0
    %2384 = vmatpush2.xpose.msra.mxu0 0.0
    %2385 = vmatprep.subr.mxu0 0.0
    %2386 = vmatpush2.xpose.msra.mxu0 0.0
    %2387 = vmatprep.subr.mxu0 0.0
    %2388 = vmatpush2.xpose.msra.mxu0 0.0
    %2389 = vmatprep.subr.mxu0 0.0
    %2390 = vmatpush2.xpose.msra.mxu0 0.0
    %2391 = vmatprep.subr.mxu0 0.0
    %2392 = vmatpush2.xpose.msra.mxu0 0.0
    %2393 = vmatprep.subr.mxu0 0.0
    %2394 = vmatpush2.xpose.msra.mxu0 0.0
    %2395 = vmatprep.subr.mxu0 0.0
    %2396 = vmatpush2.xpose.msra.mxu0 0.0
    %2397 = vmatprep.subr.mxu0 0.0
    %2398 = vmatpush2.xpose.msra.mxu0 0.0
    %2399 = vmatprep.subr.mxu0 0.0
    %2400 = vmatpush2.xpose.msra.mxu0 0.0
    %2401 = vmatprep.subr.mxu0 0.0
    %2402 = vmatpush2.xpose.msra.mxu0 0.0
    %2403 = vmatprep.subr.mxu0 0.0
    %2404 = vmatpush2.xpose.msra.mxu0 0.0
    %2405 = vmatprep.subr.mxu0 0.0
    %2406 = vmatpush2.xpose.msra.mxu0 0.0
    %2407 = vmatprep.mubr.f32.mxu0 0.0
    %2408 = vmatmul.mubr.f32.gmra.mxu0 %v2335
    %v2409 = vpop.f32.mrf.mxu0
    %v2410 = vadd.f32 0.0, %v2409
    %v2411 = vpop.f32.mrf.mxu0
    %2412 = vmatprep.mubr.f32.mxu0 0.0
    %2413 = vmatmul.mubr.f32.gmra.mxu0 %v2337
    %v2414 = vpop.f32.mrf.mxu0
    %v2415 = vadd.f32 0.0, %v2414
    %v2416 = vpop.f32.mrf.mxu0
    %2417 = vdwg.mxu0
    %2420 = vrot.lane.b32.xlu0 %v2143, 120
    %v2421 = vpop.permute.xlu0 %2420
    %2422 = vrot.lane.b32.xlu0 %v2148, 120
    %v2423 = vpop.permute.xlu0 %2422
    %v2424 = vsel %vm406, %v2143, 0
    %v2426 = vsel %vm406, %v2148, 0
    %v2428 = vsel %vm406, %v2421, 0
    %v2430 = vsel %vm406, %v2423, 0
    %2432 = vmatprep.subr.mxu0 0.0
    %2433 = vmatpush1.xpose.msra.mxu0 0.0
    %2434 = vmatprep.subr.mxu0 0.0
    %2435 = vmatpush1.xpose.msra.mxu0 0.0
    %2436 = vmatprep.subr.mxu0 0.0
    %2437 = vmatpush1.xpose.msra.mxu0 0.0
    %2438 = vmatprep.subr.mxu0 0.0
    %2439 = vmatpush1.xpose.msra.mxu0 0.0
    %2440 = vmatprep.subr.mxu0 0.0
    %2441 = vmatpush1.xpose.msra.mxu0 0.0
    %2442 = vmatprep.subr.mxu0 0.0
    %2443 = vmatpush1.xpose.msra.mxu0 0.0
    %2444 = vmatprep.subr.mxu0 0.0
    %2445 = vmatpush1.xpose.msra.mxu0 0.0
    %2446 = vmatprep.subr.mxu0 0.0
    %2447 = vmatpush1.xpose.msra.mxu0 0.0
    %2448 = vmatprep.subr.mxu0 0.0
    %2449 = vmatpush1.xpose.msra.mxu0 0.0
    %2450 = vmatprep.subr.mxu0 0.0
    %2451 = vmatpush1.xpose.msra.mxu0 0.0
    %2452 = vmatprep.subr.mxu0 0.0
    %2453 = vmatpush1.xpose.msra.mxu0 0.0
    %2454 = vmatprep.subr.mxu0 0.0
    %2455 = vmatpush1.xpose.msra.mxu0 0.0
    %2456 = vmatprep.subr.mxu0 0.0
    %2457 = vmatpush1.xpose.msra.mxu0 0.0
    %2458 = vmatprep.subr.mxu0 0.0
    %2459 = vmatpush1.xpose.msra.mxu0 0.0
    %2460 = vmatprep.subr.mxu0 0.0
    %2461 = vmatpush1.xpose.msra.mxu0 %v2430
    %2462 = vmatprep.subr.mxu0 0.0
    %2463 = vmatpush1.xpose.msra.mxu0 %v2428
    %2464 = vmatprep.subr.mxu0 0.0
    %2465 = vmatpush2.xpose.msra.mxu0 0.0
    %2466 = vmatprep.subr.mxu0 0.0
    %2467 = vmatpush2.xpose.msra.mxu0 0.0
    %2468 = vmatprep.subr.mxu0 0.0
    %2469 = vmatpush2.xpose.msra.mxu0 0.0
    %2470 = vmatprep.subr.mxu0 0.0
    %2471 = vmatpush2.xpose.msra.mxu0 0.0
    %2472 = vmatprep.subr.mxu0 0.0
    %2473 = vmatpush2.xpose.msra.mxu0 0.0
    %2474 = vmatprep.subr.mxu0 0.0
    %2475 = vmatpush2.xpose.msra.mxu0 0.0
    %2476 = vmatprep.subr.mxu0 0.0
    %2477 = vmatpush2.xpose.msra.mxu0 0.0
    %2478 = vmatprep.subr.mxu0 0.0
    %2479 = vmatpush2.xpose.msra.mxu0 0.0
    %2480 = vmatprep.subr.mxu0 0.0
    %2481 = vmatpush2.xpose.msra.mxu0 0.0
    %2482 = vmatprep.subr.mxu0 0.0
    %2483 = vmatpush2.xpose.msra.mxu0 0.0
    %2484 = vmatprep.subr.mxu0 0.0
    %2485 = vmatpush2.xpose.msra.mxu0 0.0
    %2486 = vmatprep.subr.mxu0 0.0
    %2487 = vmatpush2.xpose.msra.mxu0 0.0
    %2488 = vmatprep.subr.mxu0 0.0
    %2489 = vmatpush2.xpose.msra.mxu0 0.0
    %2490 = vmatprep.subr.mxu0 0.0
    %2491 = vmatpush2.xpose.msra.mxu0 0.0
    %2492 = vmatprep.subr.mxu0 0.0
    %2493 = vmatpush2.xpose.msra.mxu0 0.0
    %2494 = vmatprep.subr.mxu0 0.0
    %2495 = vmatpush2.xpose.msra.mxu0 0.0
    %2496 = vmatprep.mubr.f32.mxu0 0.0
    %2497 = vmatmul.mubr.f32.gmra.mxu0 %v2424
    %v2498 = vpop.f32.mrf.mxu0
    %v2499 = vadd.f32 0.0, %v2498
    %v2500 = vpop.f32.mrf.mxu0
    %2501 = vmatprep.mubr.f32.mxu0 0.0
    %2502 = vmatmul.mubr.f32.gmra.mxu0 %v2426
    %v2503 = vpop.f32.mrf.mxu0
    %v2504 = vadd.f32 0.0, %v2503
    %v2505 = vpop.f32.mrf.mxu0
    %2506 = vdwg.mxu0
    %v2507 = vmul.f32 %v2232, 0.35355338
    %v2508 = vmul.f32 %v2237, 0.35355338
    %v2509 = vmul.f32 %v2321, 0.35355338
    %v2510 = vmul.f32 %v2326, 0.35355338
    %v2511 = vmul.f32 %v2410, 0.35355338
    %v2512 = vmul.f32 %v2415, 0.35355338
    %v2513 = vmul.f32 %v2499, 0.35355338
    %v2514 = vmul.f32 %v2504, 0.35355338
    %v2515 = vadd.f32 %v2507, %v35
    %v2516 = vadd.f32 %v2508, %v36
    %v2517 = vadd.f32 %v2509, %v35
    %v2518 = vadd.f32 %v2510, %v36
    %v2519 = vadd.f32 %v2511, %v35
    %v2520 = vadd.f32 %v2512, %v36
    %v2521 = vadd.f32 %v2513, %v35
    %v2522 = vadd.f32 %v2514, %v36
    %v2523 = vsel %vm773, %v2515, -inf
    %2524 = vmax.xlane.f32.xlu0 %v2523
    %v2525 = vpop.xlane.xlu0 %2524
    %v2526 = vsel %vm773, %v2516, -inf
    %2527 = vmax.xlane.f32.xlu0 %v2526
    %v2528 = vpop.xlane.xlu0 %2527
    %v2529 = vsel %vm773, %v2517, -inf
    %2530 = vmax.xlane.f32.xlu0 %v2529
    %v2531 = vpop.xlane.xlu0 %2530
    %v2532 = vsel %vm773, %v2518, -inf
    %2533 = vmax.xlane.f32.xlu0 %v2532
    %v2534 = vpop.xlane.xlu0 %2533
    %v2535 = vsel %vm773, %v2519, -inf
    %2536 = vmax.xlane.f32.xlu0 %v2535
    %v2537 = vpop.xlane.xlu0 %2536
    %v2538 = vsel %vm773, %v2520, -inf
    %2539 = vmax.xlane.f32.xlu0 %v2538
    %v2540 = vpop.xlane.xlu0 %2539
    %v2541 = vsel %vm773, %v2521, -inf
    %2542 = vmax.xlane.f32.xlu0 %v2541
    %v2543 = vpop.xlane.xlu0 %2542
    %v2544 = vsel %vm773, %v2522, -inf
    %2545 = vmax.xlane.f32.xlu0 %v2544
    %v2546 = vpop.xlane.xlu0 %2545
    %v2547 = vsub.f32 %v2515, %v2525
    %v2548 = vsub.f32 %v2516, %v2528
    %v2549 = vsub.f32 %v2517, %v2531
    %v2550 = vsub.f32 %v2518, %v2534
    %v2551 = vsub.f32 %v2519, %v2537
    %v2552 = vsub.f32 %v2520, %v2540
    %v2553 = vsub.f32 %v2521, %v2543
    %v2554 = vsub.f32 %v2522, %v2546
    %v2555 = vmul.f32 %v2547, 1.442695
    %v2556 = vpow.pop %v2555
    %v2557 = vmul.f32 %v2548, 1.442695
    %v2558 = vpow.pop %v2557
    %v2559 = vmul.f32 %v2549, 1.442695
    %v2560 = vpow.pop %v2559
    %v2561 = vmul.f32 %v2550, 1.442695
    %v2562 = vpow.pop %v2561
    %v2563 = vmul.f32 %v2551, 1.442695
    %v2564 = vpow.pop %v2563
    %v2565 = vmul.f32 %v2552, 1.442695
    %v2566 = vpow.pop %v2565
    %v2567 = vmul.f32 %v2553, 1.442695
    %v2568 = vpow.pop %v2567
    %v2569 = vmul.f32 %v2554, 1.442695
    %v2570 = vpow.pop %v2569
    %v2571 = vsel %vm773, %v2556, 0.0
    %2572 = vadd.xlane.f32.xlu0 %v2571
    %v2573 = vpop.xlane.xlu0 %2572
    %v2574 = vsel %vm773, %v2558, 0.0
    %2575 = vadd.xlane.f32.xlu0 %v2574
    %v2576 = vpop.xlane.xlu0 %2575
    %v2577 = vsel %vm773, %v2560, 0.0
    %2578 = vadd.xlane.f32.xlu0 %v2577
    %v2579 = vpop.xlane.xlu0 %2578
    %v2580 = vsel %vm773, %v2562, 0.0
    %2581 = vadd.xlane.f32.xlu0 %v2580
    %v2582 = vpop.xlane.xlu0 %2581
    %v2583 = vsel %vm773, %v2564, 0.0
    %2584 = vadd.xlane.f32.xlu0 %v2583
    %v2585 = vpop.xlane.xlu0 %2584
    %v2586 = vsel %vm773, %v2566, 0.0
    %2587 = vadd.xlane.f32.xlu0 %v2586
    %v2588 = vpop.xlane.xlu0 %2587
    %v2589 = vsel %vm773, %v2568, 0.0
    %2590 = vadd.xlane.f32.xlu0 %v2589
    %v2591 = vpop.xlane.xlu0 %2590
    %v2592 = vsel %vm773, %v2570, 0.0
    %2593 = vadd.xlane.f32.xlu0 %v2592
    %v2594 = vpop.xlane.xlu0 %2593
    %v2595 = vrcp.pop %v2573
    %v2596 = vmul.f32 %v2556, %v2595
    %v2597 = vrcp.pop %v2576
    %v2598 = vmul.f32 %v2558, %v2597
    %v2599 = vrcp.pop %v2579
    %v2600 = vmul.f32 %v2560, %v2599
    %v2601 = vrcp.pop %v2582
    %v2602 = vmul.f32 %v2562, %v2601
    %v2603 = vrcp.pop %v2585
    %v2604 = vmul.f32 %v2564, %v2603
    %v2605 = vrcp.pop %v2588
    %v2606 = vmul.f32 %v2566, %v2605
    %v2607 = vrcp.pop %v2591
    %v2608 = vmul.f32 %v2568, %v2607
    %v2609 = vrcp.pop %v2594
    %v2610 = vmul.f32 %v2570, %v2609
    %2611 = vrot.lane.b32.xlu0 %v1918, 112
    %v2612 = vpop.permute.xlu0 %2611
    %2613 = vrot.lane.b32.xlu0 %v1923, 112
    %v2614 = vpop.permute.xlu0 %2613
    %v2618 = vsel %vm773, %v2596, 0
    %v2621 = vsel %vm773, %v2598, 0
    %2623 = vmatprep.subr.mxu0 0.0
    %2624 = vmatpush1.msra.mxu0 0.0
    %2625 = vmatprep.subr.mxu0 0.0
    %2626 = vmatpush1.msra.mxu0 0.0
    %2627 = vmatprep.subr.mxu0 0.0
    %2628 = vmatpush1.msra.mxu0 0.0
    %2629 = vmatprep.subr.mxu0 0.0
    %2630 = vmatpush1.msra.mxu0 0.0
    %2631 = vmatprep.subr.mxu0 0.0
    %2632 = vmatpush1.msra.mxu0 0.0
    %2633 = vmatprep.subr.mxu0 0.0
    %2634 = vmatpush1.msra.mxu0 0.0
    %2635 = vmatprep.subr.mxu0 0.0
    %2636 = vmatpush1.msra.mxu0 0.0
    %2637 = vmatprep.subr.mxu0 0.0
    %2638 = vmatpush1.msra.mxu0 0.0
    %2639 = vmatprep.subr.mxu0 0.0
    %2640 = vmatpush1.msra.mxu0 0.0
    %2641 = vmatprep.subr.mxu0 0.0
    %2642 = vmatpush1.msra.mxu0 0.0
    %2643 = vmatprep.subr.mxu0 0.0
    %2644 = vmatpush1.msra.mxu0 0.0
    %2645 = vmatprep.subr.mxu0 0.0
    %2646 = vmatpush1.msra.mxu0 0.0
    %2647 = vmatprep.subr.mxu0 0.0
    %2648 = vmatpush1.msra.mxu0 0.0
    %2649 = vmatprep.subr.mxu0 0.0
    %2650 = vmatpush1.msra.mxu0 0.0
    %2651 = vmatprep.subr.mxu0 0.0
    %2652 = vmatpush1.msra.mxu0 %v2614
    %2653 = vmatprep.subr.mxu0 0.0
    %2654 = vmatpush1.msra.mxu0 %v2612
    %2655 = vmatprep.subr.mxu0 0.0
    %2656 = vmatpush2.msra.mxu0 0.0
    %2657 = vmatprep.subr.mxu0 0.0
    %2658 = vmatpush2.msra.mxu0 0.0
    %2659 = vmatprep.subr.mxu0 0.0
    %2660 = vmatpush2.msra.mxu0 0.0
    %2661 = vmatprep.subr.mxu0 0.0
    %2662 = vmatpush2.msra.mxu0 0.0
    %2663 = vmatprep.subr.mxu0 0.0
    %2664 = vmatpush2.msra.mxu0 0.0
    %2665 = vmatprep.subr.mxu0 0.0
    %2666 = vmatpush2.msra.mxu0 0.0
    %2667 = vmatprep.subr.mxu0 0.0
    %2668 = vmatpush2.msra.mxu0 0.0
    %2669 = vmatprep.subr.mxu0 0.0
    %2670 = vmatpush2.msra.mxu0 0.0
    %2671 = vmatprep.subr.mxu0 0.0
    %2672 = vmatpush2.msra.mxu0 0.0
    %2673 = vmatprep.subr.mxu0 0.0
    %2674 = vmatpush2.msra.mxu0 0.0
    %2675 = vmatprep.subr.mxu0 0.0
    %2676 = vmatpush2.msra.mxu0 0.0
    %2677 = vmatprep.subr.mxu0 0.0
    %2678 = vmatpush2.msra.mxu0 0.0
    %2679 = vmatprep.subr.mxu0 0.0
    %2680 = vmatpush2.msra.mxu0 0.0
    %2681 = vmatprep.subr.mxu0 0.0
    %2682 = vmatpush2.msra.mxu0 0.0
    %2683 = vmatprep.subr.mxu0 0.0
    %2684 = vmatpush2.msra.mxu0 0.0
    %2685 = vmatprep.subr.mxu0 0.0
    %2686 = vmatpush2.msra.mxu0 0.0
    %2687 = vmatprep.mubr.f32.mxu0 0.0
    %2688 = vmatmul.mubr.f32.gmra.mxu0 %v2618
    %v2689 = vpop.f32.mrf.mxu0
    %v2690 = vadd.f32 0.0, %v2689
    %v2691 = vpop.f32.mrf.mxu0
    %2692 = vmatprep.mubr.f32.mxu0 0.0
    %2693 = vmatmul.mubr.f32.gmra.mxu0 %v2621
    %v2694 = vpop.f32.mrf.mxu0
    %v2695 = vadd.f32 0.0, %v2694
    %v2696 = vpop.f32.mrf.mxu0
    %2697 = vdwg.mxu0
    %2698 = vrot.lane.b32.xlu0 %v1993, 112
    %v2699 = vpop.permute.xlu0 %2698
    %2700 = vrot.lane.b32.xlu0 %v1998, 112
    %v2701 = vpop.permute.xlu0 %2700
    %v2705 = vsel %vm773, %v2600, 0
    %v2708 = vsel %vm773, %v2602, 0
    %2710 = vmatprep.subr.mxu0 0.0
    %2711 = vmatpush1.msra.mxu0 0.0
    %2712 = vmatprep.subr.mxu0 0.0
    %2713 = vmatpush1.msra.mxu0 0.0
    %2714 = vmatprep.subr.mxu0 0.0
    %2715 = vmatpush1.msra.mxu0 0.0
    %2716 = vmatprep.subr.mxu0 0.0
    %2717 = vmatpush1.msra.mxu0 0.0
    %2718 = vmatprep.subr.mxu0 0.0
    %2719 = vmatpush1.msra.mxu0 0.0
    %2720 = vmatprep.subr.mxu0 0.0
    %2721 = vmatpush1.msra.mxu0 0.0
    %2722 = vmatprep.subr.mxu0 0.0
    %2723 = vmatpush1.msra.mxu0 0.0
    %2724 = vmatprep.subr.mxu0 0.0
    %2725 = vmatpush1.msra.mxu0 0.0
    %2726 = vmatprep.subr.mxu0 0.0
    %2727 = vmatpush1.msra.mxu0 0.0
    %2728 = vmatprep.subr.mxu0 0.0
    %2729 = vmatpush1.msra.mxu0 0.0
    %2730 = vmatprep.subr.mxu0 0.0
    %2731 = vmatpush1.msra.mxu0 0.0
    %2732 = vmatprep.subr.mxu0 0.0
    %2733 = vmatpush1.msra.mxu0 0.0
    %2734 = vmatprep.subr.mxu0 0.0
    %2735 = vmatpush1.msra.mxu0 0.0
    %2736 = vmatprep.subr.mxu0 0.0
    %2737 = vmatpush1.msra.mxu0 0.0
    %2738 = vmatprep.subr.mxu0 0.0
    %2739 = vmatpush1.msra.mxu0 %v2701
    %2740 = vmatprep.subr.mxu0 0.0
    %2741 = vmatpush1.msra.mxu0 %v2699
    %2742 = vmatprep.subr.mxu0 0.0
    %2743 = vmatpush2.msra.mxu0 0.0
    %2744 = vmatprep.subr.mxu0 0.0
    %2745 = vmatpush2.msra.mxu0 0.0
    %2746 = vmatprep.subr.mxu0 0.0
    %2747 = vmatpush2.msra.mxu0 0.0
    %2748 = vmatprep.subr.mxu0 0.0
    %2749 = vmatpush2.msra.mxu0 0.0
    %2750 = vmatprep.subr.mxu0 0.0
    %2751 = vmatpush2.msra.mxu0 0.0
    %2752 = vmatprep.subr.mxu0 0.0
    %2753 = vmatpush2.msra.mxu0 0.0
    %2754 = vmatprep.subr.mxu0 0.0
    %2755 = vmatpush2.msra.mxu0 0.0
    %2756 = vmatprep.subr.mxu0 0.0
    %2757 = vmatpush2.msra.mxu0 0.0
    %2758 = vmatprep.subr.mxu0 0.0
    %2759 = vmatpush2.msra.mxu0 0.0
    %2760 = vmatprep.subr.mxu0 0.0
    %2761 = vmatpush2.msra.mxu0 0.0
    %2762 = vmatprep.subr.mxu0 0.0
    %2763 = vmatpush2.msra.mxu0 0.0
    %2764 = vmatprep.subr.mxu0 0.0
    %2765 = vmatpush2.msra.mxu0 0.0
    %2766 = vmatprep.subr.mxu0 0.0
    %2767 = vmatpush2.msra.mxu0 0.0
    %2768 = vmatprep.subr.mxu0 0.0
    %2769 = vmatpush2.msra.mxu0 0.0
    %2770 = vmatprep.subr.mxu0 0.0
    %2771 = vmatpush2.msra.mxu0 0.0
    %2772 = vmatprep.subr.mxu0 0.0
    %2773 = vmatpush2.msra.mxu0 0.0
    %2774 = vmatprep.mubr.f32.mxu0 0.0
    %2775 = vmatmul.mubr.f32.gmra.mxu0 %v2705
    %v2776 = vpop.f32.mrf.mxu0
    %v2777 = vadd.f32 0.0, %v2776
    %v2778 = vpop.f32.mrf.mxu0
    %2779 = vmatprep.mubr.f32.mxu0 0.0
    %2780 = vmatmul.mubr.f32.gmra.mxu0 %v2708
    %v2781 = vpop.f32.mrf.mxu0
    %v2782 = vadd.f32 0.0, %v2781
    %v2783 = vpop.f32.mrf.mxu0
    %2784 = vdwg.mxu0
    %2785 = vrot.lane.b32.xlu0 %v2068, 112
    %v2786 = vpop.permute.xlu0 %2785
    %2787 = vrot.lane.b32.xlu0 %v2073, 112
    %v2788 = vpop.permute.xlu0 %2787
    %v2792 = vsel %vm773, %v2604, 0
    %v2795 = vsel %vm773, %v2606, 0
    %2797 = vmatprep.subr.mxu0 0.0
    %2798 = vmatpush1.msra.mxu0 0.0
    %2799 = vmatprep.subr.mxu0 0.0
    %2800 = vmatpush1.msra.mxu0 0.0
    %2801 = vmatprep.subr.mxu0 0.0
    %2802 = vmatpush1.msra.mxu0 0.0
    %2803 = vmatprep.subr.mxu0 0.0
    %2804 = vmatpush1.msra.mxu0 0.0
    %2805 = vmatprep.subr.mxu0 0.0
    %2806 = vmatpush1.msra.mxu0 0.0
    %2807 = vmatprep.subr.mxu0 0.0
    %2808 = vmatpush1.msra.mxu0 0.0
    %2809 = vmatprep.subr.mxu0 0.0
    %2810 = vmatpush1.msra.mxu0 0.0
    %2811 = vmatprep.subr.mxu0 0.0
    %2812 = vmatpush1.msra.mxu0 0.0
    %2813 = vmatprep.subr.mxu0 0.0
    %2814 = vmatpush1.msra.mxu0 0.0
    %2815 = vmatprep.subr.mxu0 0.0
    %2816 = vmatpush1.msra.mxu0 0.0
    %2817 = vmatprep.subr.mxu0 0.0
    %2818 = vmatpush1.msra.mxu0 0.0
    %2819 = vmatprep.subr.mxu0 0.0
    %2820 = vmatpush1.msra.mxu0 0.0
    %2821 = vmatprep.subr.mxu0 0.0
    %2822 = vmatpush1.msra.mxu0 0.0
    %2823 = vmatprep.subr.mxu0 0.0
    %2824 = vmatpush1.msra.mxu0 0.0
    %2825 = vmatprep.subr.mxu0 0.0
    %2826 = vmatpush1.msra.mxu0 %v2788
    %2827 = vmatprep.subr.mxu0 0.0
    %2828 = vmatpush1.msra.mxu0 %v2786
    %2829 = vmatprep.subr.mxu0 0.0
    %2830 = vmatpush2.msra.mxu0 0.0
    %2831 = vmatprep.subr.mxu0 0.0
    %2832 = vmatpush2.msra.mxu0 0.0
    %2833 = vmatprep.subr.mxu0 0.0
    %2834 = vmatpush2.msra.mxu0 0.0
    %2835 = vmatprep.subr.mxu0 0.0
    %2836 = vmatpush2.msra.mxu0 0.0
    %2837 = vmatprep.subr.mxu0 0.0
    %2838 = vmatpush2.msra.mxu0 0.0
    %2839 = vmatprep.subr.mxu0 0.0
    %2840 = vmatpush2.msra.mxu0 0.0
    %2841 = vmatprep.subr.mxu0 0.0
    %2842 = vmatpush2.msra.mxu0 0.0
    %2843 = vmatprep.subr.mxu0 0.0
    %2844 = vmatpush2.msra.mxu0 0.0
    %2845 = vmatprep.subr.mxu0 0.0
    %2846 = vmatpush2.msra.mxu0 0.0
    %2847 = vmatprep.subr.mxu0 0.0
    %2848 = vmatpush2.msra.mxu0 0.0
    %2849 = vmatprep.subr.mxu0 0.0
    %2850 = vmatpush2.msra.mxu0 0.0
    %2851 = vmatprep.subr.mxu0 0.0
    %2852 = vmatpush2.msra.mxu0 0.0
    %2853 = vmatprep.subr.mxu0 0.0
    %2854 = vmatpush2.msra.mxu0 0.0
    %2855 = vmatprep.subr.mxu0 0.0
    %2856 = vmatpush2.msra.mxu0 0.0
    %2857 = vmatprep.subr.mxu0 0.0
    %2858 = vmatpush2.msra.mxu0 0.0
    %2859 = vmatprep.subr.mxu0 0.0
    %2860 = vmatpush2.msra.mxu0 0.0
    %2861 = vmatprep.mubr.f32.mxu0 0.0
    %2862 = vmatmul.mubr.f32.gmra.mxu0 %v2792
    %v2863 = vpop.f32.mrf.mxu0
    %v2864 = vadd.f32 0.0, %v2863
    %v2865 = vpop.f32.mrf.mxu0
    %2866 = vmatprep.mubr.f32.mxu0 0.0
    %2867 = vmatmul.mubr.f32.gmra.mxu0 %v2795
    %v2868 = vpop.f32.mrf.mxu0
    %v2869 = vadd.f32 0.0, %v2868
    %v2870 = vpop.f32.mrf.mxu0
    %2871 = vdwg.mxu0
    %2872 = vrot.lane.b32.xlu0 %v2143, 112
    %v2873 = vpop.permute.xlu0 %2872
    %2874 = vrot.lane.b32.xlu0 %v2148, 112
    %v2875 = vpop.permute.xlu0 %2874
    %v2879 = vsel %vm773, %v2608, 0
    %v2882 = vsel %vm773, %v2610, 0
    %2884 = vmatprep.subr.mxu0 0.0
    %2885 = vmatpush1.msra.mxu0 0.0
    %2886 = vmatprep.subr.mxu0 0.0
    %2887 = vmatpush1.msra.mxu0 0.0
    %2888 = vmatprep.subr.mxu0 0.0
    %2889 = vmatpush1.msra.mxu0 0.0
    %2890 = vmatprep.subr.mxu0 0.0
    %2891 = vmatpush1.msra.mxu0 0.0
    %2892 = vmatprep.subr.mxu0 0.0
    %2893 = vmatpush1.msra.mxu0 0.0
    %2894 = vmatprep.subr.mxu0 0.0
    %2895 = vmatpush1.msra.mxu0 0.0
    %2896 = vmatprep.subr.mxu0 0.0
    %2897 = vmatpush1.msra.mxu0 0.0
    %2898 = vmatprep.subr.mxu0 0.0
    %2899 = vmatpush1.msra.mxu0 0.0
    %2900 = vmatprep.subr.mxu0 0.0
    %2901 = vmatpush1.msra.mxu0 0.0
    %2902 = vmatprep.subr.mxu0 0.0
    %2903 = vmatpush1.msra.mxu0 0.0
    %2904 = vmatprep.subr.mxu0 0.0
    %2905 = vmatpush1.msra.mxu0 0.0
    %2906 = vmatprep.subr.mxu0 0.0
    %2907 = vmatpush1.msra.mxu0 0.0
    %2908 = vmatprep.subr.mxu0 0.0
    %2909 = vmatpush1.msra.mxu0 0.0
    %2910 = vmatprep.subr.mxu0 0.0
    %2911 = vmatpush1.msra.mxu0 0.0
    %2912 = vmatprep.subr.mxu0 0.0
    %2913 = vmatpush1.msra.mxu0 %v2875
    %2914 = vmatprep.subr.mxu0 0.0
    %2915 = vmatpush1.msra.mxu0 %v2873
    %2916 = vmatprep.subr.mxu0 0.0
    %2917 = vmatpush2.msra.mxu0 0.0
    %2918 = vmatprep.subr.mxu0 0.0
    %2919 = vmatpush2.msra.mxu0 0.0
    %2920 = vmatprep.subr.mxu0 0.0
    %2921 = vmatpush2.msra.mxu0 0.0
    %2922 = vmatprep.subr.mxu0 0.0
    %2923 = vmatpush2.msra.mxu0 0.0
    %2924 = vmatprep.subr.mxu0 0.0
    %2925 = vmatpush2.msra.mxu0 0.0
    %2926 = vmatprep.subr.mxu0 0.0
    %2927 = vmatpush2.msra.mxu0 0.0
    %2928 = vmatprep.subr.mxu0 0.0
    %2929 = vmatpush2.msra.mxu0 0.0
    %2930 = vmatprep.subr.mxu0 0.0
    %2931 = vmatpush2.msra.mxu0 0.0
    %2932 = vmatprep.subr.mxu0 0.0
    %2933 = vmatpush2.msra.mxu0 0.0
    %2934 = vmatprep.subr.mxu0 0.0
    %2935 = vmatpush2.msra.mxu0 0.0
    %2936 = vmatprep.subr.mxu0 0.0
    %2937 = vmatpush2.msra.mxu0 0.0
    %2938 = vmatprep.subr.mxu0 0.0
    %2939 = vmatpush2.msra.mxu0 0.0
    %2940 = vmatprep.subr.mxu0 0.0
    %2941 = vmatpush2.msra.mxu0 0.0
    %2942 = vmatprep.subr.mxu0 0.0
    %2943 = vmatpush2.msra.mxu0 0.0
    %2944 = vmatprep.subr.mxu0 0.0
    %2945 = vmatpush2.msra.mxu0 0.0
    %2946 = vmatprep.subr.mxu0 0.0
    %2947 = vmatpush2.msra.mxu0 0.0
    %2948 = vmatprep.mubr.f32.mxu0 0.0
    %2949 = vmatmul.mubr.f32.gmra.mxu0 %v2879
    %v2950 = vpop.f32.mrf.mxu0
    %v2951 = vadd.f32 0.0, %v2950
    %v2952 = vpop.f32.mrf.mxu0
    %2953 = vmatprep.mubr.f32.mxu0 0.0
    %2954 = vmatmul.mubr.f32.gmra.mxu0 %v2882
    %v2955 = vpop.f32.mrf.mxu0
    %v2956 = vadd.f32 0.0, %v2955
    %v2957 = vpop.f32.mrf.mxu0
    %2958 = vdwg.mxu0
    %s2959 = scalar_lea.vmem %s3, 32
    %v2960 = vld [vmem:[%s2959] sm:$0xff]
    %v2961 = vld [vmem:[%s2959 + $0x8] sm:$0xff]
    %v2962 = vld [vmem:[%s2959 + $0x10] sm:$0xff]
    %v2963 = vld [vmem:[%s2959 + $0x18] sm:$0xff]
    %v2965 = vsel %vm406, %v2690, 0
    %v2968 = vsel %vm406, %v2695, 0
    %2970 = vmatprep.subr.mxu0 0.0
    %2971 = vmatpush1.msra.mxu0 0.0
    %2972 = vmatprep.subr.mxu0 0.0
    %2973 = vmatpush1.msra.mxu0 0.0
    %2974 = vmatprep.subr.mxu0 0.0
    %2975 = vmatpush1.msra.mxu0 0.0
    %2976 = vmatprep.subr.mxu0 0.0
    %2977 = vmatpush1.msra.mxu0 0.0
    %2978 = vmatprep.subr.mxu0 0.0
    %2979 = vmatpush1.msra.mxu0 0.0
    %2980 = vmatprep.subr.mxu0 0.0
    %2981 = vmatpush1.msra.mxu0 0.0
    %2982 = vmatprep.subr.mxu0 0.0
    %2983 = vmatpush1.msra.mxu0 0.0
    %2984 = vmatprep.subr.mxu0 0.0
    %2985 = vmatpush1.msra.mxu0 0.0
    %2986 = vmatprep.subr.mxu0 0.0
    %2987 = vmatpush1.msra.mxu0 0.0
    %2988 = vmatprep.subr.mxu0 0.0
    %2989 = vmatpush1.msra.mxu0 0.0
    %2990 = vmatprep.subr.mxu0 0.0
    %2991 = vmatpush1.msra.mxu0 0.0
    %2992 = vmatprep.subr.mxu0 0.0
    %2993 = vmatpush1.msra.mxu0 0.0
    %2994 = vmatprep.subr.mxu0 0.0
    %2995 = vmatpush1.msra.mxu0 0.0
    %2996 = vmatprep.subr.mxu0 0.0
    %2997 = vmatpush1.msra.mxu0 0.0
    %2998 = vmatprep.subr.mxu0 0.0
    %2999 = vmatpush1.msra.mxu0 0.0
    %3000 = vmatprep.subr.mxu0 0.0
    %3001 = vmatpush1.msra.mxu0 %v2960
    %3002 = vmatprep.subr.mxu0 0.0
    %3003 = vmatpush2.msra.mxu0 0.0
    %3004 = vmatprep.subr.mxu0 0.0
    %3005 = vmatpush2.msra.mxu0 0.0
    %3006 = vmatprep.subr.mxu0 0.0
    %3007 = vmatpush2.msra.mxu0 0.0
    %3008 = vmatprep.subr.mxu0 0.0
    %3009 = vmatpush2.msra.mxu0 0.0
    %3010 = vmatprep.subr.mxu0 0.0
    %3011 = vmatpush2.msra.mxu0 0.0
    %3012 = vmatprep.subr.mxu0 0.0
    %3013 = vmatpush2.msra.mxu0 0.0
    %3014 = vmatprep.subr.mxu0 0.0
    %3015 = vmatpush2.msra.mxu0 0.0
    %3016 = vmatprep.subr.mxu0 0.0
    %3017 = vmatpush2.msra.mxu0 0.0
    %3018 = vmatprep.subr.mxu0 0.0
    %3019 = vmatpush2.msra.mxu0 0.0
    %3020 = vmatprep.subr.mxu0 0.0
    %3021 = vmatpush2.msra.mxu0 0.0
    %3022 = vmatprep.subr.mxu0 0.0
    %3023 = vmatpush2.msra.mxu0 0.0
    %3024 = vmatprep.subr.mxu0 0.0
    %3025 = vmatpush2.msra.mxu0 0.0
    %3026 = vmatprep.subr.mxu0 0.0
    %3027 = vmatpush2.msra.mxu0 0.0
    %3028 = vmatprep.subr.mxu0 0.0
    %3029 = vmatpush2.msra.mxu0 0.0
    %3030 = vmatprep.subr.mxu0 0.0
    %3031 = vmatpush2.msra.mxu0 0.0
    %3032 = vmatprep.subr.mxu0 0.0
    %3033 = vmatpush2.msra.mxu0 0.0
    %3034 = vmatprep.mubr.f32.mxu0 0.0
    %3035 = vmatmul.mubr.f32.gmra.mxu0 %v2965
    %v3036 = vpop.f32.mrf.mxu0
    %v3037 = vadd.f32 0.0, %v3036
    %v3038 = vpop.f32.mrf.mxu0
    %3039 = vmatprep.mubr.f32.mxu0 0.0
    %3040 = vmatmul.mubr.f32.gmra.mxu0 %v2968
    %v3041 = vpop.f32.mrf.mxu0
    %v3042 = vadd.f32 0.0, %v3041
    %v3043 = vpop.f32.mrf.mxu0
    %3044 = vdwg.mxu0
    %v3046 = vsel %vm406, %v2777, 0
    %v3049 = vsel %vm406, %v2782, 0
    %3051 = vmatprep.subr.mxu0 0.0
    %3052 = vmatpush1.msra.mxu0 0.0
    %3053 = vmatprep.subr.mxu0 0.0
    %3054 = vmatpush1.msra.mxu0 0.0
    %3055 = vmatprep.subr.mxu0 0.0
    %3056 = vmatpush1.msra.mxu0 0.0
    %3057 = vmatprep.subr.mxu0 0.0
    %3058 = vmatpush1.msra.mxu0 0.0
    %3059 = vmatprep.subr.mxu0 0.0
    %3060 = vmatpush1.msra.mxu0 0.0
    %3061 = vmatprep.subr.mxu0 0.0
    %3062 = vmatpush1.msra.mxu0 0.0
    %3063 = vmatprep.subr.mxu0 0.0
    %3064 = vmatpush1.msra.mxu0 0.0
    %3065 = vmatprep.subr.mxu0 0.0
    %3066 = vmatpush1.msra.mxu0 0.0
    %3067 = vmatprep.subr.mxu0 0.0
    %3068 = vmatpush1.msra.mxu0 0.0
    %3069 = vmatprep.subr.mxu0 0.0
    %3070 = vmatpush1.msra.mxu0 0.0
    %3071 = vmatprep.subr.mxu0 0.0
    %3072 = vmatpush1.msra.mxu0 0.0
    %3073 = vmatprep.subr.mxu0 0.0
    %3074 = vmatpush1.msra.mxu0 0.0
    %3075 = vmatprep.subr.mxu0 0.0
    %3076 = vmatpush1.msra.mxu0 0.0
    %3077 = vmatprep.subr.mxu0 0.0
    %3078 = vmatpush1.msra.mxu0 0.0
    %3079 = vmatprep.subr.mxu0 0.0
    %3080 = vmatpush1.msra.mxu0 0.0
    %3081 = vmatprep.subr.mxu0 0.0
    %3082 = vmatpush1.msra.mxu0 %v2961
    %3083 = vmatprep.subr.mxu0 0.0
    %3084 = vmatpush2.msra.mxu0 0.0
    %3085 = vmatprep.subr.mxu0 0.0
    %3086 = vmatpush2.msra.mxu0 0.0
    %3087 = vmatprep.subr.mxu0 0.0
    %3088 = vmatpush2.msra.mxu0 0.0
    %3089 = vmatprep.subr.mxu0 0.0
    %3090 = vmatpush2.msra.mxu0 0.0
    %3091 = vmatprep.subr.mxu0 0.0
    %3092 = vmatpush2.msra.mxu0 0.0
    %3093 = vmatprep.subr.mxu0 0.0
    %3094 = vmatpush2.msra.mxu0 0.0
    %3095 = vmatprep.subr.mxu0 0.0
    %3096 = vmatpush2.msra.mxu0 0.0
    %3097 = vmatprep.subr.mxu0 0.0
    %3098 = vmatpush2.msra.mxu0 0.0
    %3099 = vmatprep.subr.mxu0 0.0
    %3100 = vmatpush2.msra.mxu0 0.0
    %3101 = vmatprep.subr.mxu0 0.0
    %3102 = vmatpush2.msra.mxu0 0.0
    %3103 = vmatprep.subr.mxu0 0.0
    %3104 = vmatpush2.msra.mxu0 0.0
    %3105 = vmatprep.subr.mxu0 0.0
    %3106 = vmatpush2.msra.mxu0 0.0
    %3107 = vmatprep.subr.mxu0 0.0
    %3108 = vmatpush2.msra.mxu0 0.0
    %3109 = vmatprep.subr.mxu0 0.0
    %3110 = vmatpush2.msra.mxu0 0.0
    %3111 = vmatprep.subr.mxu0 0.0
    %3112 = vmatpush2.msra.mxu0 0.0
    %3113 = vmatprep.subr.mxu0 0.0
    %3114 = vmatpush2.msra.mxu0 0.0
    %3115 = vmatprep.mubr.f32.mxu0 0.0
    %3116 = vmatmul.mubr.f32.gmra.mxu0 %v3046
    %v3117 = vpop.f32.mrf.mxu0
    %v3118 = vadd.f32 0.0, %v3117
    %v3119 = vpop.f32.mrf.mxu0
    %3120 = vmatprep.mubr.f32.mxu0 0.0
    %3121 = vmatmul.mubr.f32.gmra.mxu0 %v3049
    %v3122 = vpop.f32.mrf.mxu0
    %v3123 = vadd.f32 0.0, %v3122
    %v3124 = vpop.f32.mrf.mxu0
    %3125 = vdwg.mxu0
    %v3127 = vsel %vm406, %v2864, 0
    %v3130 = vsel %vm406, %v2869, 0
    %3132 = vmatprep.subr.mxu0 0.0
    %3133 = vmatpush1.msra.mxu0 0.0
    %3134 = vmatprep.subr.mxu0 0.0
    %3135 = vmatpush1.msra.mxu0 0.0
    %3136 = vmatprep.subr.mxu0 0.0
    %3137 = vmatpush1.msra.mxu0 0.0
    %3138 = vmatprep.subr.mxu0 0.0
    %3139 = vmatpush1.msra.mxu0 0.0
    %3140 = vmatprep.subr.mxu0 0.0
    %3141 = vmatpush1.msra.mxu0 0.0
    %3142 = vmatprep.subr.mxu0 0.0
    %3143 = vmatpush1.msra.mxu0 0.0
    %3144 = vmatprep.subr.mxu0 0.0
    %3145 = vmatpush1.msra.mxu0 0.0
    %3146 = vmatprep.subr.mxu0 0.0
    %3147 = vmatpush1.msra.mxu0 0.0
    %3148 = vmatprep.subr.mxu0 0.0
    %3149 = vmatpush1.msra.mxu0 0.0
    %3150 = vmatprep.subr.mxu0 0.0
    %3151 = vmatpush1.msra.mxu0 0.0
    %3152 = vmatprep.subr.mxu0 0.0
    %3153 = vmatpush1.msra.mxu0 0.0
    %3154 = vmatprep.subr.mxu0 0.0
    %3155 = vmatpush1.msra.mxu0 0.0
    %3156 = vmatprep.subr.mxu0 0.0
    %3157 = vmatpush1.msra.mxu0 0.0
    %3158 = vmatprep.subr.mxu0 0.0
    %3159 = vmatpush1.msra.mxu0 0.0
    %3160 = vmatprep.subr.mxu0 0.0
    %3161 = vmatpush1.msra.mxu0 0.0
    %3162 = vmatprep.subr.mxu0 0.0
    %3163 = vmatpush1.msra.mxu0 %v2962
    %3164 = vmatprep.subr.mxu0 0.0
    %3165 = vmatpush2.msra.mxu0 0.0
    %3166 = vmatprep.subr.mxu0 0.0
    %3167 = vmatpush2.msra.mxu0 0.0
    %3168 = vmatprep.subr.mxu0 0.0
    %3169 = vmatpush2.msra.mxu0 0.0
    %3170 = vmatprep.subr.mxu0 0.0
    %3171 = vmatpush2.msra.mxu0 0.0
    %3172 = vmatprep.subr.mxu0 0.0
    %3173 = vmatpush2.msra.mxu0 0.0
    %3174 = vmatprep.subr.mxu0 0.0
    %3175 = vmatpush2.msra.mxu0 0.0
    %3176 = vmatprep.subr.mxu0 0.0
    %3177 = vmatpush2.msra.mxu0 0.0
    %3178 = vmatprep.subr.mxu0 0.0
    %3179 = vmatpush2.msra.mxu0 0.0
    %3180 = vmatprep.subr.mxu0 0.0
    %3181 = vmatpush2.msra.mxu0 0.0
    %3182 = vmatprep.subr.mxu0 0.0
    %3183 = vmatpush2.msra.mxu0 0.0
    %3184 = vmatprep.subr.mxu0 0.0
    %3185 = vmatpush2.msra.mxu0 0.0
    %3186 = vmatprep.subr.mxu0 0.0
    %3187 = vmatpush2.msra.mxu0 0.0
    %3188 = vmatprep.subr.mxu0 0.0
    %3189 = vmatpush2.msra.mxu0 0.0
    %3190 = vmatprep.subr.mxu0 0.0
    %3191 = vmatpush2.msra.mxu0 0.0
    %3192 = vmatprep.subr.mxu0 0.0
    %3193 = vmatpush2.msra.mxu0 0.0
    %3194 = vmatprep.subr.mxu0 0.0
    %3195 = vmatpush2.msra.mxu0 0.0
    %3196 = vmatprep.mubr.f32.mxu0 0.0
    %3197 = vmatmul.mubr.f32.gmra.mxu0 %v3127
    %v3198 = vpop.f32.mrf.mxu0
    %v3199 = vadd.f32 0.0, %v3198
    %v3200 = vpop.f32.mrf.mxu0
    %3201 = vmatprep.mubr.f32.mxu0 0.0
    %3202 = vmatmul.mubr.f32.gmra.mxu0 %v3130
    %v3203 = vpop.f32.mrf.mxu0
    %v3204 = vadd.f32 0.0, %v3203
    %v3205 = vpop.f32.mrf.mxu0
    %3206 = vdwg.mxu0
    %v3208 = vsel %vm406, %v2951, 0
    %v3211 = vsel %vm406, %v2956, 0
    %3213 = vmatprep.subr.mxu0 0.0
    %3214 = vmatpush1.msra.mxu0 0.0
    %3215 = vmatprep.subr.mxu0 0.0
    %3216 = vmatpush1.msra.mxu0 0.0
    %3217 = vmatprep.subr.mxu0 0.0
    %3218 = vmatpush1.msra.mxu0 0.0
    %3219 = vmatprep.subr.mxu0 0.0
    %3220 = vmatpush1.msra.mxu0 0.0
    %3221 = vmatprep.subr.mxu0 0.0
    %3222 = vmatpush1.msra.mxu0 0.0
    %3223 = vmatprep.subr.mxu0 0.0
    %3224 = vmatpush1.msra.mxu0 0.0
    %3225 = vmatprep.subr.mxu0 0.0
    %3226 = vmatpush1.msra.mxu0 0.0
    %3227 = vmatprep.subr.mxu0 0.0
    %3228 = vmatpush1.msra.mxu0 0.0
    %3229 = vmatprep.subr.mxu0 0.0
    %3230 = vmatpush1.msra.mxu0 0.0
    %3231 = vmatprep.subr.mxu0 0.0
    %3232 = vmatpush1.msra.mxu0 0.0
    %3233 = vmatprep.subr.mxu0 0.0
    %3234 = vmatpush1.msra.mxu0 0.0
    %3235 = vmatprep.subr.mxu0 0.0
    %3236 = vmatpush1.msra.mxu0 0.0
    %3237 = vmatprep.subr.mxu0 0.0
    %3238 = vmatpush1.msra.mxu0 0.0
    %3239 = vmatprep.subr.mxu0 0.0
    %3240 = vmatpush1.msra.mxu0 0.0
    %3241 = vmatprep.subr.mxu0 0.0
    %3242 = vmatpush1.msra.mxu0 0.0
    %3243 = vmatprep.subr.mxu0 0.0
    %3244 = vmatpush1.msra.mxu0 %v2963
    %3245 = vmatprep.subr.mxu0 0.0
    %3246 = vmatpush2.msra.mxu0 0.0
    %3247 = vmatprep.subr.mxu0 0.0
    %3248 = vmatpush2.msra.mxu0 0.0
    %3249 = vmatprep.subr.mxu0 0.0
    %3250 = vmatpush2.msra.mxu0 0.0
    %3251 = vmatprep.subr.mxu0 0.0
    %3252 = vmatpush2.msra.mxu0 0.0
    %3253 = vmatprep.subr.mxu0 0.0
    %3254 = vmatpush2.msra.mxu0 0.0
    %3255 = vmatprep.subr.mxu0 0.0
    %3256 = vmatpush2.msra.mxu0 0.0
    %3257 = vmatprep.subr.mxu0 0.0
    %3258 = vmatpush2.msra.mxu0 0.0
    %3259 = vmatprep.subr.mxu0 0.0
    %3260 = vmatpush2.msra.mxu0 0.0
    %3261 = vmatprep.subr.mxu0 0.0
    %3262 = vmatpush2.msra.mxu0 0.0
    %3263 = vmatprep.subr.mxu0 0.0
    %3264 = vmatpush2.msra.mxu0 0.0
    %3265 = vmatprep.subr.mxu0 0.0
    %3266 = vmatpush2.msra.mxu0 0.0
    %3267 = vmatprep.subr.mxu0 0.0
    %3268 = vmatpush2.msra.mxu0 0.0
    %3269 = vmatprep.subr.mxu0 0.0
    %3270 = vmatpush2.msra.mxu0 0.0
    %3271 = vmatprep.subr.mxu0 0.0
    %3272 = vmatpush2.msra.mxu0 0.0
    %3273 = vmatprep.subr.mxu0 0.0
    %3274 = vmatpush2.msra.mxu0 0.0
    %3275 = vmatprep.subr.mxu0 0.0
    %3276 = vmatpush2.msra.mxu0 0.0
    %3277 = vmatprep.mubr.f32.mxu0 0.0
    %3278 = vmatmul.mubr.f32.gmra.mxu0 %v3208
    %v3279 = vpop.f32.mrf.mxu0
    %v3280 = vadd.f32 0.0, %v3279
    %v3281 = vpop.f32.mrf.mxu0
    %3282 = vmatprep.mubr.f32.mxu0 0.0
    %3283 = vmatmul.mubr.f32.gmra.mxu0 %v3211
    %v3284 = vpop.f32.mrf.mxu0
    %v3285 = vadd.f32 0.0, %v3284
    %v3286 = vpop.f32.mrf.mxu0
    %3287 = vdwg.mxu0
    %v3288 = vsel %vm38, %v3037, 0.0
    %v3289 = vsel %vm38, %v3118, 0.0
    %v3290 = vadd.f32 %v3288, %v3289
    %v3291 = vsel %vm38, %v3199, 0.0
    %v3292 = vadd.f32 %v3290, %v3291
    %v3293 = vsel %vm38, %v3280, 0.0
    %v3294 = vadd.f32 %v3292, %v3293
    %v3295 = vsel %vm38, %v3042, 0.0
    %v3296 = vsel %vm38, %v3123, 0.0
    %v3297 = vadd.f32 %v3295, %v3296
    %v3298 = vsel %vm38, %v3204, 0.0
    %v3299 = vadd.f32 %v3297, %v3298
    %v3300 = vsel %vm38, %v3285, 0.0
    %v3301 = vadd.f32 %v3299, %v3300
    %v3302 = vadd.f32 %v1786, %v3294
    %v3303 = vadd.f32 %v1787, %v3301
    %v3304 = vlaneseq
    %v3305 = vshrl.u32 %v3304, 7
    %v3306 = vsub.s32 4, %v3305
    %v3307 = vrot.slane %v1789, %v3306
    %v3308 = vadd.f32 %v3302, %v3307
    %v3309 = vadd.f32 %v3303, %v3307
    %v3310 = vsel %vm38, %v3308, 0.0
    %3311 = vadd.xlane.f32.xlu0 %v3310
    %v3312 = vpop.xlane.xlu0 %3311
    %v3313 = vsel %vm38, %v3309, 0.0
    %3314 = vadd.xlane.f32.xlu0 %v3313
    %v3315 = vpop.xlane.xlu0 %3314
    %v3316 = vmul.f32 %v3312, %v45
    %v3317 = vmul.f32 %v3315, %v45
    %v3318 = vsub.f32 %v3308, %v3316
    %v3319 = vsub.f32 %v3309, %v3317
    %v3320 = vmul.f32 %v3318, %v3318
    %v3321 = vmul.f32 %v3319, %v3319
    %v3322 = vsel %vm38, %v3320, 0.0
    %3323 = vadd.xlane.f32.xlu0 %v3322
    %v3324 = vpop.xlane.xlu0 %3323
    %v3325 = vsel %vm38, %v3321, 0.0
    %3326 = vadd.xlane.f32.xlu0 %v3325
    %v3327 = vpop.xlane.xlu0 %3326
    %v3328 = vmul.f32 %v3324, %v45
    %v3329 = vmul.f32 %v3327, %v45
    %v3330 = vadd.f32 %v3328, 1e-05
    %v3331 = vadd.f32 %v3329, 1e-05
    %v3332 = vrsqrt.pop %v3330
    %v3333 = vrsqrt.pop %v3331
    %v3334 = vmul.f32 %v3318, %v3332
    %v3335 = vmul.f32 %v3319, %v3333
    %v3336 = vlaneseq
    %v3337 = vshrl.u32 %v3336, 7
    %v3338 = vsub.s32 2, %v3337
    %v3339 = vrot.slane %v1789, %v3338
    %v3340 = vmul.f32 %v3334, %v3339
    %v3341 = vmul.f32 %v3335, %v3339
    %v3342 = vlaneseq
    %v3343 = vshrl.u32 %v3342, 7
    %v3344 = vsub.s32 3, %v3343
    %v3345 = vrot.slane %v1789, %v3344
    %v3346 = vadd.f32 %v3340, %v3345
    %v3347 = vadd.f32 %v3341, %v3345
    %s3348 = scalar_lea.vmem %s4, 32
    %v3349 = vld [vmem:[%s3348] sm:$0xff]
    %v3350 = vld [vmem:[%s3348 + $0x8] sm:$0xff]
    %v3351 = vld [vmem:[%s3348 + $0x10] sm:$0xff]
    %v3352 = vld [vmem:[%s3348 + $0x18] sm:$0xff]
    %v3353 = vlaneseq
    %v3354 = vshrl.u32 %v3353, 7
    %v3355 = vsub.s32 6, %v3354
    %v3356 = vrot.slane %v1789, %v3355
    %v3358 = vsel %vm38, %v3346, 0
    %v3361 = vsel %vm38, %v3347, 0
    %3363 = vmatprep.subr.mxu0 0.0
    %3364 = vmatpush1.msra.mxu0 0.0
    %3365 = vmatprep.subr.mxu0 0.0
    %3366 = vmatpush1.msra.mxu0 0.0
    %3367 = vmatprep.subr.mxu0 0.0
    %3368 = vmatpush1.msra.mxu0 0.0
    %3369 = vmatprep.subr.mxu0 0.0
    %3370 = vmatpush1.msra.mxu0 0.0
    %3371 = vmatprep.subr.mxu0 0.0
    %3372 = vmatpush1.msra.mxu0 0.0
    %3373 = vmatprep.subr.mxu0 0.0
    %3374 = vmatpush1.msra.mxu0 0.0
    %3375 = vmatprep.subr.mxu0 0.0
    %3376 = vmatpush1.msra.mxu0 0.0
    %3377 = vmatprep.subr.mxu0 0.0
    %3378 = vmatpush1.msra.mxu0 0.0
    %3379 = vmatprep.subr.mxu0 0.0
    %3380 = vmatpush1.msra.mxu0 0.0
    %3381 = vmatprep.subr.mxu0 0.0
    %3382 = vmatpush1.msra.mxu0 0.0
    %3383 = vmatprep.subr.mxu0 0.0
    %3384 = vmatpush1.msra.mxu0 0.0
    %3385 = vmatprep.subr.mxu0 0.0
    %3386 = vmatpush1.msra.mxu0 0.0
    %3387 = vmatprep.subr.mxu0 0.0
    %3388 = vmatpush1.msra.mxu0 %v3352
    %3389 = vmatprep.subr.mxu0 0.0
    %3390 = vmatpush1.msra.mxu0 %v3351
    %3391 = vmatprep.subr.mxu0 0.0
    %3392 = vmatpush1.msra.mxu0 %v3350
    %3393 = vmatprep.subr.mxu0 0.0
    %3394 = vmatpush1.msra.mxu0 %v3349
    %3395 = vmatprep.subr.mxu0 0.0
    %3396 = vmatpush2.msra.mxu0 0.0
    %3397 = vmatprep.subr.mxu0 0.0
    %3398 = vmatpush2.msra.mxu0 0.0
    %3399 = vmatprep.subr.mxu0 0.0
    %3400 = vmatpush2.msra.mxu0 0.0
    %3401 = vmatprep.subr.mxu0 0.0
    %3402 = vmatpush2.msra.mxu0 0.0
    %3403 = vmatprep.subr.mxu0 0.0
    %3404 = vmatpush2.msra.mxu0 0.0
    %3405 = vmatprep.subr.mxu0 0.0
    %3406 = vmatpush2.msra.mxu0 0.0
    %3407 = vmatprep.subr.mxu0 0.0
    %3408 = vmatpush2.msra.mxu0 0.0
    %3409 = vmatprep.subr.mxu0 0.0
    %3410 = vmatpush2.msra.mxu0 0.0
    %3411 = vmatprep.subr.mxu0 0.0
    %3412 = vmatpush2.msra.mxu0 0.0
    %3413 = vmatprep.subr.mxu0 0.0
    %3414 = vmatpush2.msra.mxu0 0.0
    %3415 = vmatprep.subr.mxu0 0.0
    %3416 = vmatpush2.msra.mxu0 0.0
    %3417 = vmatprep.subr.mxu0 0.0
    %3418 = vmatpush2.msra.mxu0 0.0
    %3419 = vmatprep.subr.mxu0 0.0
    %3420 = vmatpush2.msra.mxu0 0.0
    %3421 = vmatprep.subr.mxu0 0.0
    %3422 = vmatpush2.msra.mxu0 0.0
    %3423 = vmatprep.subr.mxu0 0.0
    %3424 = vmatpush2.msra.mxu0 0.0
    %3425 = vmatprep.subr.mxu0 0.0
    %3426 = vmatpush2.msra.mxu0 0.0
    %3427 = vmatprep.mubr.f32.mxu0 0.0
    %3428 = vmatmul.mubr.f32.gmra.mxu0 %v3358
    %v3429 = vpop.f32.mrf.mxu0
    %v3430 = vadd.f32 %v3356, %v3429
    %v3431 = vpop.f32.mrf.mxu0
    %3432 = vmatprep.mubr.f32.mxu0 0.0
    %3433 = vmatmul.mubr.f32.gmra.mxu0 %v3361
    %v3434 = vpop.f32.mrf.mxu0
    %v3435 = vadd.f32 %v3356, %v3434
    %v3436 = vpop.f32.mrf.mxu0
    %3437 = vdwg.mxu0
    %v3438 = vmax.f32 %v3430, 0.0
    %v3439 = vmax.f32 %v3435, 0.0
    %s3440 = scalar_lea.vmem %s5, 128
    %v3441 = vld [vmem:[%s3440] sm:$0xff]
    %v3442 = vld [vmem:[%s3440 + $0x8] sm:$0xff]
    %v3443 = vld [vmem:[%s3440 + $0x10] sm:$0xff]
    %v3444 = vld [vmem:[%s3440 + $0x18] sm:$0xff]
    %v3445 = vld [vmem:[%s3440 + $0x20] sm:$0xff]
    %v3446 = vld [vmem:[%s3440 + $0x28] sm:$0xff]
    %v3447 = vld [vmem:[%s3440 + $0x30] sm:$0xff]
    %v3448 = vld [vmem:[%s3440 + $0x38] sm:$0xff]
    %v3449 = vld [vmem:[%s3440 + $0x40] sm:$0xff]
    %v3450 = vld [vmem:[%s3440 + $0x48] sm:$0xff]
    %v3451 = vld [vmem:[%s3440 + $0x50] sm:$0xff]
    %v3452 = vld [vmem:[%s3440 + $0x58] sm:$0xff]
    %v3453 = vld [vmem:[%s3440 + $0x60] sm:$0xff]
    %v3454 = vld [vmem:[%s3440 + $0x68] sm:$0xff]
    %v3455 = vld [vmem:[%s3440 + $0x70] sm:$0xff]
    %v3456 = vld [vmem:[%s3440 + $0x78] sm:$0xff]
    %3457 = vmatprep.subr.mxu0 0.0
    %3458 = vmatpush1.msra.mxu0 %v3456
    %3459 = vmatprep.subr.mxu0 0.0
    %3460 = vmatpush1.msra.mxu0 %v3455
    %3461 = vmatprep.subr.mxu0 0.0
    %3462 = vmatpush1.msra.mxu0 %v3454
    %3463 = vmatprep.subr.mxu0 0.0
    %3464 = vmatpush1.msra.mxu0 %v3453
    %3465 = vmatprep.subr.mxu0 0.0
    %3466 = vmatpush1.msra.mxu0 %v3452
    %3467 = vmatprep.subr.mxu0 0.0
    %3468 = vmatpush1.msra.mxu0 %v3451
    %3469 = vmatprep.subr.mxu0 0.0
    %3470 = vmatpush1.msra.mxu0 %v3450
    %3471 = vmatprep.subr.mxu0 0.0
    %3472 = vmatpush1.msra.mxu0 %v3449
    %3473 = vmatprep.subr.mxu0 0.0
    %3474 = vmatpush1.msra.mxu0 %v3448
    %3475 = vmatprep.subr.mxu0 0.0
    %3476 = vmatpush1.msra.mxu0 %v3447
    %3477 = vmatprep.subr.mxu0 0.0
    %3478 = vmatpush1.msra.mxu0 %v3446
    %3479 = vmatprep.subr.mxu0 0.0
    %3480 = vmatpush1.msra.mxu0 %v3445
    %3481 = vmatprep.subr.mxu0 0.0
    %3482 = vmatpush1.msra.mxu0 %v3444
    %3483 = vmatprep.subr.mxu0 0.0
    %3484 = vmatpush1.msra.mxu0 %v3443
    %3485 = vmatprep.subr.mxu0 0.0
    %3486 = vmatpush1.msra.mxu0 %v3442
    %3487 = vmatprep.subr.mxu0 0.0
    %3488 = vmatpush1.msra.mxu0 %v3441
    %3489 = vmatprep.subr.mxu0 0.0
    %3490 = vmatpush2.msra.mxu0 0.0
    %3491 = vmatprep.subr.mxu0 0.0
    %3492 = vmatpush2.msra.mxu0 0.0
    %3493 = vmatprep.subr.mxu0 0.0
    %3494 = vmatpush2.msra.mxu0 0.0
    %3495 = vmatprep.subr.mxu0 0.0
    %3496 = vmatpush2.msra.mxu0 0.0
    %3497 = vmatprep.subr.mxu0 0.0
    %3498 = vmatpush2.msra.mxu0 0.0
    %3499 = vmatprep.subr.mxu0 0.0
    %3500 = vmatpush2.msra.mxu0 0.0
    %3501 = vmatprep.subr.mxu0 0.0
    %3502 = vmatpush2.msra.mxu0 0.0
    %3503 = vmatprep.subr.mxu0 0.0
    %3504 = vmatpush2.msra.mxu0 0.0
    %3505 = vmatprep.subr.mxu0 0.0
    %3506 = vmatpush2.msra.mxu0 0.0
    %3507 = vmatprep.subr.mxu0 0.0
    %3508 = vmatpush2.msra.mxu0 0.0
    %3509 = vmatprep.subr.mxu0 0.0
    %3510 = vmatpush2.msra.mxu0 0.0
    %3511 = vmatprep.subr.mxu0 0.0
    %3512 = vmatpush2.msra.mxu0 0.0
    %3513 = vmatprep.subr.mxu0 0.0
    %3514 = vmatpush2.msra.mxu0 0.0
    %3515 = vmatprep.subr.mxu0 0.0
    %3516 = vmatpush2.msra.mxu0 0.0
    %3517 = vmatprep.subr.mxu0 0.0
    %3518 = vmatpush2.msra.mxu0 0.0
    %3519 = vmatprep.subr.mxu0 0.0
    %3520 = vmatpush2.msra.mxu0 0.0
    %3521 = vmatprep.mubr.f32.mxu0 0.0
    %3522 = vmatmul.mubr.f32.gmra.mxu0 %v3438
    %v3523 = vpop.f32.mrf.mxu0
    %v3524 = vadd.f32 0.0, %v3523
    %v3525 = vpop.f32.mrf.mxu0
    %3526 = vmatprep.mubr.f32.mxu0 0.0
    %3527 = vmatmul.mubr.f32.gmra.mxu0 %v3439
    %v3528 = vpop.f32.mrf.mxu0
    %v3529 = vadd.f32 0.0, %v3528
    %v3530 = vpop.f32.mrf.mxu0
    %3531 = vdwg.mxu0
    %v3532 = vadd.f32 %v3308, %v3524
    %v3533 = vadd.f32 %v3309, %v3529
    %v3534 = vlaneseq
    %v3535 = vshrl.u32 %v3534, 7
    %v3536 = vsub.s32 5, %v3535
    %v3537 = vrot.slane %v1789, %v3536
    %v3538 = vadd.f32 %v3532, %v3537
    %v3539 = vadd.f32 %v3533, %v3537
    %s3540 = scalar_lea.vmem %s6, 16
    %v3541 = vld [vmem:[%s3540] sm:$0xff]
    %v3542 = vsel %vm38, %v3538, 0.0
    %3543 = vadd.xlane.f32.xlu0 %v3542
    %v3544 = vpop.xlane.xlu0 %3543
    %v3545 = vsel %vm38, %v3539, 0.0
    %3546 = vadd.xlane.f32.xlu0 %v3545
    %v3547 = vpop.xlane.xlu0 %3546
    %v3548 = vmul.f32 %v3544, %v45
    %v3549 = vmul.f32 %v3547, %v45
    %v3550 = vsub.f32 %v3538, %v3548
    %v3551 = vsub.f32 %v3539, %v3549
    %v3552 = vmul.f32 %v3550, %v3550
    %v3553 = vmul.f32 %v3551, %v3551
    %v3554 = vsel %vm38, %v3552, 0.0
    %3555 = vadd.xlane.f32.xlu0 %v3554
    %v3556 = vpop.xlane.xlu0 %3555
    %v3557 = vsel %vm38, %v3553, 0.0
    %3558 = vadd.xlane.f32.xlu0 %v3557
    %v3559 = vpop.xlane.xlu0 %3558
    %v3560 = vmul.f32 %v3556, %v45
    %v3561 = vmul.f32 %v3559, %v45
    %v3562 = vadd.f32 %v3560, 1e-05
    %v3563 = vadd.f32 %v3561, 1e-05
    %v3564 = vrsqrt.pop %v3562
    %v3565 = vrsqrt.pop %v3563
    %v3566 = vmul.f32 %v3550, %v3564
    %v3567 = vmul.f32 %v3551, %v3565
    %v3568 = vlaneseq
    %v3569 = vshrl.u32 %v3568, 7
    %v3570 = vsub.s32 0, %v3569
    %v3571 = vrot.slane %v3541, %v3570
    %v3572 = vmul.f32 %v3566, %v3571
    %v3573 = vmul.f32 %v3567, %v3571
    %v3574 = vlaneseq
    %v3575 = vshrl.u32 %v3574, 7
    %v3576 = vsub.s32 1, %v3575
    %v3577 = vrot.slane %v3541, %v3576
    %v3578 = vadd.f32 %v3572, %v3577
    %v3579 = vadd.f32 %v3573, %v3577
    %s3580 = scalar_lea.vmem %s2, 256
    %v3581 = vld [vmem:[%s3580] sm:$0xff]
    %v3582 = vld [vmem:[%s3580 + $0x8] sm:$0xff]
    %v3583 = vld [vmem:[%s3580 + $0x10] sm:$0xff]
    %v3584 = vld [vmem:[%s3580 + $0x18] sm:$0xff]
    %v3585 = vld [vmem:[%s3580 + $0x20] sm:$0xff]
    %v3586 = vld [vmem:[%s3580 + $0x28] sm:$0xff]
    %v3587 = vld [vmem:[%s3580 + $0x30] sm:$0xff]
    %v3588 = vld [vmem:[%s3580 + $0x38] sm:$0xff]
    %v3589 = vld [vmem:[%s3580 + $0x40] sm:$0xff]
    %v3590 = vld [vmem:[%s3580 + $0x48] sm:$0xff]
    %v3591 = vld [vmem:[%s3580 + $0x50] sm:$0xff]
    %v3592 = vld [vmem:[%s3580 + $0x58] sm:$0xff]
    %v3593 = vld [vmem:[%s3580 + $0x60] sm:$0xff]
    %v3594 = vld [vmem:[%s3580 + $0x68] sm:$0xff]
    %v3595 = vld [vmem:[%s3580 + $0x70] sm:$0xff]
    %v3596 = vld [vmem:[%s3580 + $0x78] sm:$0xff]
    %v3598 = vsel %vm38, %v3578, 0
    %v3601 = vsel %vm38, %v3579, 0
    %3603 = vmatprep.subr.mxu0 0.0
    %3604 = vmatpush1.msra.mxu0 0.0
    %3605 = vmatprep.subr.mxu0 0.0
    %3606 = vmatpush1.msra.mxu0 0.0
    %3607 = vmatprep.subr.mxu0 0.0
    %3608 = vmatpush1.msra.mxu0 0.0
    %3609 = vmatprep.subr.mxu0 0.0
    %3610 = vmatpush1.msra.mxu0 0.0
    %3611 = vmatprep.subr.mxu0 0.0
    %3612 = vmatpush1.msra.mxu0 0.0
    %3613 = vmatprep.subr.mxu0 0.0
    %3614 = vmatpush1.msra.mxu0 0.0
    %3615 = vmatprep.subr.mxu0 0.0
    %3616 = vmatpush1.msra.mxu0 0.0
    %3617 = vmatprep.subr.mxu0 0.0
    %3618 = vmatpush1.msra.mxu0 0.0
    %3619 = vmatprep.subr.mxu0 0.0
    %3620 = vmatpush1.msra.mxu0 0.0
    %3621 = vmatprep.subr.mxu0 0.0
    %3622 = vmatpush1.msra.mxu0 0.0
    %3623 = vmatprep.subr.mxu0 0.0
    %3624 = vmatpush1.msra.mxu0 0.0
    %3625 = vmatprep.subr.mxu0 0.0
    %3626 = vmatpush1.msra.mxu0 0.0
    %3627 = vmatprep.subr.mxu0 0.0
    %3628 = vmatpush1.msra.mxu0 %v3584
    %3629 = vmatprep.subr.mxu0 0.0
    %3630 = vmatpush1.msra.mxu0 %v3583
    %3631 = vmatprep.subr.mxu0 0.0
    %3632 = vmatpush1.msra.mxu0 %v3582
    %3633 = vmatprep.subr.mxu0 0.0
    %3634 = vmatpush1.msra.mxu0 %v3581
    %3635 = vmatprep.subr.mxu0 0.0
    %3636 = vmatpush2.msra.mxu0 0.0
    %3637 = vmatprep.subr.mxu0 0.0
    %3638 = vmatpush2.msra.mxu0 0.0
    %3639 = vmatprep.subr.mxu0 0.0
    %3640 = vmatpush2.msra.mxu0 0.0
    %3641 = vmatprep.subr.mxu0 0.0
    %3642 = vmatpush2.msra.mxu0 0.0
    %3643 = vmatprep.subr.mxu0 0.0
    %3644 = vmatpush2.msra.mxu0 0.0
    %3645 = vmatprep.subr.mxu0 0.0
    %3646 = vmatpush2.msra.mxu0 0.0
    %3647 = vmatprep.subr.mxu0 0.0
    %3648 = vmatpush2.msra.mxu0 0.0
    %3649 = vmatprep.subr.mxu0 0.0
    %3650 = vmatpush2.msra.mxu0 0.0
    %3651 = vmatprep.subr.mxu0 0.0
    %3652 = vmatpush2.msra.mxu0 0.0
    %3653 = vmatprep.subr.mxu0 0.0
    %3654 = vmatpush2.msra.mxu0 0.0
    %3655 = vmatprep.subr.mxu0 0.0
    %3656 = vmatpush2.msra.mxu0 0.0
    %3657 = vmatprep.subr.mxu0 0.0
    %3658 = vmatpush2.msra.mxu0 0.0
    %3659 = vmatprep.subr.mxu0 0.0
    %3660 = vmatpush2.msra.mxu0 0.0
    %3661 = vmatprep.subr.mxu0 0.0
    %3662 = vmatpush2.msra.mxu0 0.0
    %3663 = vmatprep.subr.mxu0 0.0
    %3664 = vmatpush2.msra.mxu0 0.0
    %3665 = vmatprep.subr.mxu0 0.0
    %3666 = vmatpush2.msra.mxu0 0.0
    %3667 = vmatprep.mubr.f32.mxu0 0.0
    %3668 = vmatmul.mubr.f32.gmra.mxu0 %v3598
    %v3669 = vpop.f32.mrf.mxu0
    %v3670 = vadd.f32 0.0, %v3669
    %v3671 = vpop.f32.mrf.mxu0
    %3672 = vmatprep.mubr.f32.mxu0 0.0
    %3673 = vmatmul.mubr.f32.gmra.mxu0 %v3601
    %v3674 = vpop.f32.mrf.mxu0
    %v3675 = vadd.f32 0.0, %v3674
    %v3676 = vpop.f32.mrf.mxu0
    %3677 = vdwg.mxu0
    %3678 = vmatprep.subr.mxu0 0.0
    %3679 = vmatpush1.msra.mxu0 0.0
    %3680 = vmatprep.subr.mxu0 0.0
    %3681 = vmatpush1.msra.mxu0 0.0
    %3682 = vmatprep.subr.mxu0 0.0
    %3683 = vmatpush1.msra.mxu0 0.0
    %3684 = vmatprep.subr.mxu0 0.0
    %3685 = vmatpush1.msra.mxu0 0.0
    %3686 = vmatprep.subr.mxu0 0.0
    %3687 = vmatpush1.msra.mxu0 0.0
    %3688 = vmatprep.subr.mxu0 0.0
    %3689 = vmatpush1.msra.mxu0 0.0
    %3690 = vmatprep.subr.mxu0 0.0
    %3691 = vmatpush1.msra.mxu0 0.0
    %3692 = vmatprep.subr.mxu0 0.0
    %3693 = vmatpush1.msra.mxu0 0.0
    %3694 = vmatprep.subr.mxu0 0.0
    %3695 = vmatpush1.msra.mxu0 0.0
    %3696 = vmatprep.subr.mxu0 0.0
    %3697 = vmatpush1.msra.mxu0 0.0
    %3698 = vmatprep.subr.mxu0 0.0
    %3699 = vmatpush1.msra.mxu0 0.0
    %3700 = vmatprep.subr.mxu0 0.0
    %3701 = vmatpush1.msra.mxu0 0.0
    %3702 = vmatprep.subr.mxu0 0.0
    %3703 = vmatpush1.msra.mxu0 %v3588
    %3704 = vmatprep.subr.mxu0 0.0
    %3705 = vmatpush1.msra.mxu0 %v3587
    %3706 = vmatprep.subr.mxu0 0.0
    %3707 = vmatpush1.msra.mxu0 %v3586
    %3708 = vmatprep.subr.mxu0 0.0
    %3709 = vmatpush1.msra.mxu0 %v3585
    %3710 = vmatprep.subr.mxu0 0.0
    %3711 = vmatpush2.msra.mxu0 0.0
    %3712 = vmatprep.subr.mxu0 0.0
    %3713 = vmatpush2.msra.mxu0 0.0
    %3714 = vmatprep.subr.mxu0 0.0
    %3715 = vmatpush2.msra.mxu0 0.0
    %3716 = vmatprep.subr.mxu0 0.0
    %3717 = vmatpush2.msra.mxu0 0.0
    %3718 = vmatprep.subr.mxu0 0.0
    %3719 = vmatpush2.msra.mxu0 0.0
    %3720 = vmatprep.subr.mxu0 0.0
    %3721 = vmatpush2.msra.mxu0 0.0
    %3722 = vmatprep.subr.mxu0 0.0
    %3723 = vmatpush2.msra.mxu0 0.0
    %3724 = vmatprep.subr.mxu0 0.0
    %3725 = vmatpush2.msra.mxu0 0.0
    %3726 = vmatprep.subr.mxu0 0.0
    %3727 = vmatpush2.msra.mxu0 0.0
    %3728 = vmatprep.subr.mxu0 0.0
    %3729 = vmatpush2.msra.mxu0 0.0
    %3730 = vmatprep.subr.mxu0 0.0
    %3731 = vmatpush2.msra.mxu0 0.0
    %3732 = vmatprep.subr.mxu0 0.0
    %3733 = vmatpush2.msra.mxu0 0.0
    %3734 = vmatprep.subr.mxu0 0.0
    %3735 = vmatpush2.msra.mxu0 0.0
    %3736 = vmatprep.subr.mxu0 0.0
    %3737 = vmatpush2.msra.mxu0 0.0
    %3738 = vmatprep.subr.mxu0 0.0
    %3739 = vmatpush2.msra.mxu0 0.0
    %3740 = vmatprep.subr.mxu0 0.0
    %3741 = vmatpush2.msra.mxu0 0.0
    %3742 = vmatprep.mubr.f32.mxu0 0.0
    %3743 = vmatmul.mubr.f32.gmra.mxu0 %v3598
    %v3744 = vpop.f32.mrf.mxu0
    %v3745 = vadd.f32 0.0, %v3744
    %v3746 = vpop.f32.mrf.mxu0
    %3747 = vmatprep.mubr.f32.mxu0 0.0
    %3748 = vmatmul.mubr.f32.gmra.mxu0 %v3601
    %v3749 = vpop.f32.mrf.mxu0
    %v3750 = vadd.f32 0.0, %v3749
    %v3751 = vpop.f32.mrf.mxu0
    %3752 = vdwg.mxu0
    %3753 = vmatprep.subr.mxu0 0.0
    %3754 = vmatpush1.msra.mxu0 0.0
    %3755 = vmatprep.subr.mxu0 0.0
    %3756 = vmatpush1.msra.mxu0 0.0
    %3757 = vmatprep.subr.mxu0 0.0
    %3758 = vmatpush1.msra.mxu0 0.0
    %3759 = vmatprep.subr.mxu0 0.0
    %3760 = vmatpush1.msra.mxu0 0.0
    %3761 = vmatprep.subr.mxu0 0.0
    %3762 = vmatpush1.msra.mxu0 0.0
    %3763 = vmatprep.subr.mxu0 0.0
    %3764 = vmatpush1.msra.mxu0 0.0
    %3765 = vmatprep.subr.mxu0 0.0
    %3766 = vmatpush1.msra.mxu0 0.0
    %3767 = vmatprep.subr.mxu0 0.0
    %3768 = vmatpush1.msra.mxu0 0.0
    %3769 = vmatprep.subr.mxu0 0.0
    %3770 = vmatpush1.msra.mxu0 0.0
    %3771 = vmatprep.subr.mxu0 0.0
    %3772 = vmatpush1.msra.mxu0 0.0
    %3773 = vmatprep.subr.mxu0 0.0
    %3774 = vmatpush1.msra.mxu0 0.0
    %3775 = vmatprep.subr.mxu0 0.0
    %3776 = vmatpush1.msra.mxu0 0.0
    %3777 = vmatprep.subr.mxu0 0.0
    %3778 = vmatpush1.msra.mxu0 %v3592
    %3779 = vmatprep.subr.mxu0 0.0
    %3780 = vmatpush1.msra.mxu0 %v3591
    %3781 = vmatprep.subr.mxu0 0.0
    %3782 = vmatpush1.msra.mxu0 %v3590
    %3783 = vmatprep.subr.mxu0 0.0
    %3784 = vmatpush1.msra.mxu0 %v3589
    %3785 = vmatprep.subr.mxu0 0.0
    %3786 = vmatpush2.msra.mxu0 0.0
    %3787 = vmatprep.subr.mxu0 0.0
    %3788 = vmatpush2.msra.mxu0 0.0
    %3789 = vmatprep.subr.mxu0 0.0
    %3790 = vmatpush2.msra.mxu0 0.0
    %3791 = vmatprep.subr.mxu0 0.0
    %3792 = vmatpush2.msra.mxu0 0.0
    %3793 = vmatprep.subr.mxu0 0.0
    %3794 = vmatpush2.msra.mxu0 0.0
    %3795 = vmatprep.subr.mxu0 0.0
    %3796 = vmatpush2.msra.mxu0 0.0
    %3797 = vmatprep.subr.mxu0 0.0
    %3798 = vmatpush2.msra.mxu0 0.0
    %3799 = vmatprep.subr.mxu0 0.0
    %3800 = vmatpush2.msra.mxu0 0.0
    %3801 = vmatprep.subr.mxu0 0.0
    %3802 = vmatpush2.msra.mxu0 0.0
    %3803 = vmatprep.subr.mxu0 0.0
    %3804 = vmatpush2.msra.mxu0 0.0
    %3805 = vmatprep.subr.mxu0 0.0
    %3806 = vmatpush2.msra.mxu0 0.0
    %3807 = vmatprep.subr.mxu0 0.0
    %3808 = vmatpush2.msra.mxu0 0.0
    %3809 = vmatprep.subr.mxu0 0.0
    %3810 = vmatpush2.msra.mxu0 0.0
    %3811 = vmatprep.subr.mxu0 0.0
    %3812 = vmatpush2.msra.mxu0 0.0
    %3813 = vmatprep.subr.mxu0 0.0
    %3814 = vmatpush2.msra.mxu0 0.0
    %3815 = vmatprep.subr.mxu0 0.0
    %3816 = vmatpush2.msra.mxu0 0.0
    %3817 = vmatprep.mubr.f32.mxu0 0.0
    %3818 = vmatmul.mubr.f32.gmra.mxu0 %v3598
    %v3819 = vpop.f32.mrf.mxu0
    %v3820 = vadd.f32 0.0, %v3819
    %v3821 = vpop.f32.mrf.mxu0
    %3822 = vmatprep.mubr.f32.mxu0 0.0
    %3823 = vmatmul.mubr.f32.gmra.mxu0 %v3601
    %v3824 = vpop.f32.mrf.mxu0
    %v3825 = vadd.f32 0.0, %v3824
    %v3826 = vpop.f32.mrf.mxu0
    %3827 = vdwg.mxu0
    %3828 = vmatprep.subr.mxu0 0.0
    %3829 = vmatpush1.msra.mxu0 0.0
    %3830 = vmatprep.subr.mxu0 0.0
    %3831 = vmatpush1.msra.mxu0 0.0
    %3832 = vmatprep.subr.mxu0 0.0
    %3833 = vmatpush1.msra.mxu0 0.0
    %3834 = vmatprep.subr.mxu0 0.0
    %3835 = vmatpush1.msra.mxu0 0.0
    %3836 = vmatprep.subr.mxu0 0.0
    %3837 = vmatpush1.msra.mxu0 0.0
    %3838 = vmatprep.subr.mxu0 0.0
    %3839 = vmatpush1.msra.mxu0 0.0
    %3840 = vmatprep.subr.mxu0 0.0
    %3841 = vmatpush1.msra.mxu0 0.0
    %3842 = vmatprep.subr.mxu0 0.0
    %3843 = vmatpush1.msra.mxu0 0.0
    %3844 = vmatprep.subr.mxu0 0.0
    %3845 = vmatpush1.msra.mxu0 0.0
    %3846 = vmatprep.subr.mxu0 0.0
    %3847 = vmatpush1.msra.mxu0 0.0
    %3848 = vmatprep.subr.mxu0 0.0
    %3849 = vmatpush1.msra.mxu0 0.0
    %3850 = vmatprep.subr.mxu0 0.0
    %3851 = vmatpush1.msra.mxu0 0.0
    %3852 = vmatprep.subr.mxu0 0.0
    %3853 = vmatpush1.msra.mxu0 %v3596
    %3854 = vmatprep.subr.mxu0 0.0
    %3855 = vmatpush1.msra.mxu0 %v3595
    %3856 = vmatprep.subr.mxu0 0.0
    %3857 = vmatpush1.msra.mxu0 %v3594
    %3858 = vmatprep.subr.mxu0 0.0
    %3859 = vmatpush1.msra.mxu0 %v3593
    %3860 = vmatprep.subr.mxu0 0.0
    %3861 = vmatpush2.msra.mxu0 0.0
    %3862 = vmatprep.subr.mxu0 0.0
    %3863 = vmatpush2.msra.mxu0 0.0
    %3864 = vmatprep.subr.mxu0 0.0
    %3865 = vmatpush2.msra.mxu0 0.0
    %3866 = vmatprep.subr.mxu0 0.0
    %3867 = vmatpush2.msra.mxu0 0.0
    %3868 = vmatprep.subr.mxu0 0.0
    %3869 = vmatpush2.msra.mxu0 0.0
    %3870 = vmatprep.subr.mxu0 0.0
    %3871 = vmatpush2.msra.mxu0 0.0
    %3872 = vmatprep.subr.mxu0 0.0
    %3873 = vmatpush2.msra.mxu0 0.0
    %3874 = vmatprep.subr.mxu0 0.0
    %3875 = vmatpush2.msra.mxu0 0.0
    %3876 = vmatprep.subr.mxu0 0.0
    %3877 = vmatpush2.msra.mxu0 0.0
    %3878 = vmatprep.subr.mxu0 0.0
    %3879 = vmatpush2.msra.mxu0 0.0
    %3880 = vmatprep.subr.mxu0 0.0
    %3881 = vmatpush2.msra.mxu0 0.0
    %3882 = vmatprep.subr.mxu0 0.0
    %3883 = vmatpush2.msra.mxu0 0.0
    %3884 = vmatprep.subr.mxu0 0.0
    %3885 = vmatpush2.msra.mxu0 0.0
    %3886 = vmatprep.subr.mxu0 0.0
    %3887 = vmatpush2.msra.mxu0 0.0
    %3888 = vmatprep.subr.mxu0 0.0
    %3889 = vmatpush2.msra.mxu0 0.0
    %3890 = vmatprep.subr.mxu0 0.0
    %3891 = vmatpush2.msra.mxu0 0.0
    %3892 = vmatprep.mubr.f32.mxu0 0.0
    %3893 = vmatmul.mubr.f32.gmra.mxu0 %v3598
    %v3894 = vpop.f32.mrf.mxu0
    %v3895 = vadd.f32 0.0, %v3894
    %v3896 = vpop.f32.mrf.mxu0
    %3897 = vmatprep.mubr.f32.mxu0 0.0
    %3898 = vmatmul.mubr.f32.gmra.mxu0 %v3601
    %v3899 = vpop.f32.mrf.mxu0
    %v3900 = vadd.f32 0.0, %v3899
    %v3901 = vpop.f32.mrf.mxu0
    %3902 = vdwg.mxu0
    %3905 = vrot.lane.b32.xlu0 %v3670, 120
    %v3906 = vpop.permute.xlu0 %3905
    %3907 = vrot.lane.b32.xlu0 %v3675, 120
    %v3908 = vpop.permute.xlu0 %3907
    %v3909 = vsel %vm406, %v3670, 0
    %v3911 = vsel %vm406, %v3675, 0
    %v3913 = vsel %vm406, %v3906, 0
    %v3915 = vsel %vm406, %v3908, 0
    %3917 = vmatprep.subr.mxu0 0.0
    %3918 = vmatpush1.xpose.msra.mxu0 0.0
    %3919 = vmatprep.subr.mxu0 0.0
    %3920 = vmatpush1.xpose.msra.mxu0 0.0
    %3921 = vmatprep.subr.mxu0 0.0
    %3922 = vmatpush1.xpose.msra.mxu0 0.0
    %3923 = vmatprep.subr.mxu0 0.0
    %3924 = vmatpush1.xpose.msra.mxu0 0.0
    %3925 = vmatprep.subr.mxu0 0.0
    %3926 = vmatpush1.xpose.msra.mxu0 0.0
    %3927 = vmatprep.subr.mxu0 0.0
    %3928 = vmatpush1.xpose.msra.mxu0 0.0
    %3929 = vmatprep.subr.mxu0 0.0
    %3930 = vmatpush1.xpose.msra.mxu0 0.0
    %3931 = vmatprep.subr.mxu0 0.0
    %3932 = vmatpush1.xpose.msra.mxu0 0.0
    %3933 = vmatprep.subr.mxu0 0.0
    %3934 = vmatpush1.xpose.msra.mxu0 0.0
    %3935 = vmatprep.subr.mxu0 0.0
    %3936 = vmatpush1.xpose.msra.mxu0 0.0
    %3937 = vmatprep.subr.mxu0 0.0
    %3938 = vmatpush1.xpose.msra.mxu0 0.0
    %3939 = vmatprep.subr.mxu0 0.0
    %3940 = vmatpush1.xpose.msra.mxu0 0.0
    %3941 = vmatprep.subr.mxu0 0.0
    %3942 = vmatpush1.xpose.msra.mxu0 0.0
    %3943 = vmatprep.subr.mxu0 0.0
    %3944 = vmatpush1.xpose.msra.mxu0 0.0
    %3945 = vmatprep.subr.mxu0 0.0
    %3946 = vmatpush1.xpose.msra.mxu0 %v3915
    %3947 = vmatprep.subr.mxu0 0.0
    %3948 = vmatpush1.xpose.msra.mxu0 %v3913
    %3949 = vmatprep.subr.mxu0 0.0
    %3950 = vmatpush2.xpose.msra.mxu0 0.0
    %3951 = vmatprep.subr.mxu0 0.0
    %3952 = vmatpush2.xpose.msra.mxu0 0.0
    %3953 = vmatprep.subr.mxu0 0.0
    %3954 = vmatpush2.xpose.msra.mxu0 0.0
    %3955 = vmatprep.subr.mxu0 0.0
    %3956 = vmatpush2.xpose.msra.mxu0 0.0
    %3957 = vmatprep.subr.mxu0 0.0
    %3958 = vmatpush2.xpose.msra.mxu0 0.0
    %3959 = vmatprep.subr.mxu0 0.0
    %3960 = vmatpush2.xpose.msra.mxu0 0.0
    %3961 = vmatprep.subr.mxu0 0.0
    %3962 = vmatpush2.xpose.msra.mxu0 0.0
    %3963 = vmatprep.subr.mxu0 0.0
    %3964 = vmatpush2.xpose.msra.mxu0 0.0
    %3965 = vmatprep.subr.mxu0 0.0
    %3966 = vmatpush2.xpose.msra.mxu0 0.0
    %3967 = vmatprep.subr.mxu0 0.0
    %3968 = vmatpush2.xpose.msra.mxu0 0.0
    %3969 = vmatprep.subr.mxu0 0.0
    %3970 = vmatpush2.xpose.msra.mxu0 0.0
    %3971 = vmatprep.subr.mxu0 0.0
    %3972 = vmatpush2.xpose.msra.mxu0 0.0
    %3973 = vmatprep.subr.mxu0 0.0
    %3974 = vmatpush2.xpose.msra.mxu0 0.0
    %3975 = vmatprep.subr.mxu0 0.0
    %3976 = vmatpush2.xpose.msra.mxu0 0.0
    %3977 = vmatprep.subr.mxu0 0.0
    %3978 = vmatpush2.xpose.msra.mxu0 0.0
    %3979 = vmatprep.subr.mxu0 0.0
    %3980 = vmatpush2.xpose.msra.mxu0 0.0
    %3981 = vmatprep.mubr.f32.mxu0 0.0
    %3982 = vmatmul.mubr.f32.gmra.mxu0 %v3909
    %v3983 = vpop.f32.mrf.mxu0
    %v3984 = vadd.f32 0.0, %v3983
    %v3985 = vpop.f32.mrf.mxu0
    %3986 = vmatprep.mubr.f32.mxu0 0.0
    %3987 = vmatmul.mubr.f32.gmra.mxu0 %v3911
    %v3988 = vpop.f32.mrf.mxu0
    %v3989 = vadd.f32 0.0, %v3988
    %v3990 = vpop.f32.mrf.mxu0
    %3991 = vdwg.mxu0
    %3994 = vrot.lane.b32.xlu0 %v3745, 120
    %v3995 = vpop.permute.xlu0 %3994
    %3996 = vrot.lane.b32.xlu0 %v3750, 120
    %v3997 = vpop.permute.xlu0 %3996
    %v3998 = vsel %vm406, %v3745, 0
    %v4000 = vsel %vm406, %v3750, 0
    %v4002 = vsel %vm406, %v3995, 0
    %v4004 = vsel %vm406, %v3997, 0
    %4006 = vmatprep.subr.mxu0 0.0
    %4007 = vmatpush1.xpose.msra.mxu0 0.0
    %4008 = vmatprep.subr.mxu0 0.0
    %4009 = vmatpush1.xpose.msra.mxu0 0.0
    %4010 = vmatprep.subr.mxu0 0.0
    %4011 = vmatpush1.xpose.msra.mxu0 0.0
    %4012 = vmatprep.subr.mxu0 0.0
    %4013 = vmatpush1.xpose.msra.mxu0 0.0
    %4014 = vmatprep.subr.mxu0 0.0
    %4015 = vmatpush1.xpose.msra.mxu0 0.0
    %4016 = vmatprep.subr.mxu0 0.0
    %4017 = vmatpush1.xpose.msra.mxu0 0.0
    %4018 = vmatprep.subr.mxu0 0.0
    %4019 = vmatpush1.xpose.msra.mxu0 0.0
    %4020 = vmatprep.subr.mxu0 0.0
    %4021 = vmatpush1.xpose.msra.mxu0 0.0
    %4022 = vmatprep.subr.mxu0 0.0
    %4023 = vmatpush1.xpose.msra.mxu0 0.0
    %4024 = vmatprep.subr.mxu0 0.0
    %4025 = vmatpush1.xpose.msra.mxu0 0.0
    %4026 = vmatprep.subr.mxu0 0.0
    %4027 = vmatpush1.xpose.msra.mxu0 0.0
    %4028 = vmatprep.subr.mxu0 0.0
    %4029 = vmatpush1.xpose.msra.mxu0 0.0
    %4030 = vmatprep.subr.mxu0 0.0
    %4031 = vmatpush1.xpose.msra.mxu0 0.0
    %4032 = vmatprep.subr.mxu0 0.0
    %4033 = vmatpush1.xpose.msra.mxu0 0.0
    %4034 = vmatprep.subr.mxu0 0.0
    %4035 = vmatpush1.xpose.msra.mxu0 %v4004
    %4036 = vmatprep.subr.mxu0 0.0
    %4037 = vmatpush1.xpose.msra.mxu0 %v4002
    %4038 = vmatprep.subr.mxu0 0.0
    %4039 = vmatpush2.xpose.msra.mxu0 0.0
    %4040 = vmatprep.subr.mxu0 0.0
    %4041 = vmatpush2.xpose.msra.mxu0 0.0
    %4042 = vmatprep.subr.mxu0 0.0
    %4043 = vmatpush2.xpose.msra.mxu0 0.0
    %4044 = vmatprep.subr.mxu0 0.0
    %4045 = vmatpush2.xpose.msra.mxu0 0.0
    %4046 = vmatprep.subr.mxu0 0.0
    %4047 = vmatpush2.xpose.msra.mxu0 0.0
    %4048 = vmatprep.subr.mxu0 0.0
    %4049 = vmatpush2.xpose.msra.mxu0 0.0
    %4050 = vmatprep.subr.mxu0 0.0
    %4051 = vmatpush2.xpose.msra.mxu0 0.0
    %4052 = vmatprep.subr.mxu0 0.0
    %4053 = vmatpush2.xpose.msra.mxu0 0.0
    %4054 = vmatprep.subr.mxu0 0.0
    %4055 = vmatpush2.xpose.msra.mxu0 0.0
    %4056 = vmatprep.subr.mxu0 0.0
    %4057 = vmatpush2.xpose.msra.mxu0 0.0
    %4058 = vmatprep.subr.mxu0 0.0
    %4059 = vmatpush2.xpose.msra.mxu0 0.0
    %4060 = vmatprep.subr.mxu0 0.0
    %4061 = vmatpush2.xpose.msra.mxu0 0.0
    %4062 = vmatprep.subr.mxu0 0.0
    %4063 = vmatpush2.xpose.msra.mxu0 0.0
    %4064 = vmatprep.subr.mxu0 0.0
    %4065 = vmatpush2.xpose.msra.mxu0 0.0
    %4066 = vmatprep.subr.mxu0 0.0
    %4067 = vmatpush2.xpose.msra.mxu0 0.0
    %4068 = vmatprep.subr.mxu0 0.0
    %4069 = vmatpush2.xpose.msra.mxu0 0.0
    %4070 = vmatprep.mubr.f32.mxu0 0.0
    %4071 = vmatmul.mubr.f32.gmra.mxu0 %v3998
    %v4072 = vpop.f32.mrf.mxu0
    %v4073 = vadd.f32 0.0, %v4072
    %v4074 = vpop.f32.mrf.mxu0
    %4075 = vmatprep.mubr.f32.mxu0 0.0
    %4076 = vmatmul.mubr.f32.gmra.mxu0 %v4000
    %v4077 = vpop.f32.mrf.mxu0
    %v4078 = vadd.f32 0.0, %v4077
    %v4079 = vpop.f32.mrf.mxu0
    %4080 = vdwg.mxu0
    %4083 = vrot.lane.b32.xlu0 %v3820, 120
    %v4084 = vpop.permute.xlu0 %4083
    %4085 = vrot.lane.b32.xlu0 %v3825, 120
    %v4086 = vpop.permute.xlu0 %4085
    %v4087 = vsel %vm406, %v3820, 0
    %v4089 = vsel %vm406, %v3825, 0
    %v4091 = vsel %vm406, %v4084, 0
    %v4093 = vsel %vm406, %v4086, 0
    %4095 = vmatprep.subr.mxu0 0.0
    %4096 = vmatpush1.xpose.msra.mxu0 0.0
    %4097 = vmatprep.subr.mxu0 0.0
    %4098 = vmatpush1.xpose.msra.mxu0 0.0
    %4099 = vmatprep.subr.mxu0 0.0
    %4100 = vmatpush1.xpose.msra.mxu0 0.0
    %4101 = vmatprep.subr.mxu0 0.0
    %4102 = vmatpush1.xpose.msra.mxu0 0.0
    %4103 = vmatprep.subr.mxu0 0.0
    %4104 = vmatpush1.xpose.msra.mxu0 0.0
    %4105 = vmatprep.subr.mxu0 0.0
    %4106 = vmatpush1.xpose.msra.mxu0 0.0
    %4107 = vmatprep.subr.mxu0 0.0
    %4108 = vmatpush1.xpose.msra.mxu0 0.0
    %4109 = vmatprep.subr.mxu0 0.0
    %4110 = vmatpush1.xpose.msra.mxu0 0.0
    %4111 = vmatprep.subr.mxu0 0.0
    %4112 = vmatpush1.xpose.msra.mxu0 0.0
    %4113 = vmatprep.subr.mxu0 0.0
    %4114 = vmatpush1.xpose.msra.mxu0 0.0
    %4115 = vmatprep.subr.mxu0 0.0
    %4116 = vmatpush1.xpose.msra.mxu0 0.0
    %4117 = vmatprep.subr.mxu0 0.0
    %4118 = vmatpush1.xpose.msra.mxu0 0.0
    %4119 = vmatprep.subr.mxu0 0.0
    %4120 = vmatpush1.xpose.msra.mxu0 0.0
    %4121 = vmatprep.subr.mxu0 0.0
    %4122 = vmatpush1.xpose.msra.mxu0 0.0
    %4123 = vmatprep.subr.mxu0 0.0
    %4124 = vmatpush1.xpose.msra.mxu0 %v4093
    %4125 = vmatprep.subr.mxu0 0.0
    %4126 = vmatpush1.xpose.msra.mxu0 %v4091
    %4127 = vmatprep.subr.mxu0 0.0
    %4128 = vmatpush2.xpose.msra.mxu0 0.0
    %4129 = vmatprep.subr.mxu0 0.0
    %4130 = vmatpush2.xpose.msra.mxu0 0.0
    %4131 = vmatprep.subr.mxu0 0.0
    %4132 = vmatpush2.xpose.msra.mxu0 0.0
    %4133 = vmatprep.subr.mxu0 0.0
    %4134 = vmatpush2.xpose.msra.mxu0 0.0
    %4135 = vmatprep.subr.mxu0 0.0
    %4136 = vmatpush2.xpose.msra.mxu0 0.0
    %4137 = vmatprep.subr.mxu0 0.0
    %4138 = vmatpush2.xpose.msra.mxu0 0.0
    %4139 = vmatprep.subr.mxu0 0.0
    %4140 = vmatpush2.xpose.msra.mxu0 0.0
    %4141 = vmatprep.subr.mxu0 0.0
    %4142 = vmatpush2.xpose.msra.mxu0 0.0
    %4143 = vmatprep.subr.mxu0 0.0
    %4144 = vmatpush2.xpose.msra.mxu0 0.0
    %4145 = vmatprep.subr.mxu0 0.0
    %4146 = vmatpush2.xpose.msra.mxu0 0.0
    %4147 = vmatprep.subr.mxu0 0.0
    %4148 = vmatpush2.xpose.msra.mxu0 0.0
    %4149 = vmatprep.subr.mxu0 0.0
    %4150 = vmatpush2.xpose.msra.mxu0 0.0
    %4151 = vmatprep.subr.mxu0 0.0
    %4152 = vmatpush2.xpose.msra.mxu0 0.0
    %4153 = vmatprep.subr.mxu0 0.0
    %4154 = vmatpush2.xpose.msra.mxu0 0.0
    %4155 = vmatprep.subr.mxu0 0.0
    %4156 = vmatpush2.xpose.msra.mxu0 0.0
    %4157 = vmatprep.subr.mxu0 0.0
    %4158 = vmatpush2.xpose.msra.mxu0 0.0
    %4159 = vmatprep.mubr.f32.mxu0 0.0
    %4160 = vmatmul.mubr.f32.gmra.mxu0 %v4087
    %v4161 = vpop.f32.mrf.mxu0
    %v4162 = vadd.f32 0.0, %v4161
    %v4163 = vpop.f32.mrf.mxu0
    %4164 = vmatprep.mubr.f32.mxu0 0.0
    %4165 = vmatmul.mubr.f32.gmra.mxu0 %v4089
    %v4166 = vpop.f32.mrf.mxu0
    %v4167 = vadd.f32 0.0, %v4166
    %v4168 = vpop.f32.mrf.mxu0
    %4169 = vdwg.mxu0
    %4172 = vrot.lane.b32.xlu0 %v3895, 120
    %v4173 = vpop.permute.xlu0 %4172
    %4174 = vrot.lane.b32.xlu0 %v3900, 120
    %v4175 = vpop.permute.xlu0 %4174
    %v4176 = vsel %vm406, %v3895, 0
    %v4178 = vsel %vm406, %v3900, 0
    %v4180 = vsel %vm406, %v4173, 0
    %v4182 = vsel %vm406, %v4175, 0
    %4184 = vmatprep.subr.mxu0 0.0
    %4185 = vmatpush1.xpose.msra.mxu0 0.0
    %4186 = vmatprep.subr.mxu0 0.0
    %4187 = vmatpush1.xpose.msra.mxu0 0.0
    %4188 = vmatprep.subr.mxu0 0.0
    %4189 = vmatpush1.xpose.msra.mxu0 0.0
    %4190 = vmatprep.subr.mxu0 0.0
    %4191 = vmatpush1.xpose.msra.mxu0 0.0
    %4192 = vmatprep.subr.mxu0 0.0
    %4193 = vmatpush1.xpose.msra.mxu0 0.0
    %4194 = vmatprep.subr.mxu0 0.0
    %4195 = vmatpush1.xpose.msra.mxu0 0.0
    %4196 = vmatprep.subr.mxu0 0.0
    %4197 = vmatpush1.xpose.msra.mxu0 0.0
    %4198 = vmatprep.subr.mxu0 0.0
    %4199 = vmatpush1.xpose.msra.mxu0 0.0
    %4200 = vmatprep.subr.mxu0 0.0
    %4201 = vmatpush1.xpose.msra.mxu0 0.0
    %4202 = vmatprep.subr.mxu0 0.0
    %4203 = vmatpush1.xpose.msra.mxu0 0.0
    %4204 = vmatprep.subr.mxu0 0.0
    %4205 = vmatpush1.xpose.msra.mxu0 0.0
    %4206 = vmatprep.subr.mxu0 0.0
    %4207 = vmatpush1.xpose.msra.mxu0 0.0
    %4208 = vmatprep.subr.mxu0 0.0
    %4209 = vmatpush1.xpose.msra.mxu0 0.0
    %4210 = vmatprep.subr.mxu0 0.0
    %4211 = vmatpush1.xpose.msra.mxu0 0.0
    %4212 = vmatprep.subr.mxu0 0.0
    %4213 = vmatpush1.xpose.msra.mxu0 %v4182
    %4214 = vmatprep.subr.mxu0 0.0
    %4215 = vmatpush1.xpose.msra.mxu0 %v4180
    %4216 = vmatprep.subr.mxu0 0.0
    %4217 = vmatpush2.xpose.msra.mxu0 0.0
    %4218 = vmatprep.subr.mxu0 0.0
    %4219 = vmatpush2.xpose.msra.mxu0 0.0
    %4220 = vmatprep.subr.mxu0 0.0
    %4221 = vmatpush2.xpose.msra.mxu0 0.0
    %4222 = vmatprep.subr.mxu0 0.0
    %4223 = vmatpush2.xpose.msra.mxu0 0.0
    %4224 = vmatprep.subr.mxu0 0.0
    %4225 = vmatpush2.xpose.msra.mxu0 0.0
    %4226 = vmatprep.subr.mxu0 0.0
    %4227 = vmatpush2.xpose.msra.mxu0 0.0
    %4228 = vmatprep.subr.mxu0 0.0
    %4229 = vmatpush2.xpose.msra.mxu0 0.0
    %4230 = vmatprep.subr.mxu0 0.0
    %4231 = vmatpush2.xpose.msra.mxu0 0.0
    %4232 = vmatprep.subr.mxu0 0.0
    %4233 = vmatpush2.xpose.msra.mxu0 0.0
    %4234 = vmatprep.subr.mxu0 0.0
    %4235 = vmatpush2.xpose.msra.mxu0 0.0
    %4236 = vmatprep.subr.mxu0 0.0
    %4237 = vmatpush2.xpose.msra.mxu0 0.0
    %4238 = vmatprep.subr.mxu0 0.0
    %4239 = vmatpush2.xpose.msra.mxu0 0.0
    %4240 = vmatprep.subr.mxu0 0.0
    %4241 = vmatpush2.xpose.msra.mxu0 0.0
    %4242 = vmatprep.subr.mxu0 0.0
    %4243 = vmatpush2.xpose.msra.mxu0 0.0
    %4244 = vmatprep.subr.mxu0 0.0
    %4245 = vmatpush2.xpose.msra.mxu0 0.0
    %4246 = vmatprep.subr.mxu0 0.0
    %4247 = vmatpush2.xpose.msra.mxu0 0.0
    %4248 = vmatprep.mubr.f32.mxu0 0.0
    %4249 = vmatmul.mubr.f32.gmra.mxu0 %v4176
    %v4250 = vpop.f32.mrf.mxu0
    %v4251 = vadd.f32 0.0, %v4250
    %v4252 = vpop.f32.mrf.mxu0
    %4253 = vmatprep.mubr.f32.mxu0 0.0
    %4254 = vmatmul.mubr.f32.gmra.mxu0 %v4178
    %v4255 = vpop.f32.mrf.mxu0
    %v4256 = vadd.f32 0.0, %v4255
    %v4257 = vpop.f32.mrf.mxu0
    %4258 = vdwg.mxu0
    %v4259 = vmul.f32 %v3984, 0.35355338
    %v4260 = vmul.f32 %v3989, 0.35355338
    %v4261 = vmul.f32 %v4073, 0.35355338
    %v4262 = vmul.f32 %v4078, 0.35355338
    %v4263 = vmul.f32 %v4162, 0.35355338
    %v4264 = vmul.f32 %v4167, 0.35355338
    %v4265 = vmul.f32 %v4251, 0.35355338
    %v4266 = vmul.f32 %v4256, 0.35355338
    %v4267 = vadd.f32 %v4259, %v35
    %v4268 = vadd.f32 %v4260, %v36
    %v4269 = vadd.f32 %v4261, %v35
    %v4270 = vadd.f32 %v4262, %v36
    %v4271 = vadd.f32 %v4263, %v35
    %v4272 = vadd.f32 %v4264, %v36
    %v4273 = vadd.f32 %v4265, %v35
    %v4274 = vadd.f32 %v4266, %v36
    %v4275 = vsel %vm773, %v4267, -inf
    %4276 = vmax.xlane.f32.xlu0 %v4275
    %v4277 = vpop.xlane.xlu0 %4276
    %v4278 = vsel %vm773, %v4268, -inf
    %4279 = vmax.xlane.f32.xlu0 %v4278
    %v4280 = vpop.xlane.xlu0 %4279
    %v4281 = vsel %vm773, %v4269, -inf
    %4282 = vmax.xlane.f32.xlu0 %v4281
    %v4283 = vpop.xlane.xlu0 %4282
    %v4284 = vsel %vm773, %v4270, -inf
    %4285 = vmax.xlane.f32.xlu0 %v4284
    %v4286 = vpop.xlane.xlu0 %4285
    %v4287 = vsel %vm773, %v4271, -inf
    %4288 = vmax.xlane.f32.xlu0 %v4287
    %v4289 = vpop.xlane.xlu0 %4288
    %v4290 = vsel %vm773, %v4272, -inf
    %4291 = vmax.xlane.f32.xlu0 %v4290
    %v4292 = vpop.xlane.xlu0 %4291
    %v4293 = vsel %vm773, %v4273, -inf
    %4294 = vmax.xlane.f32.xlu0 %v4293
    %v4295 = vpop.xlane.xlu0 %4294
    %v4296 = vsel %vm773, %v4274, -inf
    %4297 = vmax.xlane.f32.xlu0 %v4296
    %v4298 = vpop.xlane.xlu0 %4297
    %v4299 = vsub.f32 %v4267, %v4277
    %v4300 = vsub.f32 %v4268, %v4280
    %v4301 = vsub.f32 %v4269, %v4283
    %v4302 = vsub.f32 %v4270, %v4286
    %v4303 = vsub.f32 %v4271, %v4289
    %v4304 = vsub.f32 %v4272, %v4292
    %v4305 = vsub.f32 %v4273, %v4295
    %v4306 = vsub.f32 %v4274, %v4298
    %v4307 = vmul.f32 %v4299, 1.442695
    %v4308 = vpow.pop %v4307
    %v4309 = vmul.f32 %v4300, 1.442695
    %v4310 = vpow.pop %v4309
    %v4311 = vmul.f32 %v4301, 1.442695
    %v4312 = vpow.pop %v4311
    %v4313 = vmul.f32 %v4302, 1.442695
    %v4314 = vpow.pop %v4313
    %v4315 = vmul.f32 %v4303, 1.442695
    %v4316 = vpow.pop %v4315
    %v4317 = vmul.f32 %v4304, 1.442695
    %v4318 = vpow.pop %v4317
    %v4319 = vmul.f32 %v4305, 1.442695
    %v4320 = vpow.pop %v4319
    %v4321 = vmul.f32 %v4306, 1.442695
    %v4322 = vpow.pop %v4321
    %v4323 = vsel %vm773, %v4308, 0.0
    %4324 = vadd.xlane.f32.xlu0 %v4323
    %v4325 = vpop.xlane.xlu0 %4324
    %v4326 = vsel %vm773, %v4310, 0.0
    %4327 = vadd.xlane.f32.xlu0 %v4326
    %v4328 = vpop.xlane.xlu0 %4327
    %v4329 = vsel %vm773, %v4312, 0.0
    %4330 = vadd.xlane.f32.xlu0 %v4329
    %v4331 = vpop.xlane.xlu0 %4330
    %v4332 = vsel %vm773, %v4314, 0.0
    %4333 = vadd.xlane.f32.xlu0 %v4332
    %v4334 = vpop.xlane.xlu0 %4333
    %v4335 = vsel %vm773, %v4316, 0.0
    %4336 = vadd.xlane.f32.xlu0 %v4335
    %v4337 = vpop.xlane.xlu0 %4336
    %v4338 = vsel %vm773, %v4318, 0.0
    %4339 = vadd.xlane.f32.xlu0 %v4338
    %v4340 = vpop.xlane.xlu0 %4339
    %v4341 = vsel %vm773, %v4320, 0.0
    %4342 = vadd.xlane.f32.xlu0 %v4341
    %v4343 = vpop.xlane.xlu0 %4342
    %v4344 = vsel %vm773, %v4322, 0.0
    %4345 = vadd.xlane.f32.xlu0 %v4344
    %v4346 = vpop.xlane.xlu0 %4345
    %v4347 = vrcp.pop %v4325
    %v4348 = vmul.f32 %v4308, %v4347
    %v4349 = vrcp.pop %v4328
    %v4350 = vmul.f32 %v4310, %v4349
    %v4351 = vrcp.pop %v4331
    %v4352 = vmul.f32 %v4312, %v4351
    %v4353 = vrcp.pop %v4334
    %v4354 = vmul.f32 %v4314, %v4353
    %v4355 = vrcp.pop %v4337
    %v4356 = vmul.f32 %v4316, %v4355
    %v4357 = vrcp.pop %v4340
    %v4358 = vmul.f32 %v4318, %v4357
    %v4359 = vrcp.pop %v4343
    %v4360 = vmul.f32 %v4320, %v4359
    %v4361 = vrcp.pop %v4346
    %v4362 = vmul.f32 %v4322, %v4361
    %4363 = vrot.lane.b32.xlu0 %v3670, 112
    %v4364 = vpop.permute.xlu0 %4363
    %4365 = vrot.lane.b32.xlu0 %v3675, 112
    %v4366 = vpop.permute.xlu0 %4365
    %v4370 = vsel %vm773, %v4348, 0
    %v4373 = vsel %vm773, %v4350, 0
    %4375 = vmatprep.subr.mxu0 0.0
    %4376 = vmatpush1.msra.mxu0 0.0
    %4377 = vmatprep.subr.mxu0 0.0
    %4378 = vmatpush1.msra.mxu0 0.0
    %4379 = vmatprep.subr.mxu0 0.0
    %4380 = vmatpush1.msra.mxu0 0.0
    %4381 = vmatprep.subr.mxu0 0.0
    %4382 = vmatpush1.msra.mxu0 0.0
    %4383 = vmatprep.subr.mxu0 0.0
    %4384 = vmatpush1.msra.mxu0 0.0
    %4385 = vmatprep.subr.mxu0 0.0
    %4386 = vmatpush1.msra.mxu0 0.0
    %4387 = vmatprep.subr.mxu0 0.0
    %4388 = vmatpush1.msra.mxu0 0.0
    %4389 = vmatprep.subr.mxu0 0.0
    %4390 = vmatpush1.msra.mxu0 0.0
    %4391 = vmatprep.subr.mxu0 0.0
    %4392 = vmatpush1.msra.mxu0 0.0
    %4393 = vmatprep.subr.mxu0 0.0
    %4394 = vmatpush1.msra.mxu0 0.0
    %4395 = vmatprep.subr.mxu0 0.0
    %4396 = vmatpush1.msra.mxu0 0.0
    %4397 = vmatprep.subr.mxu0 0.0
    %4398 = vmatpush1.msra.mxu0 0.0
    %4399 = vmatprep.subr.mxu0 0.0
    %4400 = vmatpush1.msra.mxu0 0.0
    %4401 = vmatprep.subr.mxu0 0.0
    %4402 = vmatpush1.msra.mxu0 0.0
    %4403 = vmatprep.subr.mxu0 0.0
    %4404 = vmatpush1.msra.mxu0 %v4366
    %4405 = vmatprep.subr.mxu0 0.0
    %4406 = vmatpush1.msra.mxu0 %v4364
    %4407 = vmatprep.subr.mxu0 0.0
    %4408 = vmatpush2.msra.mxu0 0.0
    %4409 = vmatprep.subr.mxu0 0.0
    %4410 = vmatpush2.msra.mxu0 0.0
    %4411 = vmatprep.subr.mxu0 0.0
    %4412 = vmatpush2.msra.mxu0 0.0
    %4413 = vmatprep.subr.mxu0 0.0
    %4414 = vmatpush2.msra.mxu0 0.0
    %4415 = vmatprep.subr.mxu0 0.0
    %4416 = vmatpush2.msra.mxu0 0.0
    %4417 = vmatprep.subr.mxu0 0.0
    %4418 = vmatpush2.msra.mxu0 0.0
    %4419 = vmatprep.subr.mxu0 0.0
    %4420 = vmatpush2.msra.mxu0 0.0
    %4421 = vmatprep.subr.mxu0 0.0
    %4422 = vmatpush2.msra.mxu0 0.0
    %4423 = vmatprep.subr.mxu0 0.0
    %4424 = vmatpush2.msra.mxu0 0.0
    %4425 = vmatprep.subr.mxu0 0.0
    %4426 = vmatpush2.msra.mxu0 0.0
    %4427 = vmatprep.subr.mxu0 0.0
    %4428 = vmatpush2.msra.mxu0 0.0
    %4429 = vmatprep.subr.mxu0 0.0
    %4430 = vmatpush2.msra.mxu0 0.0
    %4431 = vmatprep.subr.mxu0 0.0
    %4432 = vmatpush2.msra.mxu0 0.0
    %4433 = vmatprep.subr.mxu0 0.0
    %4434 = vmatpush2.msra.mxu0 0.0
    %4435 = vmatprep.subr.mxu0 0.0
    %4436 = vmatpush2.msra.mxu0 0.0
    %4437 = vmatprep.subr.mxu0 0.0
    %4438 = vmatpush2.msra.mxu0 0.0
    %4439 = vmatprep.mubr.f32.mxu0 0.0
    %4440 = vmatmul.mubr.f32.gmra.mxu0 %v4370
    %v4441 = vpop.f32.mrf.mxu0
    %v4442 = vadd.f32 0.0, %v4441
    %v4443 = vpop.f32.mrf.mxu0
    %4444 = vmatprep.mubr.f32.mxu0 0.0
    %4445 = vmatmul.mubr.f32.gmra.mxu0 %v4373
    %v4446 = vpop.f32.mrf.mxu0
    %v4447 = vadd.f32 0.0, %v4446
    %v4448 = vpop.f32.mrf.mxu0
    %4449 = vdwg.mxu0
    %4450 = vrot.lane.b32.xlu0 %v3745, 112
    %v4451 = vpop.permute.xlu0 %4450
    %4452 = vrot.lane.b32.xlu0 %v3750, 112
    %v4453 = vpop.permute.xlu0 %4452
    %v4457 = vsel %vm773, %v4352, 0
    %v4460 = vsel %vm773, %v4354, 0
    %4462 = vmatprep.subr.mxu0 0.0
    %4463 = vmatpush1.msra.mxu0 0.0
    %4464 = vmatprep.subr.mxu0 0.0
    %4465 = vmatpush1.msra.mxu0 0.0
    %4466 = vmatprep.subr.mxu0 0.0
    %4467 = vmatpush1.msra.mxu0 0.0
    %4468 = vmatprep.subr.mxu0 0.0
    %4469 = vmatpush1.msra.mxu0 0.0
    %4470 = vmatprep.subr.mxu0 0.0
    %4471 = vmatpush1.msra.mxu0 0.0
    %4472 = vmatprep.subr.mxu0 0.0
    %4473 = vmatpush1.msra.mxu0 0.0
    %4474 = vmatprep.subr.mxu0 0.0
    %4475 = vmatpush1.msra.mxu0 0.0
    %4476 = vmatprep.subr.mxu0 0.0
    %4477 = vmatpush1.msra.mxu0 0.0
    %4478 = vmatprep.subr.mxu0 0.0
    %4479 = vmatpush1.msra.mxu0 0.0
    %4480 = vmatprep.subr.mxu0 0.0
    %4481 = vmatpush1.msra.mxu0 0.0
    %4482 = vmatprep.subr.mxu0 0.0
    %4483 = vmatpush1.msra.mxu0 0.0
    %4484 = vmatprep.subr.mxu0 0.0
    %4485 = vmatpush1.msra.mxu0 0.0
    %4486 = vmatprep.subr.mxu0 0.0
    %4487 = vmatpush1.msra.mxu0 0.0
    %4488 = vmatprep.subr.mxu0 0.0
    %4489 = vmatpush1.msra.mxu0 0.0
    %4490 = vmatprep.subr.mxu0 0.0
    %4491 = vmatpush1.msra.mxu0 %v4453
    %4492 = vmatprep.subr.mxu0 0.0
    %4493 = vmatpush1.msra.mxu0 %v4451
    %4494 = vmatprep.subr.mxu0 0.0
    %4495 = vmatpush2.msra.mxu0 0.0
    %4496 = vmatprep.subr.mxu0 0.0
    %4497 = vmatpush2.msra.mxu0 0.0
    %4498 = vmatprep.subr.mxu0 0.0
    %4499 = vmatpush2.msra.mxu0 0.0
    %4500 = vmatprep.subr.mxu0 0.0
    %4501 = vmatpush2.msra.mxu0 0.0
    %4502 = vmatprep.subr.mxu0 0.0
    %4503 = vmatpush2.msra.mxu0 0.0
    %4504 = vmatprep.subr.mxu0 0.0
    %4505 = vmatpush2.msra.mxu0 0.0
    %4506 = vmatprep.subr.mxu0 0.0
    %4507 = vmatpush2.msra.mxu0 0.0
    %4508 = vmatprep.subr.mxu0 0.0
    %4509 = vmatpush2.msra.mxu0 0.0
    %4510 = vmatprep.subr.mxu0 0.0
    %4511 = vmatpush2.msra.mxu0 0.0
    %4512 = vmatprep.subr.mxu0 0.0
    %4513 = vmatpush2.msra.mxu0 0.0
    %4514 = vmatprep.subr.mxu0 0.0
    %4515 = vmatpush2.msra.mxu0 0.0
    %4516 = vmatprep.subr.mxu0 0.0
    %4517 = vmatpush2.msra.mxu0 0.0
    %4518 = vmatprep.subr.mxu0 0.0
    %4519 = vmatpush2.msra.mxu0 0.0
    %4520 = vmatprep.subr.mxu0 0.0
    %4521 = vmatpush2.msra.mxu0 0.0
    %4522 = vmatprep.subr.mxu0 0.0
    %4523 = vmatpush2.msra.mxu0 0.0
    %4524 = vmatprep.subr.mxu0 0.0
    %4525 = vmatpush2.msra.mxu0 0.0
    %4526 = vmatprep.mubr.f32.mxu0 0.0
    %4527 = vmatmul.mubr.f32.gmra.mxu0 %v4457
    %v4528 = vpop.f32.mrf.mxu0
    %v4529 = vadd.f32 0.0, %v4528
    %v4530 = vpop.f32.mrf.mxu0
    %4531 = vmatprep.mubr.f32.mxu0 0.0
    %4532 = vmatmul.mubr.f32.gmra.mxu0 %v4460
    %v4533 = vpop.f32.mrf.mxu0
    %v4534 = vadd.f32 0.0, %v4533
    %v4535 = vpop.f32.mrf.mxu0
    %4536 = vdwg.mxu0
    %4537 = vrot.lane.b32.xlu0 %v3820, 112
    %v4538 = vpop.permute.xlu0 %4537
    %4539 = vrot.lane.b32.xlu0 %v3825, 112
    %v4540 = vpop.permute.xlu0 %4539
    %v4544 = vsel %vm773, %v4356, 0
    %v4547 = vsel %vm773, %v4358, 0
    %4549 = vmatprep.subr.mxu0 0.0
    %4550 = vmatpush1.msra.mxu0 0.0
    %4551 = vmatprep.subr.mxu0 0.0
    %4552 = vmatpush1.msra.mxu0 0.0
    %4553 = vmatprep.subr.mxu0 0.0
    %4554 = vmatpush1.msra.mxu0 0.0
    %4555 = vmatprep.subr.mxu0 0.0
    %4556 = vmatpush1.msra.mxu0 0.0
    %4557 = vmatprep.subr.mxu0 0.0
    %4558 = vmatpush1.msra.mxu0 0.0
    %4559 = vmatprep.subr.mxu0 0.0
    %4560 = vmatpush1.msra.mxu0 0.0
    %4561 = vmatprep.subr.mxu0 0.0
    %4562 = vmatpush1.msra.mxu0 0.0
    %4563 = vmatprep.subr.mxu0 0.0
    %4564 = vmatpush1.msra.mxu0 0.0
    %4565 = vmatprep.subr.mxu0 0.0
    %4566 = vmatpush1.msra.mxu0 0.0
    %4567 = vmatprep.subr.mxu0 0.0
    %4568 = vmatpush1.msra.mxu0 0.0
    %4569 = vmatprep.subr.mxu0 0.0
    %4570 = vmatpush1.msra.mxu0 0.0
    %4571 = vmatprep.subr.mxu0 0.0
    %4572 = vmatpush1.msra.mxu0 0.0
    %4573 = vmatprep.subr.mxu0 0.0
    %4574 = vmatpush1.msra.mxu0 0.0
    %4575 = vmatprep.subr.mxu0 0.0
    %4576 = vmatpush1.msra.mxu0 0.0
    %4577 = vmatprep.subr.mxu0 0.0
    %4578 = vmatpush1.msra.mxu0 %v4540
    %4579 = vmatprep.subr.mxu0 0.0
    %4580 = vmatpush1.msra.mxu0 %v4538
    %4581 = vmatprep.subr.mxu0 0.0
    %4582 = vmatpush2.msra.mxu0 0.0
    %4583 = vmatprep.subr.mxu0 0.0
    %4584 = vmatpush2.msra.mxu0 0.0
    %4585 = vmatprep.subr.mxu0 0.0
    %4586 = vmatpush2.msra.mxu0 0.0
    %4587 = vmatprep.subr.mxu0 0.0
    %4588 = vmatpush2.msra.mxu0 0.0
    %4589 = vmatprep.subr.mxu0 0.0
    %4590 = vmatpush2.msra.mxu0 0.0
    %4591 = vmatprep.subr.mxu0 0.0
    %4592 = vmatpush2.msra.mxu0 0.0
    %4593 = vmatprep.subr.mxu0 0.0
    %4594 = vmatpush2.msra.mxu0 0.0
    %4595 = vmatprep.subr.mxu0 0.0
    %4596 = vmatpush2.msra.mxu0 0.0
    %4597 = vmatprep.subr.mxu0 0.0
    %4598 = vmatpush2.msra.mxu0 0.0
    %4599 = vmatprep.subr.mxu0 0.0
    %4600 = vmatpush2.msra.mxu0 0.0
    %4601 = vmatprep.subr.mxu0 0.0
    %4602 = vmatpush2.msra.mxu0 0.0
    %4603 = vmatprep.subr.mxu0 0.0
    %4604 = vmatpush2.msra.mxu0 0.0
    %4605 = vmatprep.subr.mxu0 0.0
    %4606 = vmatpush2.msra.mxu0 0.0
    %4607 = vmatprep.subr.mxu0 0.0
    %4608 = vmatpush2.msra.mxu0 0.0
    %4609 = vmatprep.subr.mxu0 0.0
    %4610 = vmatpush2.msra.mxu0 0.0
    %4611 = vmatprep.subr.mxu0 0.0
    %4612 = vmatpush2.msra.mxu0 0.0
    %4613 = vmatprep.mubr.f32.mxu0 0.0
    %4614 = vmatmul.mubr.f32.gmra.mxu0 %v4544
    %v4615 = vpop.f32.mrf.mxu0
    %v4616 = vadd.f32 0.0, %v4615
    %v4617 = vpop.f32.mrf.mxu0
    %4618 = vmatprep.mubr.f32.mxu0 0.0
    %4619 = vmatmul.mubr.f32.gmra.mxu0 %v4547
    %v4620 = vpop.f32.mrf.mxu0
    %v4621 = vadd.f32 0.0, %v4620
    %v4622 = vpop.f32.mrf.mxu0
    %4623 = vdwg.mxu0
    %4624 = vrot.lane.b32.xlu0 %v3895, 112
    %v4625 = vpop.permute.xlu0 %4624
    %4626 = vrot.lane.b32.xlu0 %v3900, 112
    %v4627 = vpop.permute.xlu0 %4626
    %v4631 = vsel %vm773, %v4360, 0
    %v4634 = vsel %vm773, %v4362, 0
    %4636 = vmatprep.subr.mxu0 0.0
    %4637 = vmatpush1.msra.mxu0 0.0
    %4638 = vmatprep.subr.mxu0 0.0
    %4639 = vmatpush1.msra.mxu0 0.0
    %4640 = vmatprep.subr.mxu0 0.0
    %4641 = vmatpush1.msra.mxu0 0.0
    %4642 = vmatprep.subr.mxu0 0.0
    %4643 = vmatpush1.msra.mxu0 0.0
    %4644 = vmatprep.subr.mxu0 0.0
    %4645 = vmatpush1.msra.mxu0 0.0
    %4646 = vmatprep.subr.mxu0 0.0
    %4647 = vmatpush1.msra.mxu0 0.0
    %4648 = vmatprep.subr.mxu0 0.0
    %4649 = vmatpush1.msra.mxu0 0.0
    %4650 = vmatprep.subr.mxu0 0.0
    %4651 = vmatpush1.msra.mxu0 0.0
    %4652 = vmatprep.subr.mxu0 0.0
    %4653 = vmatpush1.msra.mxu0 0.0
    %4654 = vmatprep.subr.mxu0 0.0
    %4655 = vmatpush1.msra.mxu0 0.0
    %4656 = vmatprep.subr.mxu0 0.0
    %4657 = vmatpush1.msra.mxu0 0.0
    %4658 = vmatprep.subr.mxu0 0.0
    %4659 = vmatpush1.msra.mxu0 0.0
    %4660 = vmatprep.subr.mxu0 0.0
    %4661 = vmatpush1.msra.mxu0 0.0
    %4662 = vmatprep.subr.mxu0 0.0
    %4663 = vmatpush1.msra.mxu0 0.0
    %4664 = vmatprep.subr.mxu0 0.0
    %4665 = vmatpush1.msra.mxu0 %v4627
    %4666 = vmatprep.subr.mxu0 0.0
    %4667 = vmatpush1.msra.mxu0 %v4625
    %4668 = vmatprep.subr.mxu0 0.0
    %4669 = vmatpush2.msra.mxu0 0.0
    %4670 = vmatprep.subr.mxu0 0.0
    %4671 = vmatpush2.msra.mxu0 0.0
    %4672 = vmatprep.subr.mxu0 0.0
    %4673 = vmatpush2.msra.mxu0 0.0
    %4674 = vmatprep.subr.mxu0 0.0
    %4675 = vmatpush2.msra.mxu0 0.0
    %4676 = vmatprep.subr.mxu0 0.0
    %4677 = vmatpush2.msra.mxu0 0.0
    %4678 = vmatprep.subr.mxu0 0.0
    %4679 = vmatpush2.msra.mxu0 0.0
    %4680 = vmatprep.subr.mxu0 0.0
    %4681 = vmatpush2.msra.mxu0 0.0
    %4682 = vmatprep.subr.mxu0 0.0
    %4683 = vmatpush2.msra.mxu0 0.0
    %4684 = vmatprep.subr.mxu0 0.0
    %4685 = vmatpush2.msra.mxu0 0.0
    %4686 = vmatprep.subr.mxu0 0.0
    %4687 = vmatpush2.msra.mxu0 0.0
    %4688 = vmatprep.subr.mxu0 0.0
    %4689 = vmatpush2.msra.mxu0 0.0
    %4690 = vmatprep.subr.mxu0 0.0
    %4691 = vmatpush2.msra.mxu0 0.0
    %4692 = vmatprep.subr.mxu0 0.0
    %4693 = vmatpush2.msra.mxu0 0.0
    %4694 = vmatprep.subr.mxu0 0.0
    %4695 = vmatpush2.msra.mxu0 0.0
    %4696 = vmatprep.subr.mxu0 0.0
    %4697 = vmatpush2.msra.mxu0 0.0
    %4698 = vmatprep.subr.mxu0 0.0
    %4699 = vmatpush2.msra.mxu0 0.0
    %4700 = vmatprep.mubr.f32.mxu0 0.0
    %4701 = vmatmul.mubr.f32.gmra.mxu0 %v4631
    %v4702 = vpop.f32.mrf.mxu0
    %v4703 = vadd.f32 0.0, %v4702
    %v4704 = vpop.f32.mrf.mxu0
    %4705 = vmatprep.mubr.f32.mxu0 0.0
    %4706 = vmatmul.mubr.f32.gmra.mxu0 %v4634
    %v4707 = vpop.f32.mrf.mxu0
    %v4708 = vadd.f32 0.0, %v4707
    %v4709 = vpop.f32.mrf.mxu0
    %4710 = vdwg.mxu0
    %s4711 = scalar_lea.vmem %s3, 64
    %v4712 = vld [vmem:[%s4711] sm:$0xff]
    %v4713 = vld [vmem:[%s4711 + $0x8] sm:$0xff]
    %v4714 = vld [vmem:[%s4711 + $0x10] sm:$0xff]
    %v4715 = vld [vmem:[%s4711 + $0x18] sm:$0xff]
    %v4717 = vsel %vm406, %v4442, 0
    %v4720 = vsel %vm406, %v4447, 0
    %4722 = vmatprep.subr.mxu0 0.0
    %4723 = vmatpush1.msra.mxu0 0.0
    %4724 = vmatprep.subr.mxu0 0.0
    %4725 = vmatpush1.msra.mxu0 0.0
    %4726 = vmatprep.subr.mxu0 0.0
    %4727 = vmatpush1.msra.mxu0 0.0
    %4728 = vmatprep.subr.mxu0 0.0
    %4729 = vmatpush1.msra.mxu0 0.0
    %4730 = vmatprep.subr.mxu0 0.0
    %4731 = vmatpush1.msra.mxu0 0.0
    %4732 = vmatprep.subr.mxu0 0.0
    %4733 = vmatpush1.msra.mxu0 0.0
    %4734 = vmatprep.subr.mxu0 0.0
    %4735 = vmatpush1.msra.mxu0 0.0
    %4736 = vmatprep.subr.mxu0 0.0
    %4737 = vmatpush1.msra.mxu0 0.0
    %4738 = vmatprep.subr.mxu0 0.0
    %4739 = vmatpush1.msra.mxu0 0.0
    %4740 = vmatprep.subr.mxu0 0.0
    %4741 = vmatpush1.msra.mxu0 0.0
    %4742 = vmatprep.subr.mxu0 0.0
    %4743 = vmatpush1.msra.mxu0 0.0
    %4744 = vmatprep.subr.mxu0 0.0
    %4745 = vmatpush1.msra.mxu0 0.0
    %4746 = vmatprep.subr.mxu0 0.0
    %4747 = vmatpush1.msra.mxu0 0.0
    %4748 = vmatprep.subr.mxu0 0.0
    %4749 = vmatpush1.msra.mxu0 0.0
    %4750 = vmatprep.subr.mxu0 0.0
    %4751 = vmatpush1.msra.mxu0 0.0
    %4752 = vmatprep.subr.mxu0 0.0
    %4753 = vmatpush1.msra.mxu0 %v4712
    %4754 = vmatprep.subr.mxu0 0.0
    %4755 = vmatpush2.msra.mxu0 0.0
    %4756 = vmatprep.subr.mxu0 0.0
    %4757 = vmatpush2.msra.mxu0 0.0
    %4758 = vmatprep.subr.mxu0 0.0
    %4759 = vmatpush2.msra.mxu0 0.0
    %4760 = vmatprep.subr.mxu0 0.0
    %4761 = vmatpush2.msra.mxu0 0.0
    %4762 = vmatprep.subr.mxu0 0.0
    %4763 = vmatpush2.msra.mxu0 0.0
    %4764 = vmatprep.subr.mxu0 0.0
    %4765 = vmatpush2.msra.mxu0 0.0
    %4766 = vmatprep.subr.mxu0 0.0
    %4767 = vmatpush2.msra.mxu0 0.0
    %4768 = vmatprep.subr.mxu0 0.0
    %4769 = vmatpush2.msra.mxu0 0.0
    %4770 = vmatprep.subr.mxu0 0.0
    %4771 = vmatpush2.msra.mxu0 0.0
    %4772 = vmatprep.subr.mxu0 0.0
    %4773 = vmatpush2.msra.mxu0 0.0
    %4774 = vmatprep.subr.mxu0 0.0
    %4775 = vmatpush2.msra.mxu0 0.0
    %4776 = vmatprep.subr.mxu0 0.0
    %4777 = vmatpush2.msra.mxu0 0.0
    %4778 = vmatprep.subr.mxu0 0.0
    %4779 = vmatpush2.msra.mxu0 0.0
    %4780 = vmatprep.subr.mxu0 0.0
    %4781 = vmatpush2.msra.mxu0 0.0
    %4782 = vmatprep.subr.mxu0 0.0
    %4783 = vmatpush2.msra.mxu0 0.0
    %4784 = vmatprep.subr.mxu0 0.0
    %4785 = vmatpush2.msra.mxu0 0.0
    %4786 = vmatprep.mubr.f32.mxu0 0.0
    %4787 = vmatmul.mubr.f32.gmra.mxu0 %v4717
    %v4788 = vpop.f32.mrf.mxu0
    %v4789 = vadd.f32 0.0, %v4788
    %v4790 = vpop.f32.mrf.mxu0
    %4791 = vmatprep.mubr.f32.mxu0 0.0
    %4792 = vmatmul.mubr.f32.gmra.mxu0 %v4720
    %v4793 = vpop.f32.mrf.mxu0
    %v4794 = vadd.f32 0.0, %v4793
    %v4795 = vpop.f32.mrf.mxu0
    %4796 = vdwg.mxu0
    %v4798 = vsel %vm406, %v4529, 0
    %v4801 = vsel %vm406, %v4534, 0
    %4803 = vmatprep.subr.mxu0 0.0
    %4804 = vmatpush1.msra.mxu0 0.0
    %4805 = vmatprep.subr.mxu0 0.0
    %4806 = vmatpush1.msra.mxu0 0.0
    %4807 = vmatprep.subr.mxu0 0.0
    %4808 = vmatpush1.msra.mxu0 0.0
    %4809 = vmatprep.subr.mxu0 0.0
    %4810 = vmatpush1.msra.mxu0 0.0
    %4811 = vmatprep.subr.mxu0 0.0
    %4812 = vmatpush1.msra.mxu0 0.0
    %4813 = vmatprep.subr.mxu0 0.0
    %4814 = vmatpush1.msra.mxu0 0.0
    %4815 = vmatprep.subr.mxu0 0.0
    %4816 = vmatpush1.msra.mxu0 0.0
    %4817 = vmatprep.subr.mxu0 0.0
    %4818 = vmatpush1.msra.mxu0 0.0
    %4819 = vmatprep.subr.mxu0 0.0
    %4820 = vmatpush1.msra.mxu0 0.0
    %4821 = vmatprep.subr.mxu0 0.0
    %4822 = vmatpush1.msra.mxu0 0.0
    %4823 = vmatprep.subr.mxu0 0.0
    %4824 = vmatpush1.msra.mxu0 0.0
    %4825 = vmatprep.subr.mxu0 0.0
    %4826 = vmatpush1.msra.mxu0 0.0
    %4827 = vmatprep.subr.mxu0 0.0
    %4828 = vmatpush1.msra.mxu0 0.0
    %4829 = vmatprep.subr.mxu0 0.0
    %4830 = vmatpush1.msra.mxu0 0.0
    %4831 = vmatprep.subr.mxu0 0.0
    %4832 = vmatpush1.msra.mxu0 0.0
    %4833 = vmatprep.subr.mxu0 0.0
    %4834 = vmatpush1.msra.mxu0 %v4713
    %4835 = vmatprep.subr.mxu0 0.0
    %4836 = vmatpush2.msra.mxu0 0.0
    %4837 = vmatprep.subr.mxu0 0.0
    %4838 = vmatpush2.msra.mxu0 0.0
    %4839 = vmatprep.subr.mxu0 0.0
    %4840 = vmatpush2.msra.mxu0 0.0
    %4841 = vmatprep.subr.mxu0 0.0
    %4842 = vmatpush2.msra.mxu0 0.0
    %4843 = vmatprep.subr.mxu0 0.0
    %4844 = vmatpush2.msra.mxu0 0.0
    %4845 = vmatprep.subr.mxu0 0.0
    %4846 = vmatpush2.msra.mxu0 0.0
    %4847 = vmatprep.subr.mxu0 0.0
    %4848 = vmatpush2.msra.mxu0 0.0
    %4849 = vmatprep.subr.mxu0 0.0
    %4850 = vmatpush2.msra.mxu0 0.0
    %4851 = vmatprep.subr.mxu0 0.0
    %4852 = vmatpush2.msra.mxu0 0.0
    %4853 = vmatprep.subr.mxu0 0.0
    %4854 = vmatpush2.msra.mxu0 0.0
    %4855 = vmatprep.subr.mxu0 0.0
    %4856 = vmatpush2.msra.mxu0 0.0
    %4857 = vmatprep.subr.mxu0 0.0
    %4858 = vmatpush2.msra.mxu0 0.0
    %4859 = vmatprep.subr.mxu0 0.0
    %4860 = vmatpush2.msra.mxu0 0.0
    %4861 = vmatprep.subr.mxu0 0.0
    %4862 = vmatpush2.msra.mxu0 0.0
    %4863 = vmatprep.subr.mxu0 0.0
    %4864 = vmatpush2.msra.mxu0 0.0
    %4865 = vmatprep.subr.mxu0 0.0
    %4866 = vmatpush2.msra.mxu0 0.0
    %4867 = vmatprep.mubr.f32.mxu0 0.0
    %4868 = vmatmul.mubr.f32.gmra.mxu0 %v4798
    %v4869 = vpop.f32.mrf.mxu0
    %v4870 = vadd.f32 0.0, %v4869
    %v4871 = vpop.f32.mrf.mxu0
    %4872 = vmatprep.mubr.f32.mxu0 0.0
    %4873 = vmatmul.mubr.f32.gmra.mxu0 %v4801
    %v4874 = vpop.f32.mrf.mxu0
    %v4875 = vadd.f32 0.0, %v4874
    %v4876 = vpop.f32.mrf.mxu0
    %4877 = vdwg.mxu0
    %v4879 = vsel %vm406, %v4616, 0
    %v4882 = vsel %vm406, %v4621, 0
    %4884 = vmatprep.subr.mxu0 0.0
    %4885 = vmatpush1.msra.mxu0 0.0
    %4886 = vmatprep.subr.mxu0 0.0
    %4887 = vmatpush1.msra.mxu0 0.0
    %4888 = vmatprep.subr.mxu0 0.0
    %4889 = vmatpush1.msra.mxu0 0.0
    %4890 = vmatprep.subr.mxu0 0.0
    %4891 = vmatpush1.msra.mxu0 0.0
    %4892 = vmatprep.subr.mxu0 0.0
    %4893 = vmatpush1.msra.mxu0 0.0
    %4894 = vmatprep.subr.mxu0 0.0
    %4895 = vmatpush1.msra.mxu0 0.0
    %4896 = vmatprep.subr.mxu0 0.0
    %4897 = vmatpush1.msra.mxu0 0.0
    %4898 = vmatprep.subr.mxu0 0.0
    %4899 = vmatpush1.msra.mxu0 0.0
    %4900 = vmatprep.subr.mxu0 0.0
    %4901 = vmatpush1.msra.mxu0 0.0
    %4902 = vmatprep.subr.mxu0 0.0
    %4903 = vmatpush1.msra.mxu0 0.0
    %4904 = vmatprep.subr.mxu0 0.0
    %4905 = vmatpush1.msra.mxu0 0.0
    %4906 = vmatprep.subr.mxu0 0.0
    %4907 = vmatpush1.msra.mxu0 0.0
    %4908 = vmatprep.subr.mxu0 0.0
    %4909 = vmatpush1.msra.mxu0 0.0
    %4910 = vmatprep.subr.mxu0 0.0
    %4911 = vmatpush1.msra.mxu0 0.0
    %4912 = vmatprep.subr.mxu0 0.0
    %4913 = vmatpush1.msra.mxu0 0.0
    %4914 = vmatprep.subr.mxu0 0.0
    %4915 = vmatpush1.msra.mxu0 %v4714
    %4916 = vmatprep.subr.mxu0 0.0
    %4917 = vmatpush2.msra.mxu0 0.0
    %4918 = vmatprep.subr.mxu0 0.0
    %4919 = vmatpush2.msra.mxu0 0.0
    %4920 = vmatprep.subr.mxu0 0.0
    %4921 = vmatpush2.msra.mxu0 0.0
    %4922 = vmatprep.subr.mxu0 0.0
    %4923 = vmatpush2.msra.mxu0 0.0
    %4924 = vmatprep.subr.mxu0 0.0
    %4925 = vmatpush2.msra.mxu0 0.0
    %4926 = vmatprep.subr.mxu0 0.0
    %4927 = vmatpush2.msra.mxu0 0.0
    %4928 = vmatprep.subr.mxu0 0.0
    %4929 = vmatpush2.msra.mxu0 0.0
    %4930 = vmatprep.subr.mxu0 0.0
    %4931 = vmatpush2.msra.mxu0 0.0
    %4932 = vmatprep.subr.mxu0 0.0
    %4933 = vmatpush2.msra.mxu0 0.0
    %4934 = vmatprep.subr.mxu0 0.0
    %4935 = vmatpush2.msra.mxu0 0.0
    %4936 = vmatprep.subr.mxu0 0.0
    %4937 = vmatpush2.msra.mxu0 0.0
    %4938 = vmatprep.subr.mxu0 0.0
    %4939 = vmatpush2.msra.mxu0 0.0
    %4940 = vmatprep.subr.mxu0 0.0
    %4941 = vmatpush2.msra.mxu0 0.0
    %4942 = vmatprep.subr.mxu0 0.0
    %4943 = vmatpush2.msra.mxu0 0.0
    %4944 = vmatprep.subr.mxu0 0.0
    %4945 = vmatpush2.msra.mxu0 0.0
    %4946 = vmatprep.subr.mxu0 0.0
    %4947 = vmatpush2.msra.mxu0 0.0
    %4948 = vmatprep.mubr.f32.mxu0 0.0
    %4949 = vmatmul.mubr.f32.gmra.mxu0 %v4879
    %v4950 = vpop.f32.mrf.mxu0
    %v4951 = vadd.f32 0.0, %v4950
    %v4952 = vpop.f32.mrf.mxu0
    %4953 = vmatprep.mubr.f32.mxu0 0.0
    %4954 = vmatmul.mubr.f32.gmra.mxu0 %v4882
    %v4955 = vpop.f32.mrf.mxu0
    %v4956 = vadd.f32 0.0, %v4955
    %v4957 = vpop.f32.mrf.mxu0
    %4958 = vdwg.mxu0
    %v4960 = vsel %vm406, %v4703, 0
    %v4963 = vsel %vm406, %v4708, 0
    %4965 = vmatprep.subr.mxu0 0.0
    %4966 = vmatpush1.msra.mxu0 0.0
    %4967 = vmatprep.subr.mxu0 0.0
    %4968 = vmatpush1.msra.mxu0 0.0
    %4969 = vmatprep.subr.mxu0 0.0
    %4970 = vmatpush1.msra.mxu0 0.0
    %4971 = vmatprep.subr.mxu0 0.0
    %4972 = vmatpush1.msra.mxu0 0.0
    %4973 = vmatprep.subr.mxu0 0.0
    %4974 = vmatpush1.msra.mxu0 0.0
    %4975 = vmatprep.subr.mxu0 0.0
    %4976 = vmatpush1.msra.mxu0 0.0
    %4977 = vmatprep.subr.mxu0 0.0
    %4978 = vmatpush1.msra.mxu0 0.0
    %4979 = vmatprep.subr.mxu0 0.0
    %4980 = vmatpush1.msra.mxu0 0.0
    %4981 = vmatprep.subr.mxu0 0.0
    %4982 = vmatpush1.msra.mxu0 0.0
    %4983 = vmatprep.subr.mxu0 0.0
    %4984 = vmatpush1.msra.mxu0 0.0
    %4985 = vmatprep.subr.mxu0 0.0
    %4986 = vmatpush1.msra.mxu0 0.0
    %4987 = vmatprep.subr.mxu0 0.0
    %4988 = vmatpush1.msra.mxu0 0.0
    %4989 = vmatprep.subr.mxu0 0.0
    %4990 = vmatpush1.msra.mxu0 0.0
    %4991 = vmatprep.subr.mxu0 0.0
    %4992 = vmatpush1.msra.mxu0 0.0
    %4993 = vmatprep.subr.mxu0 0.0
    %4994 = vmatpush1.msra.mxu0 0.0
    %4995 = vmatprep.subr.mxu0 0.0
    %4996 = vmatpush1.msra.mxu0 %v4715
    %4997 = vmatprep.subr.mxu0 0.0
    %4998 = vmatpush2.msra.mxu0 0.0
    %4999 = vmatprep.subr.mxu0 0.0
    %5000 = vmatpush2.msra.mxu0 0.0
    %5001 = vmatprep.subr.mxu0 0.0
    %5002 = vmatpush2.msra.mxu0 0.0
    %5003 = vmatprep.subr.mxu0 0.0
    %5004 = vmatpush2.msra.mxu0 0.0
    %5005 = vmatprep.subr.mxu0 0.0
    %5006 = vmatpush2.msra.mxu0 0.0
    %5007 = vmatprep.subr.mxu0 0.0
    %5008 = vmatpush2.msra.mxu0 0.0
    %5009 = vmatprep.subr.mxu0 0.0
    %5010 = vmatpush2.msra.mxu0 0.0
    %5011 = vmatprep.subr.mxu0 0.0
    %5012 = vmatpush2.msra.mxu0 0.0
    %5013 = vmatprep.subr.mxu0 0.0
    %5014 = vmatpush2.msra.mxu0 0.0
    %5015 = vmatprep.subr.mxu0 0.0
    %5016 = vmatpush2.msra.mxu0 0.0
    %5017 = vmatprep.subr.mxu0 0.0
    %5018 = vmatpush2.msra.mxu0 0.0
    %5019 = vmatprep.subr.mxu0 0.0
    %5020 = vmatpush2.msra.mxu0 0.0
    %5021 = vmatprep.subr.mxu0 0.0
    %5022 = vmatpush2.msra.mxu0 0.0
    %5023 = vmatprep.subr.mxu0 0.0
    %5024 = vmatpush2.msra.mxu0 0.0
    %5025 = vmatprep.subr.mxu0 0.0
    %5026 = vmatpush2.msra.mxu0 0.0
    %5027 = vmatprep.subr.mxu0 0.0
    %5028 = vmatpush2.msra.mxu0 0.0
    %5029 = vmatprep.mubr.f32.mxu0 0.0
    %5030 = vmatmul.mubr.f32.gmra.mxu0 %v4960
    %v5031 = vpop.f32.mrf.mxu0
    %v5032 = vadd.f32 0.0, %v5031
    %v5033 = vpop.f32.mrf.mxu0
    %5034 = vmatprep.mubr.f32.mxu0 0.0
    %5035 = vmatmul.mubr.f32.gmra.mxu0 %v4963
    %v5036 = vpop.f32.mrf.mxu0
    %v5037 = vadd.f32 0.0, %v5036
    %v5038 = vpop.f32.mrf.mxu0
    %5039 = vdwg.mxu0
    %v5040 = vsel %vm38, %v4789, 0.0
    %v5041 = vsel %vm38, %v4870, 0.0
    %v5042 = vadd.f32 %v5040, %v5041
    %v5043 = vsel %vm38, %v4951, 0.0
    %v5044 = vadd.f32 %v5042, %v5043
    %v5045 = vsel %vm38, %v5032, 0.0
    %v5046 = vadd.f32 %v5044, %v5045
    %v5047 = vsel %vm38, %v4794, 0.0
    %v5048 = vsel %vm38, %v4875, 0.0
    %v5049 = vadd.f32 %v5047, %v5048
    %v5050 = vsel %vm38, %v4956, 0.0
    %v5051 = vadd.f32 %v5049, %v5050
    %v5052 = vsel %vm38, %v5037, 0.0
    %v5053 = vadd.f32 %v5051, %v5052
    %v5054 = vadd.f32 %v3538, %v5046
    %v5055 = vadd.f32 %v3539, %v5053
    %v5056 = vlaneseq
    %v5057 = vshrl.u32 %v5056, 7
    %v5058 = vsub.s32 4, %v5057
    %v5059 = vrot.slane %v3541, %v5058
    %v5060 = vadd.f32 %v5054, %v5059
    %v5061 = vadd.f32 %v5055, %v5059
    %v5062 = vsel %vm38, %v5060, 0.0
    %5063 = vadd.xlane.f32.xlu0 %v5062
    %v5064 = vpop.xlane.xlu0 %5063
    %v5065 = vsel %vm38, %v5061, 0.0
    %5066 = vadd.xlane.f32.xlu0 %v5065
    %v5067 = vpop.xlane.xlu0 %5066
    %v5068 = vmul.f32 %v5064, %v45
    %v5069 = vmul.f32 %v5067, %v45
    %v5070 = vsub.f32 %v5060, %v5068
    %v5071 = vsub.f32 %v5061, %v5069
    %v5072 = vmul.f32 %v5070, %v5070
    %v5073 = vmul.f32 %v5071, %v5071
    %v5074 = vsel %vm38, %v5072, 0.0
    %5075 = vadd.xlane.f32.xlu0 %v5074
    %v5076 = vpop.xlane.xlu0 %5075
    %v5077 = vsel %vm38, %v5073, 0.0
    %5078 = vadd.xlane.f32.xlu0 %v5077
    %v5079 = vpop.xlane.xlu0 %5078
    %v5080 = vmul.f32 %v5076, %v45
    %v5081 = vmul.f32 %v5079, %v45
    %v5082 = vadd.f32 %v5080, 1e-05
    %v5083 = vadd.f32 %v5081, 1e-05
    %v5084 = vrsqrt.pop %v5082
    %v5085 = vrsqrt.pop %v5083
    %v5086 = vmul.f32 %v5070, %v5084
    %v5087 = vmul.f32 %v5071, %v5085
    %v5088 = vlaneseq
    %v5089 = vshrl.u32 %v5088, 7
    %v5090 = vsub.s32 2, %v5089
    %v5091 = vrot.slane %v3541, %v5090
    %v5092 = vmul.f32 %v5086, %v5091
    %v5093 = vmul.f32 %v5087, %v5091
    %v5094 = vlaneseq
    %v5095 = vshrl.u32 %v5094, 7
    %v5096 = vsub.s32 3, %v5095
    %v5097 = vrot.slane %v3541, %v5096
    %v5098 = vadd.f32 %v5092, %v5097
    %v5099 = vadd.f32 %v5093, %v5097
    %s5100 = scalar_lea.vmem %s4, 64
    %v5101 = vld [vmem:[%s5100] sm:$0xff]
    %v5102 = vld [vmem:[%s5100 + $0x8] sm:$0xff]
    %v5103 = vld [vmem:[%s5100 + $0x10] sm:$0xff]
    %v5104 = vld [vmem:[%s5100 + $0x18] sm:$0xff]
    %v5105 = vlaneseq
    %v5106 = vshrl.u32 %v5105, 7
    %v5107 = vsub.s32 6, %v5106
    %v5108 = vrot.slane %v3541, %v5107
    %v5110 = vsel %vm38, %v5098, 0
    %v5113 = vsel %vm38, %v5099, 0
    %5115 = vmatprep.subr.mxu0 0.0
    %5116 = vmatpush1.msra.mxu0 0.0
    %5117 = vmatprep.subr.mxu0 0.0
    %5118 = vmatpush1.msra.mxu0 0.0
    %5119 = vmatprep.subr.mxu0 0.0
    %5120 = vmatpush1.msra.mxu0 0.0
    %5121 = vmatprep.subr.mxu0 0.0
    %5122 = vmatpush1.msra.mxu0 0.0
    %5123 = vmatprep.subr.mxu0 0.0
    %5124 = vmatpush1.msra.mxu0 0.0
    %5125 = vmatprep.subr.mxu0 0.0
    %5126 = vmatpush1.msra.mxu0 0.0
    %5127 = vmatprep.subr.mxu0 0.0
    %5128 = vmatpush1.msra.mxu0 0.0
    %5129 = vmatprep.subr.mxu0 0.0
    %5130 = vmatpush1.msra.mxu0 0.0
    %5131 = vmatprep.subr.mxu0 0.0
    %5132 = vmatpush1.msra.mxu0 0.0
    %5133 = vmatprep.subr.mxu0 0.0
    %5134 = vmatpush1.msra.mxu0 0.0
    %5135 = vmatprep.subr.mxu0 0.0
    %5136 = vmatpush1.msra.mxu0 0.0
    %5137 = vmatprep.subr.mxu0 0.0
    %5138 = vmatpush1.msra.mxu0 0.0
    %5139 = vmatprep.subr.mxu0 0.0
    %5140 = vmatpush1.msra.mxu0 %v5104
    %5141 = vmatprep.subr.mxu0 0.0
    %5142 = vmatpush1.msra.mxu0 %v5103
    %5143 = vmatprep.subr.mxu0 0.0
    %5144 = vmatpush1.msra.mxu0 %v5102
    %5145 = vmatprep.subr.mxu0 0.0
    %5146 = vmatpush1.msra.mxu0 %v5101
    %5147 = vmatprep.subr.mxu0 0.0
    %5148 = vmatpush2.msra.mxu0 0.0
    %5149 = vmatprep.subr.mxu0 0.0
    %5150 = vmatpush2.msra.mxu0 0.0
    %5151 = vmatprep.subr.mxu0 0.0
    %5152 = vmatpush2.msra.mxu0 0.0
    %5153 = vmatprep.subr.mxu0 0.0
    %5154 = vmatpush2.msra.mxu0 0.0
    %5155 = vmatprep.subr.mxu0 0.0
    %5156 = vmatpush2.msra.mxu0 0.0
    %5157 = vmatprep.subr.mxu0 0.0
    %5158 = vmatpush2.msra.mxu0 0.0
    %5159 = vmatprep.subr.mxu0 0.0
    %5160 = vmatpush2.msra.mxu0 0.0
    %5161 = vmatprep.subr.mxu0 0.0
    %5162 = vmatpush2.msra.mxu0 0.0
    %5163 = vmatprep.subr.mxu0 0.0
    %5164 = vmatpush2.msra.mxu0 0.0
    %5165 = vmatprep.subr.mxu0 0.0
    %5166 = vmatpush2.msra.mxu0 0.0
    %5167 = vmatprep.subr.mxu0 0.0
    %5168 = vmatpush2.msra.mxu0 0.0
    %5169 = vmatprep.subr.mxu0 0.0
    %5170 = vmatpush2.msra.mxu0 0.0
    %5171 = vmatprep.subr.mxu0 0.0
    %5172 = vmatpush2.msra.mxu0 0.0
    %5173 = vmatprep.subr.mxu0 0.0
    %5174 = vmatpush2.msra.mxu0 0.0
    %5175 = vmatprep.subr.mxu0 0.0
    %5176 = vmatpush2.msra.mxu0 0.0
    %5177 = vmatprep.subr.mxu0 0.0
    %5178 = vmatpush2.msra.mxu0 0.0
    %5179 = vmatprep.mubr.f32.mxu0 0.0
    %5180 = vmatmul.mubr.f32.gmra.mxu0 %v5110
    %v5181 = vpop.f32.mrf.mxu0
    %v5182 = vadd.f32 %v5108, %v5181
    %v5183 = vpop.f32.mrf.mxu0
    %5184 = vmatprep.mubr.f32.mxu0 0.0
    %5185 = vmatmul.mubr.f32.gmra.mxu0 %v5113
    %v5186 = vpop.f32.mrf.mxu0
    %v5187 = vadd.f32 %v5108, %v5186
    %v5188 = vpop.f32.mrf.mxu0
    %5189 = vdwg.mxu0
    %v5190 = vmax.f32 %v5182, 0.0
    %v5191 = vmax.f32 %v5187, 0.0
    %s5192 = scalar_lea.vmem %s5, 256
    %v5193 = vld [vmem:[%s5192] sm:$0xff]
    %v5194 = vld [vmem:[%s5192 + $0x8] sm:$0xff]
    %v5195 = vld [vmem:[%s5192 + $0x10] sm:$0xff]
    %v5196 = vld [vmem:[%s5192 + $0x18] sm:$0xff]
    %v5197 = vld [vmem:[%s5192 + $0x20] sm:$0xff]
    %v5198 = vld [vmem:[%s5192 + $0x28] sm:$0xff]
    %v5199 = vld [vmem:[%s5192 + $0x30] sm:$0xff]
    %v5200 = vld [vmem:[%s5192 + $0x38] sm:$0xff]
    %v5201 = vld [vmem:[%s5192 + $0x40] sm:$0xff]
    %v5202 = vld [vmem:[%s5192 + $0x48] sm:$0xff]
    %v5203 = vld [vmem:[%s5192 + $0x50] sm:$0xff]
    %v5204 = vld [vmem:[%s5192 + $0x58] sm:$0xff]
    %v5205 = vld [vmem:[%s5192 + $0x60] sm:$0xff]
    %v5206 = vld [vmem:[%s5192 + $0x68] sm:$0xff]
    %v5207 = vld [vmem:[%s5192 + $0x70] sm:$0xff]
    %v5208 = vld [vmem:[%s5192 + $0x78] sm:$0xff]
    %5209 = vmatprep.subr.mxu0 0.0
    %5210 = vmatpush1.msra.mxu0 %v5208
    %5211 = vmatprep.subr.mxu0 0.0
    %5212 = vmatpush1.msra.mxu0 %v5207
    %5213 = vmatprep.subr.mxu0 0.0
    %5214 = vmatpush1.msra.mxu0 %v5206
    %5215 = vmatprep.subr.mxu0 0.0
    %5216 = vmatpush1.msra.mxu0 %v5205
    %5217 = vmatprep.subr.mxu0 0.0
    %5218 = vmatpush1.msra.mxu0 %v5204
    %5219 = vmatprep.subr.mxu0 0.0
    %5220 = vmatpush1.msra.mxu0 %v5203
    %5221 = vmatprep.subr.mxu0 0.0
    %5222 = vmatpush1.msra.mxu0 %v5202
    %5223 = vmatprep.subr.mxu0 0.0
    %5224 = vmatpush1.msra.mxu0 %v5201
    %5225 = vmatprep.subr.mxu0 0.0
    %5226 = vmatpush1.msra.mxu0 %v5200
    %5227 = vmatprep.subr.mxu0 0.0
    %5228 = vmatpush1.msra.mxu0 %v5199
    %5229 = vmatprep.subr.mxu0 0.0
    %5230 = vmatpush1.msra.mxu0 %v5198
    %5231 = vmatprep.subr.mxu0 0.0
    %5232 = vmatpush1.msra.mxu0 %v5197
    %5233 = vmatprep.subr.mxu0 0.0
    %5234 = vmatpush1.msra.mxu0 %v5196
    %5235 = vmatprep.subr.mxu0 0.0
    %5236 = vmatpush1.msra.mxu0 %v5195
    %5237 = vmatprep.subr.mxu0 0.0
    %5238 = vmatpush1.msra.mxu0 %v5194
    %5239 = vmatprep.subr.mxu0 0.0
    %5240 = vmatpush1.msra.mxu0 %v5193
    %5241 = vmatprep.subr.mxu0 0.0
    %5242 = vmatpush2.msra.mxu0 0.0
    %5243 = vmatprep.subr.mxu0 0.0
    %5244 = vmatpush2.msra.mxu0 0.0
    %5245 = vmatprep.subr.mxu0 0.0
    %5246 = vmatpush2.msra.mxu0 0.0
    %5247 = vmatprep.subr.mxu0 0.0
    %5248 = vmatpush2.msra.mxu0 0.0
    %5249 = vmatprep.subr.mxu0 0.0
    %5250 = vmatpush2.msra.mxu0 0.0
    %5251 = vmatprep.subr.mxu0 0.0
    %5252 = vmatpush2.msra.mxu0 0.0
    %5253 = vmatprep.subr.mxu0 0.0
    %5254 = vmatpush2.msra.mxu0 0.0
    %5255 = vmatprep.subr.mxu0 0.0
    %5256 = vmatpush2.msra.mxu0 0.0
    %5257 = vmatprep.subr.mxu0 0.0
    %5258 = vmatpush2.msra.mxu0 0.0
    %5259 = vmatprep.subr.mxu0 0.0
    %5260 = vmatpush2.msra.mxu0 0.0
    %5261 = vmatprep.subr.mxu0 0.0
    %5262 = vmatpush2.msra.mxu0 0.0
    %5263 = vmatprep.subr.mxu0 0.0
    %5264 = vmatpush2.msra.mxu0 0.0
    %5265 = vmatprep.subr.mxu0 0.0
    %5266 = vmatpush2.msra.mxu0 0.0
    %5267 = vmatprep.subr.mxu0 0.0
    %5268 = vmatpush2.msra.mxu0 0.0
    %5269 = vmatprep.subr.mxu0 0.0
    %5270 = vmatpush2.msra.mxu0 0.0
    %5271 = vmatprep.subr.mxu0 0.0
    %5272 = vmatpush2.msra.mxu0 0.0
    %5273 = vmatprep.mubr.f32.mxu0 0.0
    %5274 = vmatmul.mubr.f32.gmra.mxu0 %v5190
    %v5275 = vpop.f32.mrf.mxu0
    %v5276 = vadd.f32 0.0, %v5275
    %v5277 = vpop.f32.mrf.mxu0
    %5278 = vmatprep.mubr.f32.mxu0 0.0
    %5279 = vmatmul.mubr.f32.gmra.mxu0 %v5191
    %v5280 = vpop.f32.mrf.mxu0
    %v5281 = vadd.f32 0.0, %v5280
    %v5282 = vpop.f32.mrf.mxu0
    %5283 = vdwg.mxu0
    %v5284 = vadd.f32 %v5060, %v5276
    %v5285 = vadd.f32 %v5061, %v5281
    %v5286 = vlaneseq
    %v5287 = vshrl.u32 %v5286, 7
    %v5288 = vsub.s32 5, %v5287
    %v5289 = vrot.slane %v3541, %v5288
    %v5290 = vadd.f32 %v5284, %v5289
    %v5291 = vadd.f32 %v5285, %v5289
    %v5292 = vld [vmem:[%s8] sm:$0x1]
    %v5293 = vld [vmem:[%s8 + $0x1] sm:$0x1]
    %v5294 = vld [vmem:[%s8 + $0x2] sm:$0x1]
    %v5295 = vsel %vm38, %v5290, 0.0
    %5296 = vadd.xlane.f32.xlu0 %v5295
    %v5297 = vpop.xlane.xlu0 %5296
    %v5298 = vsel %vm38, %v5291, 0.0
    %5299 = vadd.xlane.f32.xlu0 %v5298
    %v5300 = vpop.xlane.xlu0 %5299
    %v5301 = vmul.f32 %v5297, %v45
    %v5302 = vmul.f32 %v5300, %v45
    %v5303 = vsub.f32 %v5290, %v5301
    %v5304 = vsub.f32 %v5291, %v5302
    %v5305 = vmul.f32 %v5303, %v5303
    %v5306 = vmul.f32 %v5304, %v5304
    %v5307 = vsel %vm38, %v5305, 0.0
    %5308 = vadd.xlane.f32.xlu0 %v5307
    %v5309 = vpop.xlane.xlu0 %5308
    %v5310 = vsel %vm38, %v5306, 0.0
    %5311 = vadd.xlane.f32.xlu0 %v5310
    %v5312 = vpop.xlane.xlu0 %5311
    %v5313 = vmul.f32 %v5309, %v45
    %v5314 = vmul.f32 %v5312, %v45
    %v5315 = vadd.f32 %v5313, 1e-05
    %v5316 = vadd.f32 %v5314, 1e-05
    %v5317 = vrsqrt.pop %v5315
    %v5318 = vrsqrt.pop %v5316
    %v5319 = vmul.f32 %v5303, %v5317
    %v5320 = vmul.f32 %v5304, %v5318
    %v5321 = vlaneseq
    %v5322 = vshrl.u32 %v5321, 7
    %v5323 = vsub.s32 0, %v5322
    %v5324 = vrot.slane %v5292, %v5323
    %v5325 = vmul.f32 %v5319, %v5324
    %v5326 = vmul.f32 %v5320, %v5324
    %v5327 = vlaneseq
    %v5328 = vshrl.u32 %v5327, 7
    %v5329 = vsub.s32 0, %v5328
    %v5330 = vrot.slane %v5293, %v5329
    %v5331 = vadd.f32 %v5325, %v5330
    %v5332 = vadd.f32 %v5326, %v5330
    %v5333 = vld [vmem:[%s7] sm:$0xff]
    %v5334 = vld [vmem:[%s7 + $0x8] sm:$0xff]
    %v5335 = vld [vmem:[%s7 + $0x10] sm:$0xff]
    %v5336 = vld [vmem:[%s7 + $0x18] sm:$0xff]
    %v5337 = vlaneseq
    %v5338 = vshrl.u32 %v5337, 7
    %v5339 = vsub.s32 0, %v5338
    %v5340 = vrot.slane %v5294, %v5339
    %v5342 = vsel %vm38, %v5331, 0
    %v5345 = vsel %vm38, %v5332, 0
    %5347 = vmatprep.subr.mxu0 0.0
    %5348 = vmatpush1.msra.mxu0 0.0
    %5349 = vmatprep.subr.mxu0 0.0
    %5350 = vmatpush1.msra.mxu0 0.0
    %5351 = vmatprep.subr.mxu0 0.0
    %5352 = vmatpush1.msra.mxu0 0.0
    %5353 = vmatprep.subr.mxu0 0.0
    %5354 = vmatpush1.msra.mxu0 0.0
    %5355 = vmatprep.subr.mxu0 0.0
    %5356 = vmatpush1.msra.mxu0 0.0
    %5357 = vmatprep.subr.mxu0 0.0
    %5358 = vmatpush1.msra.mxu0 0.0
    %5359 = vmatprep.subr.mxu0 0.0
    %5360 = vmatpush1.msra.mxu0 0.0
    %5361 = vmatprep.subr.mxu0 0.0
    %5362 = vmatpush1.msra.mxu0 0.0
    %5363 = vmatprep.subr.mxu0 0.0
    %5364 = vmatpush1.msra.mxu0 0.0
    %5365 = vmatprep.subr.mxu0 0.0
    %5366 = vmatpush1.msra.mxu0 0.0
    %5367 = vmatprep.subr.mxu0 0.0
    %5368 = vmatpush1.msra.mxu0 0.0
    %5369 = vmatprep.subr.mxu0 0.0
    %5370 = vmatpush1.msra.mxu0 0.0
    %5371 = vmatprep.subr.mxu0 0.0
    %5372 = vmatpush1.msra.mxu0 %v5336
    %5373 = vmatprep.subr.mxu0 0.0
    %5374 = vmatpush1.msra.mxu0 %v5335
    %5375 = vmatprep.subr.mxu0 0.0
    %5376 = vmatpush1.msra.mxu0 %v5334
    %5377 = vmatprep.subr.mxu0 0.0
    %5378 = vmatpush1.msra.mxu0 %v5333
    %5379 = vmatprep.subr.mxu0 0.0
    %5380 = vmatpush2.msra.mxu0 0.0
    %5381 = vmatprep.subr.mxu0 0.0
    %5382 = vmatpush2.msra.mxu0 0.0
    %5383 = vmatprep.subr.mxu0 0.0
    %5384 = vmatpush2.msra.mxu0 0.0
    %5385 = vmatprep.subr.mxu0 0.0
    %5386 = vmatpush2.msra.mxu0 0.0
    %5387 = vmatprep.subr.mxu0 0.0
    %5388 = vmatpush2.msra.mxu0 0.0
    %5389 = vmatprep.subr.mxu0 0.0
    %5390 = vmatpush2.msra.mxu0 0.0
    %5391 = vmatprep.subr.mxu0 0.0
    %5392 = vmatpush2.msra.mxu0 0.0
    %5393 = vmatprep.subr.mxu0 0.0
    %5394 = vmatpush2.msra.mxu0 0.0
    %5395 = vmatprep.subr.mxu0 0.0
    %5396 = vmatpush2.msra.mxu0 0.0
    %5397 = vmatprep.subr.mxu0 0.0
    %5398 = vmatpush2.msra.mxu0 0.0
    %5399 = vmatprep.subr.mxu0 0.0
    %5400 = vmatpush2.msra.mxu0 0.0
    %5401 = vmatprep.subr.mxu0 0.0
    %5402 = vmatpush2.msra.mxu0 0.0
    %5403 = vmatprep.subr.mxu0 0.0
    %5404 = vmatpush2.msra.mxu0 0.0
    %5405 = vmatprep.subr.mxu0 0.0
    %5406 = vmatpush2.msra.mxu0 0.0
    %5407 = vmatprep.subr.mxu0 0.0
    %5408 = vmatpush2.msra.mxu0 0.0
    %5409 = vmatprep.subr.mxu0 0.0
    %5410 = vmatpush2.msra.mxu0 0.0
    %5411 = vmatprep.mubr.f32.mxu0 0.0
    %5412 = vmatmul.mubr.f32.gmra.mxu0 %v5342
    %v5413 = vpop.f32.mrf.mxu0
    %v5414 = vadd.f32 %v5340, %v5413
    %v5415 = vpop.f32.mrf.mxu0
    %5416 = vmatprep.mubr.f32.mxu0 0.0
    %5417 = vmatmul.mubr.f32.gmra.mxu0 %v5345
    %v5418 = vpop.f32.mrf.mxu0
    %v5419 = vadd.f32 %v5340, %v5418
    %v5420 = vpop.f32.mrf.mxu0
    %5421 = vdwg.mxu0
    %5422 = vst [vmem:[#allocation2] sm:$0xff] %v5414
    %5423 = vst [vmem:[#allocation2 + $0x8] sm:$0xff] %v5419
    // Predicated region
    $region38: #{transformer_forward.1} parent=1 // pred_check
      _
    $region39: #{transformer_forward.1} parent=1 // pred_check_branch
      %5425 = sbr.rel (0) target = $region41
    $region40: #{transformer_forward.1} parent=1 // pred_region
      %s5427 = ssub.s32 256, 256
      %5428 = vsyncadd [#allocation3], %s5427
      %s5429 = sshll.u32 [#allocation2], 4
      %s5430 = int_to_ptr.vmem [resolvable:$true] %s5429
      %5435 = dma.vmem_to_hbm [thread:$0]  %s5430, 256, %s9, [#allocation3], 128, 128, 8
    $region41: #{transformer_forward.1} parent=1 // pred_fallthru
      _
    // Predicated region
    $region42: #{transformer_forward.1} parent=1 // pred_check
      _
    $region43: #{transformer_forward.1} parent=1 // pred_check_branch
      %5437 = sbr.rel (0) target = $region45
    $region44: #{transformer_forward.1} parent=1 // pred_region
      %5438 = dma.done [#allocation3], 256
    $region45: #{transformer_forward.1} parent=1 // pred_fallthru
      _
    %5439 = vsyncpa [#allocation3], 1

</llo_original>
